<compile_context>
chip_gen: v5e
topology: v5e:2x2
jax: 0.10.0
libtpu: 0.0.40
codegen_flags: <defaults>
</compile_context>

<pallas_src>
import math

import jax
import jax.numpy as jnp
from jax import lax
from jax.experimental import pallas as pl
from jax.experimental.pallas import tpu as pltpu

# ----- config constants (mirrors class `config` for LunarLander-v2) ---------
INPUT_DIM = 8       # observation_space.shape[0]
HID = 64            # config.hid
OUTPUT_DIM = 4      # action_space.n
TIME_STEP = 16      # config.time_step
B_J0 = 0.01         # config.b_j0
R_M = 1.0           # config.R_m
DT = 1.0

BLOCK_B = 32        # batch rows per grid step (>=32 amortizes grid overhead,
                    # <=64 keeps the fully-unrolled recurrence spill-free)
OUT_PAD = 128       # lane-dense actor readout / output width
ROW_WIDTH = 256     # packed per-row input: [hid_mem0 | x | 0-pad | a_mem0(wide)]
X_OFF = HID         # x lives at lanes 64..71
A0_OFF = 128        # wide a_mem0 lives at lanes 128..255 (lane-tile aligned)
BIG_NEG = -1.0e9    # padded readout lanes: exp(BIG_NEG - max) underflows to 0.0


def _nnpolicy_kernel(w1t_ref, wat_ref, small_ref, row_ref, out_ref):
    # ---- host-precomputed constants (static slices, read once per block) ----
    b1      = small_ref[0:1, 0:HID]          # inpt_hid1.bias
    alpha_h = small_ref[1:2, 0:HID]          # exp(-dt/tau_m_h1)
    ro_h    = small_ref[2:3, 0:HID]          # exp(-dt/tau_adp_h1)
    omr_h   = small_ref[3:4, 0:HID]          # 1 - ro_h
    gain_h  = small_ref[4:5, 0:HID]          # (1 - alpha_h) * R_m
    ba      = small_ref[5:6, :]              # (1, OUT_PAD): real | 0
    alpha_a = small_ref[6:7, :]              # (1, OUT_PAD): real | 1  (hold)
    gain_a  = small_ref[7:8, :]              # (1, OUT_PAD): real | 0  (no drive)

    hid_mem0 = row_ref[:, 0:HID]                         # (BLOCK_B, HID)
    x        = row_ref[:, X_OFF:X_OFF + INPUT_DIM]       # (BLOCK_B, INPUT_DIM)
    a_mem0   = row_ref[:, A0_OFF:A0_OFF + OUT_PAD]       # (BLOCK_B, OUT_PAD)

    wat = wat_ref[...]                                   # (HID, OUT_PAD), cols>=4 are 0

    # ---- loop-invariant drive, hoisted out of the 16-step recurrence --------
    drive = gain_h * (
        jnp.dot(x, w1t_ref[...], preferred_element_type=jnp.float32) + b1)

    def softmax_rows(a):
        m = jnp.max(a, axis=1, keepdims=True)
        e = jnp.exp(a - m)                   # padded lanes underflow to exactly 0
        return e / jnp.sum(e, axis=1, keepdims=True)

    def step(_, carry):
        hid_mem, hid_spk, b, a_mem, action = carry
        # mem_update_adp (hidden adaptive-threshold LIF layer)
        b = ro_h * b + omr_h * hid_spk
        theta = B_J0 + 1.8 * b
        hid_mem = hid_mem * alpha_h + drive - theta * hid_spk        # dt = 1
        hid_spk = (hid_mem - theta > 0).astype(jnp.float32)
        # actor readout (leaky integrator, no spike), carried at full lane width
        inpt_actor = jnp.dot(hid_spk, wat,
                             preferred_element_type=jnp.float32) + ba
        a_mem = a_mem * alpha_a + gain_a * inpt_actor
        action = action + softmax_rows(a_mem)
        return hid_mem, hid_spk, b, a_mem, action

    init = (
        hid_mem0,
        jnp.zeros((BLOCK_B, HID), jnp.float32),
        jnp.full((BLOCK_B, HID), B_J0, jnp.float32),     # scalar b_j0 broadcast
        a_mem0,
        jnp.zeros((BLOCK_B, OUT_PAD), jnp.float32),
    )
    # TIME_STEP is a compile-time constant: fully unroll so the scheduler can
    # overlap step t's readout/softmax with step t+1's membrane update.
    *_, action = lax.fori_loop(0, TIME_STEP, step, init, unroll=True)

    out_ref[...] = action        # single unmasked (BLOCK_B, 128) store


def _pad_row(v, width, pad_val=0.0):
    v = jnp.asarray(v, jnp.float32).reshape(1, -1)
    return jnp.pad(v, ((0, 0), (0, width - v.shape[1])),
                   constant_values=pad_val)


@jax.jit
def nnpolicy_forward(x, params, mem_inits):
    """Runs the NNPolicy forward pass. Returns (value, action)."""
    x = jnp.asarray(x, jnp.float32)
    if x.ndim != 2:                    # mirrors `input.unsqueeze(0)`
        x = x[None, :]
    batch = x.shape[0]

    (w1t, b1, wat, ba, wct, bc,
     tau_adp_h1, tau_m_h1, tau_m_a, tau_m_c) = params
    hid_mem0, a_mem0, c_mem0 = mem_inits
    # Critic head is width 1: softmax over one column == 1.0 exactly, so the
    # accumulated value is the constant TIME_STEP. Its weights/state never
    # enter the kernel.
    del wct, bc, tau_m_c, c_mem0

    hid_mem0 = jnp.asarray(hid_mem0, jnp.float32)
    a_mem0 = jnp.asarray(a_mem0, jnp.float32)

    padded_batch = pl.cdiv(batch, BLOCK_B) * BLOCK_B
    grid = (padded_batch // BLOCK_B,)

    # --- decay constants computed once, outside the kernel -------------------
    alpha_h = jnp.exp(-DT / jnp.asarray(tau_m_h1, jnp.float32))
    ro_h = jnp.exp(-DT / jnp.asarray(tau_adp_h1, jnp.float32))
    alpha_a = jnp.exp(-DT / jnp.asarray(tau_m_a, jnp.float32))
    small = jnp.concatenate([
        _pad_row(b1, 128),
        _pad_row(alpha_h, 128),
        _pad_row(ro_h, 128),
        _pad_row(1.0 - ro_h, 128),
        _pad_row((1.0 - alpha_h) * R_M, 128),
        _pad_row(ba, 128, 0.0),
        _pad_row(alpha_a, 128, 1.0),               # padded lanes: hold value
        _pad_row((1.0 - alpha_a) * R_M, 128, 0.0), # padded lanes: no drive
    ], axis=0)                                     # (8, 128) VMEM tile

    # Readout weights widened to full lane width (cols >= OUTPUT_DIM are 0).
    wat_wide = jnp.pad(jnp.asarray(wat, jnp.float32),
                       ((0, 0), (0, OUT_PAD - OUTPUT_DIM)))

    # --- packed per-row buffer: one lane-dense DMA per block -----------------
    # TODO(synk): the module draws hid1_mem/a_out_mem with torch.rand inside
    # forward; here they are explicit inputs (could use pltpu.prng_* in-kernel).
    rowbuf = jnp.concatenate([
        hid_mem0,                                                     # 0:64
        x,                                                            # 64:72
        jnp.zeros((batch, A0_OFF - HID - INPUT_DIM), jnp.float32),    # 72:128
        a_mem0,                                                       # 128:132
        jnp.full((batch, ROW_WIDTH - A0_OFF - OUTPUT_DIM), BIG_NEG,
                 jnp.float32),                                        # 132:256
    ], axis=1)
    rowbuf = jnp.pad(rowbuf, ((0, padded_batch - batch), (0, 0)))

    out = pl.pallas_call(
        _nnpolicy_kernel,
        out_shape=jax.ShapeDtypeStruct((padded_batch, OUT_PAD), jnp.float32),
        grid_spec=pltpu.PrefetchScalarGridSpec(
            num_scalar_prefetch=0,
            grid=grid,
            in_specs=[
                pl.BlockSpec((INPUT_DIM, HID), lambda i: (0, 0)),      # W1.T
                pl.BlockSpec((HID, OUT_PAD), lambda i: (0, 0)),        # Wa.T (wide)
                pl.BlockSpec((8, 128), lambda i: (0, 0)),              # packed consts
                pl.BlockSpec((BLOCK_B, ROW_WIDTH), lambda i: (i, 0)),  # packed rows
            ],
            out_specs=pl.BlockSpec((BLOCK_B, OUT_PAD), lambda i: (i, 0)),
        ),
        compiler_params=pltpu.CompilerParams(
            dimension_semantics=("parallel",)),   # batch blocks shard across TCs (v7x)
    )(jnp.asarray(w1t, jnp.float32), wat_wide, small, rowbuf)

    action = out[:batch, 0:OUTPUT_DIM]
    value = jnp.full((batch, 1), float(TIME_STEP), jnp.float32)
    return value, action


# --------------------------- init / reference --------------------------------
def _xavier_uniform(key, shape):
    fan_out, fan_in = shape                       # PyTorch (out, in) convention
    bound = math.sqrt(6.0 / (fan_in + fan_out))
    return jax.random.uniform(key, shape, jnp.float32, -bound, bound)


def make_params(key):
    ks = jax.random.split(key, 7)
    w1 = _xavier_uniform(ks[0], (HID, INPUT_DIM))          # inpt_hid1.weight
    wa = _xavier_uniform(ks[1], (OUTPUT_DIM, HID))         # hid1_actor.weight
    wc = _xavier_uniform(ks[2], (1, HID))                  # hid1_critic.weight
    b1 = jnp.zeros((1, HID), jnp.float32)
    ba = jnp.zeros((1, OUTPUT_DIM), jnp.float32)
    bc = jnp.zeros((1, 1), jnp.float32)
    # Initialization-side clamp keeps exp(-1/tau) stable for >4-sigma draws.
    tau_adp_h1 = jnp.maximum(150.0 + 10.0 * jax.random.normal(ks[3], (1, HID)), 1.0)
    tau_m_h1 = jnp.maximum(20.0 + 5.0 * jax.random.normal(ks[4], (1, HID)), 1.0)
    tau_m_a = jnp.maximum(20.0 + 5.0 * jax.random.normal(ks[5], (1, OUTPUT_DIM)), 1.0)
    tau_m_c = jnp.maximum(20.0 + 5.0 * jax.random.normal(ks[6], (1, 1)), 1.0)
    # tau_adp_a / tau_adp_c exist on the module but are unused in forward.
    return (w1.T, b1, wa.T, ba, wc.T, bc,
            tau_adp_h1, tau_m_h1, tau_m_a, tau_m_c)


def nnpolicy_reference(x, params, mem_inits):
    """Pure-JAX mirror of the PyTorch forward (for verification only)."""
    (w1t, b1, wat, ba, wct, bc,
     tau_adp_h1, tau_m_h1, tau_m_a, tau_m_c) = params
    hid_mem, a_mem, c_mem = [jnp.asarray(m, jnp.float32) for m in mem_inits]
    batch = x.shape[0]
    hid_spk = jnp.zeros((batch, HID), jnp.float32)
    b = jnp.full((batch, HID), B_J0, jnp.float32)
    value = jnp.zeros((batch, 1), jnp.float32)
    action = jnp.zeros((batch, OUTPUT_DIM), jnp.float32)
    alpha_h = jnp.exp(-DT / tau_m_h1)
    ro_h = jnp.exp(-DT / tau_adp_h1)
    alpha_a = jnp.exp(-DT / tau_m_a)
    alpha_c = jnp.exp(-DT / tau_m_c)
    for _ in range(TIME_STEP):
        inpt_hid1 = x @ w1t + b1
        b = ro_h * b + (1.0 - ro_h) * hid_spk
        theta = B_J0 + 1.8 * b
        hid_mem = hid_mem * alpha_h + (1.0 - alpha_h) * R_M * inpt_hid1 - theta * hid_spk
        hid_spk = (hid_mem - theta > 0).astype(jnp.float32)
        inpt_actor = hid_spk @ wat + ba
        inpt_critic = hid_spk @ wct + bc
        a_mem = a_mem * alpha_a + (1.0 - alpha_a) * R_M * inpt_actor
        c_mem = c_mem * alpha_c + (1.0 - alpha_c) * R_M * inpt_critic
        value = value + jax.nn.softmax(c_mem, axis=1)
        action = action + jax.nn.softmax(a_mem, axis=1)
    return value, action


if __name__ == "__main__":
    key = jax.random.PRNGKey(0)
    k_x, k_p, k_m1, k_m2, k_m3 = jax.random.split(key, 5)

    batch = 2
    x = jax.random.normal(k_x, (batch, INPUT_DIM), jnp.float32)
    params = make_params(k_p)

    # torch.rand initial membrane potentials -> deterministic uniform [0,1)
    mem_inits = (
        jax.random.uniform(k_m1, (batch, HID), jnp.float32),
        jax.random.uniform(k_m2, (batch, OUTPUT_DIM), jnp.float32),
        jax.random.uniform(k_m3, (batch, 1), jnp.float32),
    )

    value, action = nnpolicy_forward(x, params, mem_inits)
    jax.block_until_ready((value, action))

    assert value.shape == (batch, 1)
    assert action.shape == (batch, OUTPUT_DIM)
    assert bool(jnp.all(jnp.isfinite(value))) and bool(jnp.all(jnp.isfinite(action)))

    # Verify against a pure-JAX reference. The hard spike threshold means
    # ULP-level matmul/exp differences can flip spikes -> loose tolerance.
    v_ref, a_ref = nnpolicy_reference(x, params, mem_inits)
    assert bool(jnp.allclose(value, v_ref, atol=1e-5)), (value, v_ref)
    assert bool(jnp.allclose(action, a_ref, atol=0.1)), float(
        jnp.max(jnp.abs(action - a_ref)))

    print("KERNEL_OK")
</pallas_src>

<mosaic_0001>
module attributes {stable_mosaic.version = 11 : i64} {
  func.func @_nnpolicy_kernel(%arg0: i32, %arg1: memref<8x64xf32, #tpu.memory_space<vmem>>, %arg2: memref<64x128xf32, #tpu.memory_space<vmem>>, %arg3: memref<8x128xf32, #tpu.memory_space<vmem>>, %arg4: memref<32x256xf32, #tpu.memory_space<vmem>>, %arg5: memref<32x128xf32, #tpu.memory_space<vmem>>) attributes {dimension_semantics = [#tpu.dimension_semantics<parallel>], iteration_bounds = array<i64: 1>, scalar_prefetch = 0 : i64, scratch_operands = 0 : i64, tpu.core_type = #tpu.core_type<tc>, window_params = [{pipeline_mode = #tpu.pipeline_mode<synchronous>, transform_indices = @transform_0, window_bounds = array<i64: 8, 64>}, {pipeline_mode = #tpu.pipeline_mode<synchronous>, transform_indices = @transform_1, window_bounds = array<i64: 64, 128>}, {pipeline_mode = #tpu.pipeline_mode<synchronous>, transform_indices = @transform_2, window_bounds = array<i64: 8, 128>}, {transform_indices = @transform_3, window_bounds = array<i64: 32, 256>}, {transform_indices = @transform_4, window_bounds = array<i64: 32, 128>}]} {
    %c0 = arith.constant 0 : index
    %c0_0 = arith.constant 0 : index
    %0 = vector.load %arg3[%c0, %c0_0] : memref<8x128xf32, #tpu.memory_space<vmem>>, vector<1x64xf32>
    %c1 = arith.constant 1 : index
    %c0_1 = arith.constant 0 : index
    %1 = vector.load %arg3[%c1, %c0_1] : memref<8x128xf32, #tpu.memory_space<vmem>>, vector<1x64xf32>
    %c2 = arith.constant 2 : index
    %c0_2 = arith.constant 0 : index
    %2 = vector.load %arg3[%c2, %c0_2] : memref<8x128xf32, #tpu.memory_space<vmem>>, vector<1x64xf32>
    %c3 = arith.constant 3 : index
    %c0_3 = arith.constant 0 : index
    %3 = vector.load %arg3[%c3, %c0_3] : memref<8x128xf32, #tpu.memory_space<vmem>>, vector<1x64xf32>
    %c4 = arith.constant 4 : index
    %c0_4 = arith.constant 0 : index
    %4 = vector.load %arg3[%c4, %c0_4] : memref<8x128xf32, #tpu.memory_space<vmem>>, vector<1x64xf32>
    %c5 = arith.constant 5 : index
    %c0_5 = arith.constant 0 : index
    %5 = vector.load %arg3[%c5, %c0_5] : memref<8x128xf32, #tpu.memory_space<vmem>>, vector<1x128xf32>
    %c6 = arith.constant 6 : index
    %c0_6 = arith.constant 0 : index
    %6 = vector.load %arg3[%c6, %c0_6] : memref<8x128xf32, #tpu.memory_space<vmem>>, vector<1x128xf32>
    %c7 = arith.constant 7 : index
    %c0_7 = arith.constant 0 : index
    %7 = vector.load %arg3[%c7, %c0_7] : memref<8x128xf32, #tpu.memory_space<vmem>>, vector<1x128xf32>
    %c0_8 = arith.constant 0 : index
    %c0_9 = arith.constant 0 : index
    %8 = vector.load %arg4[%c0_8, %c0_9] : memref<32x256xf32, #tpu.memory_space<vmem>>, vector<32x64xf32>
    %c0_10 = arith.constant 0 : index
    %c64 = arith.constant 64 : index
    %9 = vector.load %arg4[%c0_10, %c64] : memref<32x256xf32, #tpu.memory_space<vmem>>, vector<32x8xf32>
    %c0_11 = arith.constant 0 : index
    %c128 = arith.constant 128 : index
    %10 = vector.load %arg4[%c0_11, %c128] : memref<32x256xf32, #tpu.memory_space<vmem>>, vector<32x128xf32>
    %c0_12 = arith.constant 0 : index
    %c0_13 = arith.constant 0 : index
    %11 = vector.load %arg2[%c0_12, %c0_13] : memref<64x128xf32, #tpu.memory_space<vmem>>, vector<64x128xf32>
    %c0_14 = arith.constant 0 : index
    %c0_15 = arith.constant 0 : index
    %12 = vector.load %arg1[%c0_14, %c0_15] : memref<8x64xf32, #tpu.memory_space<vmem>>, vector<8x64xf32>
    %cst = arith.constant dense<0.000000e+00> : vector<32x64xf32>
    %13 = tpu.matmul %9, %12, %cst {dimension_numbers = #tpu.dot_dimension_numbers<[1], [0], [0], [1], [0, 0, 1, 1], [], []>} : vector<32x8xf32>, vector<8x64xf32>, vector<32x64xf32> -> vector<32x64xf32>
    %14 = vector.broadcast %0 : vector<1x64xf32> to vector<32x64xf32>
    %15 = arith.addf %13, %14 : vector<32x64xf32>
    %16 = vector.broadcast %4 : vector<1x64xf32> to vector<32x64xf32>
    %17 = arith.mulf %16, %15 : vector<32x64xf32>
    %cst_16 = arith.constant 0.000000e+00 : f32
    %18 = vector.broadcast %cst_16 : f32 to vector<32x64xf32>
    %cst_17 = arith.constant 0.00999999977 : f32
    %19 = vector.broadcast %cst_17 : f32 to vector<32x64xf32>
    %cst_18 = arith.constant 0.000000e+00 : f32
    %20 = vector.broadcast %cst_18 : f32 to vector<32x128xf32>
    %c0_i32 = arith.constant 0 : i32
    %21 = vector.broadcast %2 : vector<1x64xf32> to vector<32x64xf32>
    %22 = arith.mulf %21, %19 : vector<32x64xf32>
    %23 = vector.broadcast %3 : vector<1x64xf32> to vector<32x64xf32>
    %24 = arith.mulf %23, %18 : vector<32x64xf32>
    %25 = arith.addf %22, %24 : vector<32x64xf32>
    %cst_19 = arith.constant 1.800000e+00 : f32
    %26 = vector.broadcast %cst_19 : f32 to vector<32x64xf32>
    %27 = arith.mulf %26, %25 : vector<32x64xf32>
    %cst_20 = arith.constant 0.00999999977 : f32
    %28 = vector.broadcast %cst_20 : f32 to vector<32x64xf32>
    %29 = arith.addf %28, %27 : vector<32x64xf32>
    %30 = vector.broadcast %1 : vector<1x64xf32> to vector<32x64xf32>
    %31 = arith.mulf %8, %30 : vector<32x64xf32>
    %32 = arith.addf %31, %17 : vector<32x64xf32>
    %33 = arith.mulf %29, %18 : vector<32x64xf32>
    %34 = arith.subf %32, %33 : vector<32x64xf32>
    %35 = arith.subf %34, %29 : vector<32x64xf32>
    %cst_21 = arith.constant 0.000000e+00 : f32
    %36 = vector.broadcast %cst_21 : f32 to vector<32x64xf32>
    %37 = arith.cmpf ogt, %35, %36 : vector<32x64xf32>
    %38 = arith.extui %37 : vector<32x64xi1> to vector<32x64xi32>
    %39 = arith.sitofp %38 : vector<32x64xi32> to vector<32x64xf32>
    %cst_22 = arith.constant dense<0.000000e+00> : vector<32x128xf32>
    %40 = tpu.matmul %39, %11, %cst_22 {dimension_numbers = #tpu.dot_dimension_numbers<[1], [0], [0], [1], [0, 0, 1, 1], [], []>} : vector<32x64xf32>, vector<64x128xf32>, vector<32x128xf32> -> vector<32x128xf32>
    %41 = vector.broadcast %5 : vector<1x128xf32> to vector<32x128xf32>
    %42 = arith.addf %40, %41 : vector<32x128xf32>
    %43 = vector.broadcast %6 : vector<1x128xf32> to vector<32x128xf32>
    %44 = arith.mulf %10, %43 : vector<32x128xf32>
    %45 = vector.broadcast %7 : vector<1x128xf32> to vector<32x128xf32>
    %46 = arith.mulf %45, %42 : vector<32x128xf32>
    %47 = arith.addf %44, %46 : vector<32x128xf32>
    %cst_23 = arith.constant dense<0xFF800000> : vector<32xf32>
    %48 = vector.multi_reduction <maximumf>, %47, %cst_23 [1] : vector<32x128xf32> to vector<32xf32>
    %49 = vector.shape_cast %48 : vector<32xf32> to vector<32x1xf32>
    %50 = vector.broadcast %49 : vector<32x1xf32> to vector<32x128xf32>
    %51 = arith.subf %47, %50 : vector<32x128xf32>
    %52 = math.exp %51 : vector<32x128xf32>
    %cst_24 = arith.constant dense<0.000000e+00> : vector<32xf32>
    %53 = vector.multi_reduction <add>, %52, %cst_24 [1] : vector<32x128xf32> to vector<32xf32>
    %54 = vector.shape_cast %53 : vector<32xf32> to vector<32x1xf32>
    %55 = vector.broadcast %54 : vector<32x1xf32> to vector<32x128xf32>
    %56 = arith.divf %52, %55 : vector<32x128xf32>
    %57 = arith.addf %20, %56 : vector<32x128xf32>
    %c1_i32 = arith.constant 1 : i32
    %58 = vector.broadcast %2 : vector<1x64xf32> to vector<32x64xf32>
    %59 = arith.mulf %58, %25 : vector<32x64xf32>
    %60 = vector.broadcast %3 : vector<1x64xf32> to vector<32x64xf32>
    %61 = arith.mulf %60, %39 : vector<32x64xf32>
    %62 = arith.addf %59, %61 : vector<32x64xf32>
    %cst_25 = arith.constant 1.800000e+00 : f32
    %63 = vector.broadcast %cst_25 : f32 to vector<32x64xf32>
    %64 = arith.mulf %63, %62 : vector<32x64xf32>
    %cst_26 = arith.constant 0.00999999977 : f32
    %65 = vector.broadcast %cst_26 : f32 to vector<32x64xf32>
    %66 = arith.addf %65, %64 : vector<32x64xf32>
    %67 = vector.broadcast %1 : vector<1x64xf32> to vector<32x64xf32>
    %68 = arith.mulf %34, %67 : vector<32x64xf32>
    %69 = arith.addf %68, %17 : vector<32x64xf32>
    %70 = arith.mulf %66, %39 : vector<32x64xf32>
    %71 = arith.subf %69, %70 : vector<32x64xf32>
    %72 = arith.subf %71, %66 : vector<32x64xf32>
    %cst_27 = arith.constant 0.000000e+00 : f32
    %73 = vector.broadcast %cst_27 : f32 to vector<32x64xf32>
    %74 = arith.cmpf ogt, %72, %73 : vector<32x64xf32>
    %75 = arith.extui %74 : vector<32x64xi1> to vector<32x64xi32>
    %76 = arith.sitofp %75 : vector<32x64xi32> to vector<32x64xf32>
    %cst_28 = arith.constant dense<0.000000e+00> : vector<32x128xf32>
    %77 = tpu.matmul %76, %11, %cst_28 {dimension_numbers = #tpu.dot_dimension_numbers<[1], [0], [0], [1], [0, 0, 1, 1], [], []>} : vector<32x64xf32>, vector<64x128xf32>, vector<32x128xf32> -> vector<32x128xf32>
    %78 = vector.broadcast %5 : vector<1x128xf32> to vector<32x128xf32>
    %79 = arith.addf %77, %78 : vector<32x128xf32>
    %80 = vector.broadcast %6 : vector<1x128xf32> to vector<32x128xf32>
    %81 = arith.mulf %47, %80 : vector<32x128xf32>
    %82 = vector.broadcast %7 : vector<1x128xf32> to vector<32x128xf32>
    %83 = arith.mulf %82, %79 : vector<32x128xf32>
    %84 = arith.addf %81, %83 : vector<32x128xf32>
    %cst_29 = arith.constant dense<0xFF800000> : vector<32xf32>
    %85 = vector.multi_reduction <maximumf>, %84, %cst_29 [1] : vector<32x128xf32> to vector<32xf32>
    %86 = vector.shape_cast %85 : vector<32xf32> to vector<32x1xf32>
    %87 = vector.broadcast %86 : vector<32x1xf32> to vector<32x128xf32>
    %88 = arith.subf %84, %87 : vector<32x128xf32>
    %89 = math.exp %88 : vector<32x128xf32>
    %cst_30 = arith.constant dense<0.000000e+00> : vector<32xf32>
    %90 = vector.multi_reduction <add>, %89, %cst_30 [1] : vector<32x128xf32> to vector<32xf32>
    %91 = vector.shape_cast %90 : vector<32xf32> to vector<32x1xf32>
    %92 = vector.broadcast %91 : vector<32x1xf32> to vector<32x128xf32>
    %93 = arith.divf %89, %92 : vector<32x128xf32>
    %94 = arith.addf %57, %93 : vector<32x128xf32>
    %c2_i32 = arith.constant 2 : i32
    %95 = vector.broadcast %2 : vector<1x64xf32> to vector<32x64xf32>
    %96 = arith.mulf %95, %62 : vector<32x64xf32>
    %97 = vector.broadcast %3 : vector<1x64xf32> to vector<32x64xf32>
    %98 = arith.mulf %97, %76 : vector<32x64xf32>
    %99 = arith.addf %96, %98 : vector<32x64xf32>
    %cst_31 = arith.constant 1.800000e+00 : f32
    %100 = vector.broadcast %cst_31 : f32 to vector<32x64xf32>
    %101 = arith.mulf %100, %99 : vector<32x64xf32>
    %cst_32 = arith.constant 0.00999999977 : f32
    %102 = vector.broadcast %cst_32 : f32 to vector<32x64xf32>
    %103 = arith.addf %102, %101 : vector<32x64xf32>
    %104 = vector.broadcast %1 : vector<1x64xf32> to vector<32x64xf32>
    %105 = arith.mulf %71, %104 : vector<32x64xf32>
    %106 = arith.addf %105, %17 : vector<32x64xf32>
    %107 = arith.mulf %103, %76 : vector<32x64xf32>
    %108 = arith.subf %106, %107 : vector<32x64xf32>
    %109 = arith.subf %108, %103 : vector<32x64xf32>
    %cst_33 = arith.constant 0.000000e+00 : f32
    %110 = vector.broadcast %cst_33 : f32 to vector<32x64xf32>
    %111 = arith.cmpf ogt, %109, %110 : vector<32x64xf32>
    %112 = arith.extui %111 : vector<32x64xi1> to vector<32x64xi32>
    %113 = arith.sitofp %112 : vector<32x64xi32> to vector<32x64xf32>
    %cst_34 = arith.constant dense<0.000000e+00> : vector<32x128xf32>
    %114 = tpu.matmul %113, %11, %cst_34 {dimension_numbers = #tpu.dot_dimension_numbers<[1], [0], [0], [1], [0, 0, 1, 1], [], []>} : vector<32x64xf32>, vector<64x128xf32>, vector<32x128xf32> -> vector<32x128xf32>
    %115 = vector.broadcast %5 : vector<1x128xf32> to vector<32x128xf32>
    %116 = arith.addf %114, %115 : vector<32x128xf32>
    %117 = vector.broadcast %6 : vector<1x128xf32> to vector<32x128xf32>
    %118 = arith.mulf %84, %117 : vector<32x128xf32>
    %119 = vector.broadcast %7 : vector<1x128xf32> to vector<32x128xf32>
    %120 = arith.mulf %119, %116 : vector<32x128xf32>
    %121 = arith.addf %118, %120 : vector<32x128xf32>
    %cst_35 = arith.constant dense<0xFF800000> : vector<32xf32>
    %122 = vector.multi_reduction <maximumf>, %121, %cst_35 [1] : vector<32x128xf32> to vector<32xf32>
    %123 = vector.shape_cast %122 : vector<32xf32> to vector<32x1xf32>
    %124 = vector.broadcast %123 : vector<32x1xf32> to vector<32x128xf32>
    %125 = arith.subf %121, %124 : vector<32x128xf32>
    %126 = math.exp %125 : vector<32x128xf32>
    %cst_36 = arith.constant dense<0.000000e+00> : vector<32xf32>
    %127 = vector.multi_reduction <add>, %126, %cst_36 [1] : vector<32x128xf32> to vector<32xf32>
    %128 = vector.shape_cast %127 : vector<32xf32> to vector<32x1xf32>
    %129 = vector.broadcast %128 : vector<32x1xf32> to vector<32x128xf32>
    %130 = arith.divf %126, %129 : vector<32x128xf32>
    %131 = arith.addf %94, %130 : vector<32x128xf32>
    %c3_i32 = arith.constant 3 : i32
    %132 = vector.broadcast %2 : vector<1x64xf32> to vector<32x64xf32>
    %133 = arith.mulf %132, %99 : vector<32x64xf32>
    %134 = vector.broadcast %3 : vector<1x64xf32> to vector<32x64xf32>
    %135 = arith.mulf %134, %113 : vector<32x64xf32>
    %136 = arith.addf %133, %135 : vector<32x64xf32>
    %cst_37 = arith.constant 1.800000e+00 : f32
    %137 = vector.broadcast %cst_37 : f32 to vector<32x64xf32>
    %138 = arith.mulf %137, %136 : vector<32x64xf32>
    %cst_38 = arith.constant 0.00999999977 : f32
    %139 = vector.broadcast %cst_38 : f32 to vector<32x64xf32>
    %140 = arith.addf %139, %138 : vector<32x64xf32>
    %141 = vector.broadcast %1 : vector<1x64xf32> to vector<32x64xf32>
    %142 = arith.mulf %108, %141 : vector<32x64xf32>
    %143 = arith.addf %142, %17 : vector<32x64xf32>
    %144 = arith.mulf %140, %113 : vector<32x64xf32>
    %145 = arith.subf %143, %144 : vector<32x64xf32>
    %146 = arith.subf %145, %140 : vector<32x64xf32>
    %cst_39 = arith.constant 0.000000e+00 : f32
    %147 = vector.broadcast %cst_39 : f32 to vector<32x64xf32>
    %148 = arith.cmpf ogt, %146, %147 : vector<32x64xf32>
    %149 = arith.extui %148 : vector<32x64xi1> to vector<32x64xi32>
    %150 = arith.sitofp %149 : vector<32x64xi32> to vector<32x64xf32>
    %cst_40 = arith.constant dense<0.000000e+00> : vector<32x128xf32>
    %151 = tpu.matmul %150, %11, %cst_40 {dimension_numbers = #tpu.dot_dimension_numbers<[1], [0], [0], [1], [0, 0, 1, 1], [], []>} : vector<32x64xf32>, vector<64x128xf32>, vector<32x128xf32> -> vector<32x128xf32>
    %152 = vector.broadcast %5 : vector<1x128xf32> to vector<32x128xf32>
    %153 = arith.addf %151, %152 : vector<32x128xf32>
    %154 = vector.broadcast %6 : vector<1x128xf32> to vector<32x128xf32>
    %155 = arith.mulf %121, %154 : vector<32x128xf32>
    %156 = vector.broadcast %7 : vector<1x128xf32> to vector<32x128xf32>
    %157 = arith.mulf %156, %153 : vector<32x128xf32>
    %158 = arith.addf %155, %157 : vector<32x128xf32>
    %cst_41 = arith.constant dense<0xFF800000> : vector<32xf32>
    %159 = vector.multi_reduction <maximumf>, %158, %cst_41 [1] : vector<32x128xf32> to vector<32xf32>
    %160 = vector.shape_cast %159 : vector<32xf32> to vector<32x1xf32>
    %161 = vector.broadcast %160 : vector<32x1xf32> to vector<32x128xf32>
    %162 = arith.subf %158, %161 : vector<32x128xf32>
    %163 = math.exp %162 : vector<32x128xf32>
    %cst_42 = arith.constant dense<0.000000e+00> : vector<32xf32>
    %164 = vector.multi_reduction <add>, %163, %cst_42 [1] : vector<32x128xf32> to vector<32xf32>
    %165 = vector.shape_cast %164 : vector<32xf32> to vector<32x1xf32>
    %166 = vector.broadcast %165 : vector<32x1xf32> to vector<32x128xf32>
    %167 = arith.divf %163, %166 : vector<32x128xf32>
    %168 = arith.addf %131, %167 : vector<32x128xf32>
    %c4_i32 = arith.constant 4 : i32
    %169 = vector.broadcast %2 : vector<1x64xf32> to vector<32x64xf32>
    %170 = arith.mulf %169, %136 : vector<32x64xf32>
    %171 = vector.broadcast %3 : vector<1x64xf32> to vector<32x64xf32>
    %172 = arith.mulf %171, %150 : vector<32x64xf32>
    %173 = arith.addf %170, %172 : vector<32x64xf32>
    %cst_43 = arith.constant 1.800000e+00 : f32
    %174 = vector.broadcast %cst_43 : f32 to vector<32x64xf32>
    %175 = arith.mulf %174, %173 : vector<32x64xf32>
    %cst_44 = arith.constant 0.00999999977 : f32
    %176 = vector.broadcast %cst_44 : f32 to vector<32x64xf32>
    %177 = arith.addf %176, %175 : vector<32x64xf32>
    %178 = vector.broadcast %1 : vector<1x64xf32> to vector<32x64xf32>
    %179 = arith.mulf %145, %178 : vector<32x64xf32>
    %180 = arith.addf %179, %17 : vector<32x64xf32>
    %181 = arith.mulf %177, %150 : vector<32x64xf32>
    %182 = arith.subf %180, %181 : vector<32x64xf32>
    %183 = arith.subf %182, %177 : vector<32x64xf32>
    %cst_45 = arith.constant 0.000000e+00 : f32
    %184 = vector.broadcast %cst_45 : f32 to vector<32x64xf32>
    %185 = arith.cmpf ogt, %183, %184 : vector<32x64xf32>
    %186 = arith.extui %185 : vector<32x64xi1> to vector<32x64xi32>
    %187 = arith.sitofp %186 : vector<32x64xi32> to vector<32x64xf32>
    %cst_46 = arith.constant dense<0.000000e+00> : vector<32x128xf32>
    %188 = tpu.matmul %187, %11, %cst_46 {dimension_numbers = #tpu.dot_dimension_numbers<[1], [0], [0], [1], [0, 0, 1, 1], [], []>} : vector<32x64xf32>, vector<64x128xf32>, vector<32x128xf32> -> vector<32x128xf32>
    %189 = vector.broadcast %5 : vector<1x128xf32> to vector<32x128xf32>
    %190 = arith.addf %188, %189 : vector<32x128xf32>
    %191 = vector.broadcast %6 : vector<1x128xf32> to vector<32x128xf32>
    %192 = arith.mulf %158, %191 : vector<32x128xf32>
    %193 = vector.broadcast %7 : vector<1x128xf32> to vector<32x128xf32>
    %194 = arith.mulf %193, %190 : vector<32x128xf32>
    %195 = arith.addf %192, %194 : vector<32x128xf32>
    %cst_47 = arith.constant dense<0xFF800000> : vector<32xf32>
    %196 = vector.multi_reduction <maximumf>, %195, %cst_47 [1] : vector<32x128xf32> to vector<32xf32>
    %197 = vector.shape_cast %196 : vector<32xf32> to vector<32x1xf32>
    %198 = vector.broadcast %197 : vector<32x1xf32> to vector<32x128xf32>
    %199 = arith.subf %195, %198 : vector<32x128xf32>
    %200 = math.exp %199 : vector<32x128xf32>
    %cst_48 = arith.constant dense<0.000000e+00> : vector<32xf32>
    %201 = vector.multi_reduction <add>, %200, %cst_48 [1] : vector<32x128xf32> to vector<32xf32>
    %202 = vector.shape_cast %201 : vector<32xf32> to vector<32x1xf32>
    %203 = vector.broadcast %202 : vector<32x1xf32> to vector<32x128xf32>
    %204 = arith.divf %200, %203 : vector<32x128xf32>
    %205 = arith.addf %168, %204 : vector<32x128xf32>
    %c5_i32 = arith.constant 5 : i32
    %206 = vector.broadcast %2 : vector<1x64xf32> to vector<32x64xf32>
    %207 = arith.mulf %206, %173 : vector<32x64xf32>
    %208 = vector.broadcast %3 : vector<1x64xf32> to vector<32x64xf32>
    %209 = arith.mulf %208, %187 : vector<32x64xf32>
    %210 = arith.addf %207, %209 : vector<32x64xf32>
    %cst_49 = arith.constant 1.800000e+00 : f32
    %211 = vector.broadcast %cst_49 : f32 to vector<32x64xf32>
    %212 = arith.mulf %211, %210 : vector<32x64xf32>
    %cst_50 = arith.constant 0.00999999977 : f32
    %213 = vector.broadcast %cst_50 : f32 to vector<32x64xf32>
    %214 = arith.addf %213, %212 : vector<32x64xf32>
    %215 = vector.broadcast %1 : vector<1x64xf32> to vector<32x64xf32>
    %216 = arith.mulf %182, %215 : vector<32x64xf32>
    %217 = arith.addf %216, %17 : vector<32x64xf32>
    %218 = arith.mulf %214, %187 : vector<32x64xf32>
    %219 = arith.subf %217, %218 : vector<32x64xf32>
    %220 = arith.subf %219, %214 : vector<32x64xf32>
    %cst_51 = arith.constant 0.000000e+00 : f32
    %221 = vector.broadcast %cst_51 : f32 to vector<32x64xf32>
    %222 = arith.cmpf ogt, %220, %221 : vector<32x64xf32>
    %223 = arith.extui %222 : vector<32x64xi1> to vector<32x64xi32>
    %224 = arith.sitofp %223 : vector<32x64xi32> to vector<32x64xf32>
    %cst_52 = arith.constant dense<0.000000e+00> : vector<32x128xf32>
    %225 = tpu.matmul %224, %11, %cst_52 {dimension_numbers = #tpu.dot_dimension_numbers<[1], [0], [0], [1], [0, 0, 1, 1], [], []>} : vector<32x64xf32>, vector<64x128xf32>, vector<32x128xf32> -> vector<32x128xf32>
    %226 = vector.broadcast %5 : vector<1x128xf32> to vector<32x128xf32>
    %227 = arith.addf %225, %226 : vector<32x128xf32>
    %228 = vector.broadcast %6 : vector<1x128xf32> to vector<32x128xf32>
    %229 = arith.mulf %195, %228 : vector<32x128xf32>
    %230 = vector.broadcast %7 : vector<1x128xf32> to vector<32x128xf32>
    %231 = arith.mulf %230, %227 : vector<32x128xf32>
    %232 = arith.addf %229, %231 : vector<32x128xf32>
    %cst_53 = arith.constant dense<0xFF800000> : vector<32xf32>
    %233 = vector.multi_reduction <maximumf>, %232, %cst_53 [1] : vector<32x128xf32> to vector<32xf32>
    %234 = vector.shape_cast %233 : vector<32xf32> to vector<32x1xf32>
    %235 = vector.broadcast %234 : vector<32x1xf32> to vector<32x128xf32>
    %236 = arith.subf %232, %235 : vector<32x128xf32>
    %237 = math.exp %236 : vector<32x128xf32>
    %cst_54 = arith.constant dense<0.000000e+00> : vector<32xf32>
    %238 = vector.multi_reduction <add>, %237, %cst_54 [1] : vector<32x128xf32> to vector<32xf32>
    %239 = vector.shape_cast %238 : vector<32xf32> to vector<32x1xf32>
    %240 = vector.broadcast %239 : vector<32x1xf32> to vector<32x128xf32>
    %241 = arith.divf %237, %240 : vector<32x128xf32>
    %242 = arith.addf %205, %241 : vector<32x128xf32>
    %c6_i32 = arith.constant 6 : i32
    %243 = vector.broadcast %2 : vector<1x64xf32> to vector<32x64xf32>
    %244 = arith.mulf %243, %210 : vector<32x64xf32>
    %245 = vector.broadcast %3 : vector<1x64xf32> to vector<32x64xf32>
    %246 = arith.mulf %245, %224 : vector<32x64xf32>
    %247 = arith.addf %244, %246 : vector<32x64xf32>
    %cst_55 = arith.constant 1.800000e+00 : f32
    %248 = vector.broadcast %cst_55 : f32 to vector<32x64xf32>
    %249 = arith.mulf %248, %247 : vector<32x64xf32>
    %cst_56 = arith.constant 0.00999999977 : f32
    %250 = vector.broadcast %cst_56 : f32 to vector<32x64xf32>
    %251 = arith.addf %250, %249 : vector<32x64xf32>
    %252 = vector.broadcast %1 : vector<1x64xf32> to vector<32x64xf32>
    %253 = arith.mulf %219, %252 : vector<32x64xf32>
    %254 = arith.addf %253, %17 : vector<32x64xf32>
    %255 = arith.mulf %251, %224 : vector<32x64xf32>
    %256 = arith.subf %254, %255 : vector<32x64xf32>
    %257 = arith.subf %256, %251 : vector<32x64xf32>
    %cst_57 = arith.constant 0.000000e+00 : f32
    %258 = vector.broadcast %cst_57 : f32 to vector<32x64xf32>
    %259 = arith.cmpf ogt, %257, %258 : vector<32x64xf32>
    %260 = arith.extui %259 : vector<32x64xi1> to vector<32x64xi32>
    %261 = arith.sitofp %260 : vector<32x64xi32> to vector<32x64xf32>
    %cst_58 = arith.constant dense<0.000000e+00> : vector<32x128xf32>
    %262 = tpu.matmul %261, %11, %cst_58 {dimension_numbers = #tpu.dot_dimension_numbers<[1], [0], [0], [1], [0, 0, 1, 1], [], []>} : vector<32x64xf32>, vector<64x128xf32>, vector<32x128xf32> -> vector<32x128xf32>
    %263 = vector.broadcast %5 : vector<1x128xf32> to vector<32x128xf32>
    %264 = arith.addf %262, %263 : vector<32x128xf32>
    %265 = vector.broadcast %6 : vector<1x128xf32> to vector<32x128xf32>
    %266 = arith.mulf %232, %265 : vector<32x128xf32>
    %267 = vector.broadcast %7 : vector<1x128xf32> to vector<32x128xf32>
    %268 = arith.mulf %267, %264 : vector<32x128xf32>
    %269 = arith.addf %266, %268 : vector<32x128xf32>
    %cst_59 = arith.constant dense<0xFF800000> : vector<32xf32>
    %270 = vector.multi_reduction <maximumf>, %269, %cst_59 [1] : vector<32x128xf32> to vector<32xf32>
    %271 = vector.shape_cast %270 : vector<32xf32> to vector<32x1xf32>
    %272 = vector.broadcast %271 : vector<32x1xf32> to vector<32x128xf32>
    %273 = arith.subf %269, %272 : vector<32x128xf32>
    %274 = math.exp %273 : vector<32x128xf32>
    %cst_60 = arith.constant dense<0.000000e+00> : vector<32xf32>
    %275 = vector.multi_reduction <add>, %274, %cst_60 [1] : vector<32x128xf32> to vector<32xf32>
    %276 = vector.shape_cast %275 : vector<32xf32> to vector<32x1xf32>
    %277 = vector.broadcast %276 : vector<32x1xf32> to vector<32x128xf32>
    %278 = arith.divf %274, %277 : vector<32x128xf32>
    %279 = arith.addf %242, %278 : vector<32x128xf32>
    %c7_i32 = arith.constant 7 : i32
    %280 = vector.broadcast %2 : vector<1x64xf32> to vector<32x64xf32>
    %281 = arith.mulf %280, %247 : vector<32x64xf32>
    %282 = vector.broadcast %3 : vector<1x64xf32> to vector<32x64xf32>
    %283 = arith.mulf %282, %261 : vector<32x64xf32>
    %284 = arith.addf %281, %283 : vector<32x64xf32>
    %cst_61 = arith.constant 1.800000e+00 : f32
    %285 = vector.broadcast %cst_61 : f32 to vector<32x64xf32>
    %286 = arith.mulf %285, %284 : vector<32x64xf32>
    %cst_62 = arith.constant 0.00999999977 : f32
    %287 = vector.broadcast %cst_62 : f32 to vector<32x64xf32>
    %288 = arith.addf %287, %286 : vector<32x64xf32>
    %289 = vector.broadcast %1 : vector<1x64xf32> to vector<32x64xf32>
    %290 = arith.mulf %256, %289 : vector<32x64xf32>
    %291 = arith.addf %290, %17 : vector<32x64xf32>
    %292 = arith.mulf %288, %261 : vector<32x64xf32>
    %293 = arith.subf %291, %292 : vector<32x64xf32>
    %294 = arith.subf %293, %288 : vector<32x64xf32>
    %cst_63 = arith.constant 0.000000e+00 : f32
    %295 = vector.broadcast %cst_63 : f32 to vector<32x64xf32>
    %296 = arith.cmpf ogt, %294, %295 : vector<32x64xf32>
    %297 = arith.extui %296 : vector<32x64xi1> to vector<32x64xi32>
    %298 = arith.sitofp %297 : vector<32x64xi32> to vector<32x64xf32>
    %cst_64 = arith.constant dense<0.000000e+00> : vector<32x128xf32>
    %299 = tpu.matmul %298, %11, %cst_64 {dimension_numbers = #tpu.dot_dimension_numbers<[1], [0], [0], [1], [0, 0, 1, 1], [], []>} : vector<32x64xf32>, vector<64x128xf32>, vector<32x128xf32> -> vector<32x128xf32>
    %300 = vector.broadcast %5 : vector<1x128xf32> to vector<32x128xf32>
    %301 = arith.addf %299, %300 : vector<32x128xf32>
    %302 = vector.broadcast %6 : vector<1x128xf32> to vector<32x128xf32>
    %303 = arith.mulf %269, %302 : vector<32x128xf32>
    %304 = vector.broadcast %7 : vector<1x128xf32> to vector<32x128xf32>
    %305 = arith.mulf %304, %301 : vector<32x128xf32>
    %306 = arith.addf %303, %305 : vector<32x128xf32>
    %cst_65 = arith.constant dense<0xFF800000> : vector<32xf32>
    %307 = vector.multi_reduction <maximumf>, %306, %cst_65 [1] : vector<32x128xf32> to vector<32xf32>
    %308 = vector.shape_cast %307 : vector<32xf32> to vector<32x1xf32>
    %309 = vector.broadcast %308 : vector<32x1xf32> to vector<32x128xf32>
    %310 = arith.subf %306, %309 : vector<32x128xf32>
    %311 = math.exp %310 : vector<32x128xf32>
    %cst_66 = arith.constant dense<0.000000e+00> : vector<32xf32>
    %312 = vector.multi_reduction <add>, %311, %cst_66 [1] : vector<32x128xf32> to vector<32xf32>
    %313 = vector.shape_cast %312 : vector<32xf32> to vector<32x1xf32>
    %314 = vector.broadcast %313 : vector<32x1xf32> to vector<32x128xf32>
    %315 = arith.divf %311, %314 : vector<32x128xf32>
    %316 = arith.addf %279, %315 : vector<32x128xf32>
    %c8_i32 = arith.constant 8 : i32
    %317 = vector.broadcast %2 : vector<1x64xf32> to vector<32x64xf32>
    %318 = arith.mulf %317, %284 : vector<32x64xf32>
    %319 = vector.broadcast %3 : vector<1x64xf32> to vector<32x64xf32>
    %320 = arith.mulf %319, %298 : vector<32x64xf32>
    %321 = arith.addf %318, %320 : vector<32x64xf32>
    %cst_67 = arith.constant 1.800000e+00 : f32
    %322 = vector.broadcast %cst_67 : f32 to vector<32x64xf32>
    %323 = arith.mulf %322, %321 : vector<32x64xf32>
    %cst_68 = arith.constant 0.00999999977 : f32
    %324 = vector.broadcast %cst_68 : f32 to vector<32x64xf32>
    %325 = arith.addf %324, %323 : vector<32x64xf32>
    %326 = vector.broadcast %1 : vector<1x64xf32> to vector<32x64xf32>
    %327 = arith.mulf %293, %326 : vector<32x64xf32>
    %328 = arith.addf %327, %17 : vector<32x64xf32>
    %329 = arith.mulf %325, %298 : vector<32x64xf32>
    %330 = arith.subf %328, %329 : vector<32x64xf32>
    %331 = arith.subf %330, %325 : vector<32x64xf32>
    %cst_69 = arith.constant 0.000000e+00 : f32
    %332 = vector.broadcast %cst_69 : f32 to vector<32x64xf32>
    %333 = arith.cmpf ogt, %331, %332 : vector<32x64xf32>
    %334 = arith.extui %333 : vector<32x64xi1> to vector<32x64xi32>
    %335 = arith.sitofp %334 : vector<32x64xi32> to vector<32x64xf32>
    %cst_70 = arith.constant dense<0.000000e+00> : vector<32x128xf32>
    %336 = tpu.matmul %335, %11, %cst_70 {dimension_numbers = #tpu.dot_dimension_numbers<[1], [0], [0], [1], [0, 0, 1, 1], [], []>} : vector<32x64xf32>, vector<64x128xf32>, vector<32x128xf32> -> vector<32x128xf32>
    %337 = vector.broadcast %5 : vector<1x128xf32> to vector<32x128xf32>
    %338 = arith.addf %336, %337 : vector<32x128xf32>
    %339 = vector.broadcast %6 : vector<1x128xf32> to vector<32x128xf32>
    %340 = arith.mulf %306, %339 : vector<32x128xf32>
    %341 = vector.broadcast %7 : vector<1x128xf32> to vector<32x128xf32>
    %342 = arith.mulf %341, %338 : vector<32x128xf32>
    %343 = arith.addf %340, %342 : vector<32x128xf32>
    %cst_71 = arith.constant dense<0xFF800000> : vector<32xf32>
    %344 = vector.multi_reduction <maximumf>, %343, %cst_71 [1] : vector<32x128xf32> to vector<32xf32>
    %345 = vector.shape_cast %344 : vector<32xf32> to vector<32x1xf32>
    %346 = vector.broadcast %345 : vector<32x1xf32> to vector<32x128xf32>
    %347 = arith.subf %343, %346 : vector<32x128xf32>
    %348 = math.exp %347 : vector<32x128xf32>
    %cst_72 = arith.constant dense<0.000000e+00> : vector<32xf32>
    %349 = vector.multi_reduction <add>, %348, %cst_72 [1] : vector<32x128xf32> to vector<32xf32>
    %350 = vector.shape_cast %349 : vector<32xf32> to vector<32x1xf32>
    %351 = vector.broadcast %350 : vector<32x1xf32> to vector<32x128xf32>
    %352 = arith.divf %348, %351 : vector<32x128xf32>
    %353 = arith.addf %316, %352 : vector<32x128xf32>
    %c9_i32 = arith.constant 9 : i32
    %354 = vector.broadcast %2 : vector<1x64xf32> to vector<32x64xf32>
    %355 = arith.mulf %354, %321 : vector<32x64xf32>
    %356 = vector.broadcast %3 : vector<1x64xf32> to vector<32x64xf32>
    %357 = arith.mulf %356, %335 : vector<32x64xf32>
    %358 = arith.addf %355, %357 : vector<32x64xf32>
    %cst_73 = arith.constant 1.800000e+00 : f32
    %359 = vector.broadcast %cst_73 : f32 to vector<32x64xf32>
    %360 = arith.mulf %359, %358 : vector<32x64xf32>
    %cst_74 = arith.constant 0.00999999977 : f32
    %361 = vector.broadcast %cst_74 : f32 to vector<32x64xf32>
    %362 = arith.addf %361, %360 : vector<32x64xf32>
    %363 = vector.broadcast %1 : vector<1x64xf32> to vector<32x64xf32>
    %364 = arith.mulf %330, %363 : vector<32x64xf32>
    %365 = arith.addf %364, %17 : vector<32x64xf32>
    %366 = arith.mulf %362, %335 : vector<32x64xf32>
    %367 = arith.subf %365, %366 : vector<32x64xf32>
    %368 = arith.subf %367, %362 : vector<32x64xf32>
    %cst_75 = arith.constant 0.000000e+00 : f32
    %369 = vector.broadcast %cst_75 : f32 to vector<32x64xf32>
    %370 = arith.cmpf ogt, %368, %369 : vector<32x64xf32>
    %371 = arith.extui %370 : vector<32x64xi1> to vector<32x64xi32>
    %372 = arith.sitofp %371 : vector<32x64xi32> to vector<32x64xf32>
    %cst_76 = arith.constant dense<0.000000e+00> : vector<32x128xf32>
    %373 = tpu.matmul %372, %11, %cst_76 {dimension_numbers = #tpu.dot_dimension_numbers<[1], [0], [0], [1], [0, 0, 1, 1], [], []>} : vector<32x64xf32>, vector<64x128xf32>, vector<32x128xf32> -> vector<32x128xf32>
    %374 = vector.broadcast %5 : vector<1x128xf32> to vector<32x128xf32>
    %375 = arith.addf %373, %374 : vector<32x128xf32>
    %376 = vector.broadcast %6 : vector<1x128xf32> to vector<32x128xf32>
    %377 = arith.mulf %343, %376 : vector<32x128xf32>
    %378 = vector.broadcast %7 : vector<1x128xf32> to vector<32x128xf32>
    %379 = arith.mulf %378, %375 : vector<32x128xf32>
    %380 = arith.addf %377, %379 : vector<32x128xf32>
    %cst_77 = arith.constant dense<0xFF800000> : vector<32xf32>
    %381 = vector.multi_reduction <maximumf>, %380, %cst_77 [1] : vector<32x128xf32> to vector<32xf32>
    %382 = vector.shape_cast %381 : vector<32xf32> to vector<32x1xf32>
    %383 = vector.broadcast %382 : vector<32x1xf32> to vector<32x128xf32>
    %384 = arith.subf %380, %383 : vector<32x128xf32>
    %385 = math.exp %384 : vector<32x128xf32>
    %cst_78 = arith.constant dense<0.000000e+00> : vector<32xf32>
    %386 = vector.multi_reduction <add>, %385, %cst_78 [1] : vector<32x128xf32> to vector<32xf32>
    %387 = vector.shape_cast %386 : vector<32xf32> to vector<32x1xf32>
    %388 = vector.broadcast %387 : vector<32x1xf32> to vector<32x128xf32>
    %389 = arith.divf %385, %388 : vector<32x128xf32>
    %390 = arith.addf %353, %389 : vector<32x128xf32>
    %c10_i32 = arith.constant 10 : i32
    %391 = vector.broadcast %2 : vector<1x64xf32> to vector<32x64xf32>
    %392 = arith.mulf %391, %358 : vector<32x64xf32>
    %393 = vector.broadcast %3 : vector<1x64xf32> to vector<32x64xf32>
    %394 = arith.mulf %393, %372 : vector<32x64xf32>
    %395 = arith.addf %392, %394 : vector<32x64xf32>
    %cst_79 = arith.constant 1.800000e+00 : f32
    %396 = vector.broadcast %cst_79 : f32 to vector<32x64xf32>
    %397 = arith.mulf %396, %395 : vector<32x64xf32>
    %cst_80 = arith.constant 0.00999999977 : f32
    %398 = vector.broadcast %cst_80 : f32 to vector<32x64xf32>
    %399 = arith.addf %398, %397 : vector<32x64xf32>
    %400 = vector.broadcast %1 : vector<1x64xf32> to vector<32x64xf32>
    %401 = arith.mulf %367, %400 : vector<32x64xf32>
    %402 = arith.addf %401, %17 : vector<32x64xf32>
    %403 = arith.mulf %399, %372 : vector<32x64xf32>
    %404 = arith.subf %402, %403 : vector<32x64xf32>
    %405 = arith.subf %404, %399 : vector<32x64xf32>
    %cst_81 = arith.constant 0.000000e+00 : f32
    %406 = vector.broadcast %cst_81 : f32 to vector<32x64xf32>
    %407 = arith.cmpf ogt, %405, %406 : vector<32x64xf32>
    %408 = arith.extui %407 : vector<32x64xi1> to vector<32x64xi32>
    %409 = arith.sitofp %408 : vector<32x64xi32> to vector<32x64xf32>
    %cst_82 = arith.constant dense<0.000000e+00> : vector<32x128xf32>
    %410 = tpu.matmul %409, %11, %cst_82 {dimension_numbers = #tpu.dot_dimension_numbers<[1], [0], [0], [1], [0, 0, 1, 1], [], []>} : vector<32x64xf32>, vector<64x128xf32>, vector<32x128xf32> -> vector<32x128xf32>
    %411 = vector.broadcast %5 : vector<1x128xf32> to vector<32x128xf32>
    %412 = arith.addf %410, %411 : vector<32x128xf32>
    %413 = vector.broadcast %6 : vector<1x128xf32> to vector<32x128xf32>
    %414 = arith.mulf %380, %413 : vector<32x128xf32>
    %415 = vector.broadcast %7 : vector<1x128xf32> to vector<32x128xf32>
    %416 = arith.mulf %415, %412 : vector<32x128xf32>
    %417 = arith.addf %414, %416 : vector<32x128xf32>
    %cst_83 = arith.constant dense<0xFF800000> : vector<32xf32>
    %418 = vector.multi_reduction <maximumf>, %417, %cst_83 [1] : vector<32x128xf32> to vector<32xf32>
    %419 = vector.shape_cast %418 : vector<32xf32> to vector<32x1xf32>
    %420 = vector.broadcast %419 : vector<32x1xf32> to vector<32x128xf32>
    %421 = arith.subf %417, %420 : vector<32x128xf32>
    %422 = math.exp %421 : vector<32x128xf32>
    %cst_84 = arith.constant dense<0.000000e+00> : vector<32xf32>
    %423 = vector.multi_reduction <add>, %422, %cst_84 [1] : vector<32x128xf32> to vector<32xf32>
    %424 = vector.shape_cast %423 : vector<32xf32> to vector<32x1xf32>
    %425 = vector.broadcast %424 : vector<32x1xf32> to vector<32x128xf32>
    %426 = arith.divf %422, %425 : vector<32x128xf32>
    %427 = arith.addf %390, %426 : vector<32x128xf32>
    %c11_i32 = arith.constant 11 : i32
    %428 = vector.broadcast %2 : vector<1x64xf32> to vector<32x64xf32>
    %429 = arith.mulf %428, %395 : vector<32x64xf32>
    %430 = vector.broadcast %3 : vector<1x64xf32> to vector<32x64xf32>
    %431 = arith.mulf %430, %409 : vector<32x64xf32>
    %432 = arith.addf %429, %431 : vector<32x64xf32>
    %cst_85 = arith.constant 1.800000e+00 : f32
    %433 = vector.broadcast %cst_85 : f32 to vector<32x64xf32>
    %434 = arith.mulf %433, %432 : vector<32x64xf32>
    %cst_86 = arith.constant 0.00999999977 : f32
    %435 = vector.broadcast %cst_86 : f32 to vector<32x64xf32>
    %436 = arith.addf %435, %434 : vector<32x64xf32>
    %437 = vector.broadcast %1 : vector<1x64xf32> to vector<32x64xf32>
    %438 = arith.mulf %404, %437 : vector<32x64xf32>
    %439 = arith.addf %438, %17 : vector<32x64xf32>
    %440 = arith.mulf %436, %409 : vector<32x64xf32>
    %441 = arith.subf %439, %440 : vector<32x64xf32>
    %442 = arith.subf %441, %436 : vector<32x64xf32>
    %cst_87 = arith.constant 0.000000e+00 : f32
    %443 = vector.broadcast %cst_87 : f32 to vector<32x64xf32>
    %444 = arith.cmpf ogt, %442, %443 : vector<32x64xf32>
    %445 = arith.extui %444 : vector<32x64xi1> to vector<32x64xi32>
    %446 = arith.sitofp %445 : vector<32x64xi32> to vector<32x64xf32>
    %cst_88 = arith.constant dense<0.000000e+00> : vector<32x128xf32>
    %447 = tpu.matmul %446, %11, %cst_88 {dimension_numbers = #tpu.dot_dimension_numbers<[1], [0], [0], [1], [0, 0, 1, 1], [], []>} : vector<32x64xf32>, vector<64x128xf32>, vector<32x128xf32> -> vector<32x128xf32>
    %448 = vector.broadcast %5 : vector<1x128xf32> to vector<32x128xf32>
    %449 = arith.addf %447, %448 : vector<32x128xf32>
    %450 = vector.broadcast %6 : vector<1x128xf32> to vector<32x128xf32>
    %451 = arith.mulf %417, %450 : vector<32x128xf32>
    %452 = vector.broadcast %7 : vector<1x128xf32> to vector<32x128xf32>
    %453 = arith.mulf %452, %449 : vector<32x128xf32>
    %454 = arith.addf %451, %453 : vector<32x128xf32>
    %cst_89 = arith.constant dense<0xFF800000> : vector<32xf32>
    %455 = vector.multi_reduction <maximumf>, %454, %cst_89 [1] : vector<32x128xf32> to vector<32xf32>
    %456 = vector.shape_cast %455 : vector<32xf32> to vector<32x1xf32>
    %457 = vector.broadcast %456 : vector<32x1xf32> to vector<32x128xf32>
    %458 = arith.subf %454, %457 : vector<32x128xf32>
    %459 = math.exp %458 : vector<32x128xf32>
    %cst_90 = arith.constant dense<0.000000e+00> : vector<32xf32>
    %460 = vector.multi_reduction <add>, %459, %cst_90 [1] : vector<32x128xf32> to vector<32xf32>
    %461 = vector.shape_cast %460 : vector<32xf32> to vector<32x1xf32>
    %462 = vector.broadcast %461 : vector<32x1xf32> to vector<32x128xf32>
    %463 = arith.divf %459, %462 : vector<32x128xf32>
    %464 = arith.addf %427, %463 : vector<32x128xf32>
    %c12_i32 = arith.constant 12 : i32
    %465 = vector.broadcast %2 : vector<1x64xf32> to vector<32x64xf32>
    %466 = arith.mulf %465, %432 : vector<32x64xf32>
    %467 = vector.broadcast %3 : vector<1x64xf32> to vector<32x64xf32>
    %468 = arith.mulf %467, %446 : vector<32x64xf32>
    %469 = arith.addf %466, %468 : vector<32x64xf32>
    %cst_91 = arith.constant 1.800000e+00 : f32
    %470 = vector.broadcast %cst_91 : f32 to vector<32x64xf32>
    %471 = arith.mulf %470, %469 : vector<32x64xf32>
    %cst_92 = arith.constant 0.00999999977 : f32
    %472 = vector.broadcast %cst_92 : f32 to vector<32x64xf32>
    %473 = arith.addf %472, %471 : vector<32x64xf32>
    %474 = vector.broadcast %1 : vector<1x64xf32> to vector<32x64xf32>
    %475 = arith.mulf %441, %474 : vector<32x64xf32>
    %476 = arith.addf %475, %17 : vector<32x64xf32>
    %477 = arith.mulf %473, %446 : vector<32x64xf32>
    %478 = arith.subf %476, %477 : vector<32x64xf32>
    %479 = arith.subf %478, %473 : vector<32x64xf32>
    %cst_93 = arith.constant 0.000000e+00 : f32
    %480 = vector.broadcast %cst_93 : f32 to vector<32x64xf32>
    %481 = arith.cmpf ogt, %479, %480 : vector<32x64xf32>
    %482 = arith.extui %481 : vector<32x64xi1> to vector<32x64xi32>
    %483 = arith.sitofp %482 : vector<32x64xi32> to vector<32x64xf32>
    %cst_94 = arith.constant dense<0.000000e+00> : vector<32x128xf32>
    %484 = tpu.matmul %483, %11, %cst_94 {dimension_numbers = #tpu.dot_dimension_numbers<[1], [0], [0], [1], [0, 0, 1, 1], [], []>} : vector<32x64xf32>, vector<64x128xf32>, vector<32x128xf32> -> vector<32x128xf32>
    %485 = vector.broadcast %5 : vector<1x128xf32> to vector<32x128xf32>
    %486 = arith.addf %484, %485 : vector<32x128xf32>
    %487 = vector.broadcast %6 : vector<1x128xf32> to vector<32x128xf32>
    %488 = arith.mulf %454, %487 : vector<32x128xf32>
    %489 = vector.broadcast %7 : vector<1x128xf32> to vector<32x128xf32>
    %490 = arith.mulf %489, %486 : vector<32x128xf32>
    %491 = arith.addf %488, %490 : vector<32x128xf32>
    %cst_95 = arith.constant dense<0xFF800000> : vector<32xf32>
    %492 = vector.multi_reduction <maximumf>, %491, %cst_95 [1] : vector<32x128xf32> to vector<32xf32>
    %493 = vector.shape_cast %492 : vector<32xf32> to vector<32x1xf32>
    %494 = vector.broadcast %493 : vector<32x1xf32> to vector<32x128xf32>
    %495 = arith.subf %491, %494 : vector<32x128xf32>
    %496 = math.exp %495 : vector<32x128xf32>
    %cst_96 = arith.constant dense<0.000000e+00> : vector<32xf32>
    %497 = vector.multi_reduction <add>, %496, %cst_96 [1] : vector<32x128xf32> to vector<32xf32>
    %498 = vector.shape_cast %497 : vector<32xf32> to vector<32x1xf32>
    %499 = vector.broadcast %498 : vector<32x1xf32> to vector<32x128xf32>
    %500 = arith.divf %496, %499 : vector<32x128xf32>
    %501 = arith.addf %464, %500 : vector<32x128xf32>
    %c13_i32 = arith.constant 13 : i32
    %502 = vector.broadcast %2 : vector<1x64xf32> to vector<32x64xf32>
    %503 = arith.mulf %502, %469 : vector<32x64xf32>
    %504 = vector.broadcast %3 : vector<1x64xf32> to vector<32x64xf32>
    %505 = arith.mulf %504, %483 : vector<32x64xf32>
    %506 = arith.addf %503, %505 : vector<32x64xf32>
    %cst_97 = arith.constant 1.800000e+00 : f32
    %507 = vector.broadcast %cst_97 : f32 to vector<32x64xf32>
    %508 = arith.mulf %507, %506 : vector<32x64xf32>
    %cst_98 = arith.constant 0.00999999977 : f32
    %509 = vector.broadcast %cst_98 : f32 to vector<32x64xf32>
    %510 = arith.addf %509, %508 : vector<32x64xf32>
    %511 = vector.broadcast %1 : vector<1x64xf32> to vector<32x64xf32>
    %512 = arith.mulf %478, %511 : vector<32x64xf32>
    %513 = arith.addf %512, %17 : vector<32x64xf32>
    %514 = arith.mulf %510, %483 : vector<32x64xf32>
    %515 = arith.subf %513, %514 : vector<32x64xf32>
    %516 = arith.subf %515, %510 : vector<32x64xf32>
    %cst_99 = arith.constant 0.000000e+00 : f32
    %517 = vector.broadcast %cst_99 : f32 to vector<32x64xf32>
    %518 = arith.cmpf ogt, %516, %517 : vector<32x64xf32>
    %519 = arith.extui %518 : vector<32x64xi1> to vector<32x64xi32>
    %520 = arith.sitofp %519 : vector<32x64xi32> to vector<32x64xf32>
    %cst_100 = arith.constant dense<0.000000e+00> : vector<32x128xf32>
    %521 = tpu.matmul %520, %11, %cst_100 {dimension_numbers = #tpu.dot_dimension_numbers<[1], [0], [0], [1], [0, 0, 1, 1], [], []>} : vector<32x64xf32>, vector<64x128xf32>, vector<32x128xf32> -> vector<32x128xf32>
    %522 = vector.broadcast %5 : vector<1x128xf32> to vector<32x128xf32>
    %523 = arith.addf %521, %522 : vector<32x128xf32>
    %524 = vector.broadcast %6 : vector<1x128xf32> to vector<32x128xf32>
    %525 = arith.mulf %491, %524 : vector<32x128xf32>
    %526 = vector.broadcast %7 : vector<1x128xf32> to vector<32x128xf32>
    %527 = arith.mulf %526, %523 : vector<32x128xf32>
    %528 = arith.addf %525, %527 : vector<32x128xf32>
    %cst_101 = arith.constant dense<0xFF800000> : vector<32xf32>
    %529 = vector.multi_reduction <maximumf>, %528, %cst_101 [1] : vector<32x128xf32> to vector<32xf32>
    %530 = vector.shape_cast %529 : vector<32xf32> to vector<32x1xf32>
    %531 = vector.broadcast %530 : vector<32x1xf32> to vector<32x128xf32>
    %532 = arith.subf %528, %531 : vector<32x128xf32>
    %533 = math.exp %532 : vector<32x128xf32>
    %cst_102 = arith.constant dense<0.000000e+00> : vector<32xf32>
    %534 = vector.multi_reduction <add>, %533, %cst_102 [1] : vector<32x128xf32> to vector<32xf32>
    %535 = vector.shape_cast %534 : vector<32xf32> to vector<32x1xf32>
    %536 = vector.broadcast %535 : vector<32x1xf32> to vector<32x128xf32>
    %537 = arith.divf %533, %536 : vector<32x128xf32>
    %538 = arith.addf %501, %537 : vector<32x128xf32>
    %c14_i32 = arith.constant 14 : i32
    %539 = vector.broadcast %2 : vector<1x64xf32> to vector<32x64xf32>
    %540 = arith.mulf %539, %506 : vector<32x64xf32>
    %541 = vector.broadcast %3 : vector<1x64xf32> to vector<32x64xf32>
    %542 = arith.mulf %541, %520 : vector<32x64xf32>
    %543 = arith.addf %540, %542 : vector<32x64xf32>
    %cst_103 = arith.constant 1.800000e+00 : f32
    %544 = vector.broadcast %cst_103 : f32 to vector<32x64xf32>
    %545 = arith.mulf %544, %543 : vector<32x64xf32>
    %cst_104 = arith.constant 0.00999999977 : f32
    %546 = vector.broadcast %cst_104 : f32 to vector<32x64xf32>
    %547 = arith.addf %546, %545 : vector<32x64xf32>
    %548 = vector.broadcast %1 : vector<1x64xf32> to vector<32x64xf32>
    %549 = arith.mulf %515, %548 : vector<32x64xf32>
    %550 = arith.addf %549, %17 : vector<32x64xf32>
    %551 = arith.mulf %547, %520 : vector<32x64xf32>
    %552 = arith.subf %550, %551 : vector<32x64xf32>
    %553 = arith.subf %552, %547 : vector<32x64xf32>
    %cst_105 = arith.constant 0.000000e+00 : f32
    %554 = vector.broadcast %cst_105 : f32 to vector<32x64xf32>
    %555 = arith.cmpf ogt, %553, %554 : vector<32x64xf32>
    %556 = arith.extui %555 : vector<32x64xi1> to vector<32x64xi32>
    %557 = arith.sitofp %556 : vector<32x64xi32> to vector<32x64xf32>
    %cst_106 = arith.constant dense<0.000000e+00> : vector<32x128xf32>
    %558 = tpu.matmul %557, %11, %cst_106 {dimension_numbers = #tpu.dot_dimension_numbers<[1], [0], [0], [1], [0, 0, 1, 1], [], []>} : vector<32x64xf32>, vector<64x128xf32>, vector<32x128xf32> -> vector<32x128xf32>
    %559 = vector.broadcast %5 : vector<1x128xf32> to vector<32x128xf32>
    %560 = arith.addf %558, %559 : vector<32x128xf32>
    %561 = vector.broadcast %6 : vector<1x128xf32> to vector<32x128xf32>
    %562 = arith.mulf %528, %561 : vector<32x128xf32>
    %563 = vector.broadcast %7 : vector<1x128xf32> to vector<32x128xf32>
    %564 = arith.mulf %563, %560 : vector<32x128xf32>
    %565 = arith.addf %562, %564 : vector<32x128xf32>
    %cst_107 = arith.constant dense<0xFF800000> : vector<32xf32>
    %566 = vector.multi_reduction <maximumf>, %565, %cst_107 [1] : vector<32x128xf32> to vector<32xf32>
    %567 = vector.shape_cast %566 : vector<32xf32> to vector<32x1xf32>
    %568 = vector.broadcast %567 : vector<32x1xf32> to vector<32x128xf32>
    %569 = arith.subf %565, %568 : vector<32x128xf32>
    %570 = math.exp %569 : vector<32x128xf32>
    %cst_108 = arith.constant dense<0.000000e+00> : vector<32xf32>
    %571 = vector.multi_reduction <add>, %570, %cst_108 [1] : vector<32x128xf32> to vector<32xf32>
    %572 = vector.shape_cast %571 : vector<32xf32> to vector<32x1xf32>
    %573 = vector.broadcast %572 : vector<32x1xf32> to vector<32x128xf32>
    %574 = arith.divf %570, %573 : vector<32x128xf32>
    %575 = arith.addf %538, %574 : vector<32x128xf32>
    %c15_i32 = arith.constant 15 : i32
    %576 = vector.broadcast %2 : vector<1x64xf32> to vector<32x64xf32>
    %577 = arith.mulf %576, %543 : vector<32x64xf32>
    %578 = vector.broadcast %3 : vector<1x64xf32> to vector<32x64xf32>
    %579 = arith.mulf %578, %557 : vector<32x64xf32>
    %580 = arith.addf %577, %579 : vector<32x64xf32>
    %cst_109 = arith.constant 1.800000e+00 : f32
    %581 = vector.broadcast %cst_109 : f32 to vector<32x64xf32>
    %582 = arith.mulf %581, %580 : vector<32x64xf32>
    %cst_110 = arith.constant 0.00999999977 : f32
    %583 = vector.broadcast %cst_110 : f32 to vector<32x64xf32>
    %584 = arith.addf %583, %582 : vector<32x64xf32>
    %585 = vector.broadcast %1 : vector<1x64xf32> to vector<32x64xf32>
    %586 = arith.mulf %552, %585 : vector<32x64xf32>
    %587 = arith.addf %586, %17 : vector<32x64xf32>
    %588 = arith.mulf %584, %557 : vector<32x64xf32>
    %589 = arith.subf %587, %588 : vector<32x64xf32>
    %590 = arith.subf %589, %584 : vector<32x64xf32>
    %cst_111 = arith.constant 0.000000e+00 : f32
    %591 = vector.broadcast %cst_111 : f32 to vector<32x64xf32>
    %592 = arith.cmpf ogt, %590, %591 : vector<32x64xf32>
    %593 = arith.extui %592 : vector<32x64xi1> to vector<32x64xi32>
    %594 = arith.sitofp %593 : vector<32x64xi32> to vector<32x64xf32>
    %cst_112 = arith.constant dense<0.000000e+00> : vector<32x128xf32>
    %595 = tpu.matmul %594, %11, %cst_112 {dimension_numbers = #tpu.dot_dimension_numbers<[1], [0], [0], [1], [0, 0, 1, 1], [], []>} : vector<32x64xf32>, vector<64x128xf32>, vector<32x128xf32> -> vector<32x128xf32>
    %596 = vector.broadcast %5 : vector<1x128xf32> to vector<32x128xf32>
    %597 = arith.addf %595, %596 : vector<32x128xf32>
    %598 = vector.broadcast %6 : vector<1x128xf32> to vector<32x128xf32>
    %599 = arith.mulf %565, %598 : vector<32x128xf32>
    %600 = vector.broadcast %7 : vector<1x128xf32> to vector<32x128xf32>
    %601 = arith.mulf %600, %597 : vector<32x128xf32>
    %602 = arith.addf %599, %601 : vector<32x128xf32>
    %cst_113 = arith.constant dense<0xFF800000> : vector<32xf32>
    %603 = vector.multi_reduction <maximumf>, %602, %cst_113 [1] : vector<32x128xf32> to vector<32xf32>
    %604 = vector.shape_cast %603 : vector<32xf32> to vector<32x1xf32>
    %605 = vector.broadcast %604 : vector<32x1xf32> to vector<32x128xf32>
    %606 = arith.subf %602, %605 : vector<32x128xf32>
    %607 = math.exp %606 : vector<32x128xf32>
    %cst_114 = arith.constant dense<0.000000e+00> : vector<32xf32>
    %608 = vector.multi_reduction <add>, %607, %cst_114 [1] : vector<32x128xf32> to vector<32xf32>
    %609 = vector.shape_cast %608 : vector<32xf32> to vector<32x1xf32>
    %610 = vector.broadcast %609 : vector<32x1xf32> to vector<32x128xf32>
    %611 = arith.divf %607, %610 : vector<32x128xf32>
    %612 = arith.addf %575, %611 : vector<32x128xf32>
    %c0_115 = arith.constant 0 : index
    %c0_116 = arith.constant 0 : index
    %613 = vector.load %arg5[%c0_115, %c0_116] : memref<32x128xf32, #tpu.memory_space<vmem>>, vector<32x128xf32>
    tpu.vector_store %arg5[%c0_115, %c0_116], %612 {strides = array<i32>} : memref<32x128xf32, #tpu.memory_space<vmem>>, vector<32x128xf32>,
    return
  }
  func.func @transform_0(%arg0: i32) -> (i32, i32) {
    %c0_i32 = arith.constant 0 : i32
    %c0_i32_0 = arith.constant 0 : i32
    %c0_i32_1 = arith.constant 0 : i32
    return %c0_i32, %c0_i32_0 : i32, i32
  }
  func.func @transform_1(%arg0: i32) -> (i32, i32) {
    %c0_i32 = arith.constant 0 : i32
    %c0_i32_0 = arith.constant 0 : i32
    %c0_i32_1 = arith.constant 0 : i32
    return %c0_i32, %c0_i32_0 : i32, i32
  }
  func.func @transform_2(%arg0: i32) -> (i32, i32) {
    %c0_i32 = arith.constant 0 : i32
    %c0_i32_0 = arith.constant 0 : i32
    %c0_i32_1 = arith.constant 0 : i32
    return %c0_i32, %c0_i32_0 : i32, i32
  }
  func.func @transform_3(%arg0: i32) -> (i32, i32) {
    %c0_i32 = arith.constant 0 : i32
    %c0_i32_0 = arith.constant 0 : i32
    return %arg0, %c0_i32 : i32, i32
  }
  func.func @transform_4(%arg0: i32) -> (i32, i32) {
    %c0_i32 = arith.constant 0 : i32
    %c0_i32_0 = arith.constant 0 : i32
    return %arg0, %c0_i32 : i32, i32
  }
}

</mosaic_0001>

<llo_original>
// kernel: nnpolicy_forward.1
$region0: #{nnpolicy_forward.1}
  #allocation0 [shape = 'u32[]', space=smem, size = 0x4, offset = 0x4, fixed_abs, tag = 'smem constant byte address 0x4 - core index']
  #allocation1 [shape = 'u32[72,128]{1,0:T(1,128)}', space=vmem, size = 0x9000, scoped, tag = 'internal scratch']
  %s0 = inlined_call_operand.vmem [shape: f32[8,64], index: 0, kind: input, shape index: {}]
  %s1 = inlined_call_operand.vmem [shape: f32[64,128], index: 1, kind: input, shape index: {}]
  %s2 = inlined_call_operand.vmem [shape: f32[8,128], index: 2, kind: input, shape index: {}]
  %s3 = inlined_call_operand.vmem [shape: f32[32,256], index: 3, kind: input, shape index: {}]
  %s4 = inlined_call_operand.vmem [shape: f32[32,128], index: 4, kind: output, shape index: {}]
  %s5 = sld [smem:[#allocation0]]
  $region26: #{nnpolicy_forward.1} parent=0
    _
  %s7 = ssub.s32 1, %s5
  %s8 = scalar_select 0, %s7, %s5
  // Predicated region
  $region2: #{nnpolicy_forward.1} parent=0 // pred_check
    _
  $region3: #{nnpolicy_forward.1} parent=0 // pred_check_branch
    %10 = sbr.rel (0) target = $region5
  $region4: #{nnpolicy_forward.1} parent=0 // pred_region
    _
  $region5: #{nnpolicy_forward.1} parent=0 // pred_fallthru
    _
  // Predicated region
  $region6: #{nnpolicy_forward.1} parent=0 // pred_check
    _
  $region7: #{nnpolicy_forward.1} parent=0 // pred_check_branch
    %12 = sbr.rel (0) target = $region9
  $region8: #{nnpolicy_forward.1} parent=0 // pred_region
    _
  $region9: #{nnpolicy_forward.1} parent=0 // pred_fallthru
    _
  // Predicated region
  $region10: #{nnpolicy_forward.1} parent=0 // pred_check
    _
  $region11: #{nnpolicy_forward.1} parent=0 // pred_check_branch
    %14 = sbr.rel (0) target = $region13
  $region12: #{nnpolicy_forward.1} parent=0 // pred_region
    _
  $region13: #{nnpolicy_forward.1} parent=0 // pred_fallthru
    _
  // Predicated region
  $region14: #{nnpolicy_forward.1} parent=0 // pred_check
    _
  $region15: #{nnpolicy_forward.1} parent=0 // pred_check_branch
    %16 = sbr.rel (0) target = $region17
  $region16: #{nnpolicy_forward.1} parent=0 // pred_region
    _
  $region17: #{nnpolicy_forward.1} parent=0 // pred_fallthru
    _
  %v17 = vld [vmem:[%s2] sm:$0x1]
  %v18 = vld [vmem:[%s2 + $0x1] sm:$0x1]
  %v19 = vld [vmem:[%s2 + $0x2] sm:$0x1]
  %v20 = vld [vmem:[%s2 + $0x3] sm:$0x1]
  %v21 = vld [vmem:[%s2 + $0x4] sm:$0x1]
  %v22 = vld [vmem:[%s2 + $0x5] sm:$0x1]
  %v23 = vld [vmem:[%s2 + $0x6] sm:$0x1]
  %v24 = vld [vmem:[%s2 + $0x7] sm:$0x1]
  %v25 = vld [vmem:[%s3] sm:$0xff]
  %v26 = vld [vmem:[%s3 + $0x10] sm:$0xff]
  %v27 = vld [vmem:[%s3 + $0x20] sm:$0xff]
  %v28 = vld [vmem:[%s3 + $0x30] sm:$0xff]
  %v29 = vld [vmem:[%s3 + $0x8] sm:$0xff]
  %v30 = vld [vmem:[%s3 + $0x18] sm:$0xff]
  %v31 = vld [vmem:[%s3 + $0x28] sm:$0xff]
  %v32 = vld [vmem:[%s3 + $0x38] sm:$0xff]
  %v33 = vld [vmem:[%s1] sm:$0xff]
  %v34 = vld [vmem:[%s1 + $0x8] sm:$0xff]
  %v35 = vld [vmem:[%s1 + $0x10] sm:$0xff]
  %v36 = vld [vmem:[%s1 + $0x18] sm:$0xff]
  %v37 = vld [vmem:[%s1 + $0x20] sm:$0xff]
  %v38 = vld [vmem:[%s1 + $0x28] sm:$0xff]
  %v39 = vld [vmem:[%s1 + $0x30] sm:$0xff]
  %v40 = vld [vmem:[%s1 + $0x38] sm:$0xff]
  %v41 = vld [vmem:[%s0] sm:$0xff]
  %v42 = vperm.slane %v17, 0
  %47 = vrot.lane.b32.xlu0 %v25, 64
  %v48 = vpop.permute.xlu0 %47
  %49 = vrot.lane.b32.xlu0 %v26, 64
  %v50 = vpop.permute.xlu0 %49
  %51 = vrot.lane.b32.xlu0 %v27, 64
  %v52 = vpop.permute.xlu0 %51
  %53 = vrot.lane.b32.xlu0 %v28, 64
  %v54 = vpop.permute.xlu0 %53
  %vm55 = vcmask 64512
  %v56 = vsel %vm55, %v48, 0
  %v58 = vsel %vm55, %v50, 0
  %v60 = vsel %vm55, %v52, 0
  %v62 = vsel %vm55, %v54, 0
  %64 = vmatpush.msra.mxu0 0.0
  %65 = vmatpush.msra.mxu0 0.0
  %66 = vmatpush.msra.mxu0 0.0
  %67 = vmatpush.msra.mxu0 0.0
  %68 = vmatpush.msra.mxu0 0.0
  %69 = vmatpush.msra.mxu0 0.0
  %70 = vmatpush.msra.mxu0 0.0
  %71 = vmatpush.msra.mxu0 0.0
  %72 = vmatpush.msra.mxu0 0.0
  %73 = vmatpush.msra.mxu0 0.0
  %74 = vmatpush.msra.mxu0 0.0
  %75 = vmatpush.msra.mxu0 0.0
  %76 = vmatpush.msra.mxu0 0.0
  %77 = vmatpush.msra.mxu0 0.0
  %78 = vmatpush.msra.mxu0 0.0
  %79 = vmatpush.msra.mxu0 %v41
  %80 = vmatmul.f32.gmra.mxu0 %v56
  %v81 = vpop.f32.mrf.mxu0
  %v82 = vadd.f32 %v42, %v81
  %83 = vmatmul.f32.gmra.mxu0 %v58
  %v84 = vpop.f32.mrf.mxu0
  %v85 = vadd.f32 %v42, %v84
  %86 = vmatmul.f32.gmra.mxu0 %v60
  %v87 = vpop.f32.mrf.mxu0
  %v88 = vadd.f32 %v42, %v87
  %89 = vmatmul.f32.gmra.mxu0 %v62
  %v90 = vpop.f32.mrf.mxu0
  %v91 = vadd.f32 %v42, %v90
  %92 = vdwg.mxu0
  %v93 = vperm.slane %v21, 0
  %v94 = vmul.f32 %v93, %v82
  %v95 = vmul.f32 %v93, %v85
  %v96 = vmul.f32 %v93, %v88
  %v97 = vmul.f32 %v93, %v91
  %v98 = vperm.slane %v19, 0
  %v99 = vmul.f32 %v98, 0.01
  %v100 = vperm.slane %v20, 0
  %v101 = vmul.f32 %v100, 0.0
  %v102 = vadd.f32 %v99, %v101
  %v103 = vmul.f32 %v102, 1.8
  %v104 = vadd.f32 %v103, 0.01
  %v105 = vperm.slane %v18, 0
  %v106 = vmul.f32 %v25, %v105
  %v107 = vmul.f32 %v26, %v105
  %v108 = vmul.f32 %v27, %v105
  %v109 = vmul.f32 %v28, %v105
  %v110 = vadd.f32 %v106, %v94
  %v111 = vadd.f32 %v107, %v95
  %v112 = vadd.f32 %v108, %v96
  %v113 = vadd.f32 %v109, %v97
  %v114 = vmul.f32 %v104, 0.0
  %v115 = vsub.f32 %v110, %v114
  %v116 = vsub.f32 %v111, %v114
  %v117 = vsub.f32 %v112, %v114
  %v118 = vsub.f32 %v113, %v114
  %v119 = vsub.f32 %v115, %v104
  %v120 = vsub.f32 %v116, %v104
  %v121 = vsub.f32 %v117, %v104
  %v122 = vsub.f32 %v118, %v104
  %vm123 = vcmp.gt.f32.partialorder %v119, 0.0
  %vm124 = vcmp.gt.f32.partialorder %v120, 0.0
  %vm125 = vcmp.gt.f32.partialorder %v121, 0.0
  %vm126 = vcmp.gt.f32.partialorder %v122, 0.0
  %v127 = vsel %vm123, 1, 0
  %v128 = vsel %vm124, 1, 0
  %v129 = vsel %vm125, 1, 0
  %v130 = vsel %vm126, 1, 0
  %v131 = vcvt.s32.f32 %v127
  %v132 = vcvt.s32.f32 %v128
  %v133 = vcvt.s32.f32 %v129
  %v134 = vcvt.s32.f32 %v130
  %v135 = vperm.slane %v22, 0
  %vm136 = vcmask 523264
  %v138 = vsel %vm136, %v131, 0
  %v141 = vsel %vm136, %v132, 0
  %v144 = vsel %vm136, %v133, 0
  %v147 = vsel %vm136, %v134, 0
  %149 = vmatpush.msra.mxu0 0.0
  %150 = vmatpush.msra.mxu0 0.0
  %151 = vmatpush.msra.mxu0 0.0
  %152 = vmatpush.msra.mxu0 0.0
  %153 = vmatpush.msra.mxu0 0.0
  %154 = vmatpush.msra.mxu0 0.0
  %155 = vmatpush.msra.mxu0 0.0
  %156 = vmatpush.msra.mxu0 0.0
  %157 = vmatpush.msra.mxu0 %v40
  %158 = vmatpush.msra.mxu0 %v39
  %159 = vmatpush.msra.mxu0 %v38
  %160 = vmatpush.msra.mxu0 %v37
  %161 = vmatpush.msra.mxu0 %v36
  %162 = vmatpush.msra.mxu0 %v35
  %163 = vmatpush.msra.mxu0 %v34
  %164 = vmatpush.msra.mxu0 %v33
  %165 = vmatmul.f32.gmra.mxu0 %v138
  %v166 = vpop.f32.mrf.mxu0
  %v167 = vadd.f32 %v135, %v166
  %168 = vmatmul.f32.gmra.mxu0 %v141
  %v169 = vpop.f32.mrf.mxu0
  %v170 = vadd.f32 %v135, %v169
  %171 = vmatmul.f32.gmra.mxu0 %v144
  %v172 = vpop.f32.mrf.mxu0
  %v173 = vadd.f32 %v135, %v172
  %174 = vmatmul.f32.gmra.mxu0 %v147
  %v175 = vpop.f32.mrf.mxu0
  %v176 = vadd.f32 %v135, %v175
  %177 = vdwg.mxu0
  %v178 = vperm.slane %v23, 0
  %v179 = vmul.f32 %v29, %v178
  %v180 = vmul.f32 %v30, %v178
  %v181 = vmul.f32 %v31, %v178
  %v182 = vmul.f32 %v32, %v178
  %v183 = vperm.slane %v24, 0
  %v184 = vmul.f32 %v183, %v167
  %v185 = vmul.f32 %v183, %v170
  %v186 = vmul.f32 %v183, %v173
  %v187 = vmul.f32 %v183, %v176
  %v188 = vadd.f32 %v179, %v184
  %v189 = vadd.f32 %v180, %v185
  %v190 = vadd.f32 %v181, %v186
  %v191 = vadd.f32 %v182, %v187
  %192 = vmax.xlane.f32.xlu0 %v188
  %v193 = vpop.xlane.xlu0 %192
  %194 = vmax.xlane.f32.xlu0 %v189
  %v195 = vpop.xlane.xlu0 %194
  %196 = vmax.xlane.f32.xlu0 %v190
  %v197 = vpop.xlane.xlu0 %196
  %198 = vmax.xlane.f32.xlu0 %v191
  %v199 = vpop.xlane.xlu0 %198
  %v200 = vsub.f32 %v188, %v193
  %v201 = vsub.f32 %v189, %v195
  %v202 = vsub.f32 %v190, %v197
  %v203 = vsub.f32 %v191, %v199
  %v204 = vmul.f32 %v200, 1.442695
  %v205 = vpow.pop %v204
  %v206 = vmul.f32 %v201, 1.442695
  %v207 = vpow.pop %v206
  %v208 = vmul.f32 %v202, 1.442695
  %v209 = vpow.pop %v208
  %v210 = vmul.f32 %v203, 1.442695
  %v211 = vpow.pop %v210
  %212 = vadd.xlane.f32.xlu0 %v205
  %v213 = vpop.xlane.xlu0 %212
  %214 = vadd.xlane.f32.xlu0 %v207
  %v215 = vpop.xlane.xlu0 %214
  %216 = vadd.xlane.f32.xlu0 %v209
  %v217 = vpop.xlane.xlu0 %216
  %218 = vadd.xlane.f32.xlu0 %v211
  %v219 = vpop.xlane.xlu0 %218
  %v220 = vrcp.pop %v213
  %v221 = vmul.f32 %v213, %v220
  %v222 = vsub.f32 1.0, %v221
  %v223 = vmul.f32 %v220, %v222
  %v224 = vadd.f32 %v220, %v223
  %vm225 = vweird.f32 %v213
  %vm226 = vweird.f32 %v220
  %vm227 = vmor %vm225, %vm226
  %v228 = vsel %vm227, %v220, %v224
  %v229 = vand.u32 2147483647, %v213
  %vm230 = vcmp.eq.f32.partialorder %v229, 8.507059e+37
  %v231 = vand.u32 %v213, 2147483648
  %v232 = vor.u32 1.1754944e-38, %v231
  %v233 = vsel %vm230, %v232, %v228
  %v234 = vmul.f32 %v205, %v233
  %v235 = vrcp.pop %v215
  %v236 = vmul.f32 %v215, %v235
  %v237 = vsub.f32 1.0, %v236
  %v238 = vmul.f32 %v235, %v237
  %v239 = vadd.f32 %v235, %v238
  %vm240 = vweird.f32 %v215
  %vm241 = vweird.f32 %v235
  %vm242 = vmor %vm240, %vm241
  %v243 = vsel %vm242, %v235, %v239
  %v244 = vand.u32 2147483647, %v215
  %vm245 = vcmp.eq.f32.partialorder %v244, 8.507059e+37
  %v246 = vand.u32 %v215, 2147483648
  %v247 = vor.u32 1.1754944e-38, %v246
  %v248 = vsel %vm245, %v247, %v243
  %v249 = vmul.f32 %v207, %v248
  %v250 = vrcp.pop %v217
  %v251 = vmul.f32 %v217, %v250
  %v252 = vsub.f32 1.0, %v251
  %v253 = vmul.f32 %v250, %v252
  %v254 = vadd.f32 %v250, %v253
  %vm255 = vweird.f32 %v217
  %vm256 = vweird.f32 %v250
  %vm257 = vmor %vm255, %vm256
  %v258 = vsel %vm257, %v250, %v254
  %v259 = vand.u32 2147483647, %v217
  %vm260 = vcmp.eq.f32.partialorder %v259, 8.507059e+37
  %v261 = vand.u32 %v217, 2147483648
  %v262 = vor.u32 1.1754944e-38, %v261
  %v263 = vsel %vm260, %v262, %v258
  %v264 = vmul.f32 %v209, %v263
  %v265 = vrcp.pop %v219
  %v266 = vmul.f32 %v219, %v265
  %v267 = vsub.f32 1.0, %v266
  %v268 = vmul.f32 %v265, %v267
  %v269 = vadd.f32 %v265, %v268
  %vm270 = vweird.f32 %v219
  %vm271 = vweird.f32 %v265
  %vm272 = vmor %vm270, %vm271
  %v273 = vsel %vm272, %v265, %v269
  %v274 = vand.u32 2147483647, %v219
  %vm275 = vcmp.eq.f32.partialorder %v274, 8.507059e+37
  %v276 = vand.u32 %v219, 2147483648
  %v277 = vor.u32 1.1754944e-38, %v276
  %v278 = vsel %vm275, %v277, %v273
  %v279 = vmul.f32 %v211, %v278
  %v280 = vadd.f32 %v234, 0.0
  %v281 = vadd.f32 %v249, 0.0
  %v282 = vadd.f32 %v264, 0.0
  %v283 = vadd.f32 %v279, 0.0
  %v284 = vmul.f32 %v98, %v102
  %v285 = vmul.f32 %v100, %v131
  %v286 = vmul.f32 %v100, %v132
  %v287 = vmul.f32 %v100, %v133
  %v288 = vmul.f32 %v100, %v134
  %v289 = vadd.f32 %v284, %v285
  %v290 = vadd.f32 %v284, %v286
  %v291 = vadd.f32 %v284, %v287
  %v292 = vadd.f32 %v284, %v288
  %v293 = vmul.f32 %v289, 1.8
  %v294 = vmul.f32 %v290, 1.8
  %v295 = vmul.f32 %v291, 1.8
  %v296 = vmul.f32 %v292, 1.8
  %v297 = vadd.f32 %v293, 0.01
  %v298 = vadd.f32 %v294, 0.01
  %v299 = vadd.f32 %v295, 0.01
  %v300 = vadd.f32 %v296, 0.01
  %v301 = vmul.f32 %v115, %v105
  %v302 = vmul.f32 %v116, %v105
  %v303 = vmul.f32 %v117, %v105
  %v304 = vmul.f32 %v118, %v105
  %v305 = vadd.f32 %v301, %v94
  %v306 = vadd.f32 %v302, %v95
  %v307 = vadd.f32 %v303, %v96
  %v308 = vadd.f32 %v304, %v97
  %v309 = vmul.f32 %v297, %v131
  %v310 = vmul.f32 %v298, %v132
  %v311 = vmul.f32 %v299, %v133
  %v312 = vmul.f32 %v300, %v134
  %v313 = vsub.f32 %v305, %v309
  %v314 = vsub.f32 %v306, %v310
  %v315 = vsub.f32 %v307, %v311
  %v316 = vsub.f32 %v308, %v312
  %v317 = vsub.f32 %v313, %v297
  %v318 = vsub.f32 %v314, %v298
  %v319 = vsub.f32 %v315, %v299
  %v320 = vsub.f32 %v316, %v300
  %vm321 = vcmp.gt.f32.partialorder %v317, 0.0
  %vm322 = vcmp.gt.f32.partialorder %v318, 0.0
  %vm323 = vcmp.gt.f32.partialorder %v319, 0.0
  %vm324 = vcmp.gt.f32.partialorder %v320, 0.0
  %v325 = vsel %vm321, 1, 0
  %v326 = vsel %vm322, 1, 0
  %v327 = vsel %vm323, 1, 0
  %v328 = vsel %vm324, 1, 0
  %v329 = vcvt.s32.f32 %v325
  %v330 = vcvt.s32.f32 %v326
  %v331 = vcvt.s32.f32 %v327
  %v332 = vcvt.s32.f32 %v328
  %v334 = vsel %vm136, %v329, 0
  %v337 = vsel %vm136, %v330, 0
  %v340 = vsel %vm136, %v331, 0
  %v343 = vsel %vm136, %v332, 0
  %345 = vmatpush.msra.mxu0 0.0
  %346 = vmatpush.msra.mxu0 0.0
  %347 = vmatpush.msra.mxu0 0.0
  %348 = vmatpush.msra.mxu0 0.0
  %349 = vmatpush.msra.mxu0 0.0
  %350 = vmatpush.msra.mxu0 0.0
  %351 = vmatpush.msra.mxu0 0.0
  %352 = vmatpush.msra.mxu0 0.0
  %353 = vmatpush.msra.mxu0 %v40
  %354 = vmatpush.msra.mxu0 %v39
  %355 = vmatpush.msra.mxu0 %v38
  %356 = vmatpush.msra.mxu0 %v37
  %357 = vmatpush.msra.mxu0 %v36
  %358 = vmatpush.msra.mxu0 %v35
  %359 = vmatpush.msra.mxu0 %v34
  %360 = vmatpush.msra.mxu0 %v33
  %361 = vmatmul.f32.gmra.mxu0 %v334
  %v362 = vpop.f32.mrf.mxu0
  %v363 = vadd.f32 %v135, %v362
  %364 = vmatmul.f32.gmra.mxu0 %v337
  %v365 = vpop.f32.mrf.mxu0
  %v366 = vadd.f32 %v135, %v365
  %367 = vmatmul.f32.gmra.mxu0 %v340
  %v368 = vpop.f32.mrf.mxu0
  %v369 = vadd.f32 %v135, %v368
  %370 = vmatmul.f32.gmra.mxu0 %v343
  %v371 = vpop.f32.mrf.mxu0
  %v372 = vadd.f32 %v135, %v371
  %373 = vdwg.mxu0
  %v374 = vmul.f32 %v188, %v178
  %v375 = vmul.f32 %v189, %v178
  %v376 = vmul.f32 %v190, %v178
  %v377 = vmul.f32 %v191, %v178
  %v378 = vmul.f32 %v183, %v363
  %v379 = vmul.f32 %v183, %v366
  %v380 = vmul.f32 %v183, %v369
  %v381 = vmul.f32 %v183, %v372
  %v382 = vadd.f32 %v374, %v378
  %v383 = vadd.f32 %v375, %v379
  %v384 = vadd.f32 %v376, %v380
  %v385 = vadd.f32 %v377, %v381
  %386 = vmax.xlane.f32.xlu0 %v382
  %v387 = vpop.xlane.xlu0 %386
  %388 = vmax.xlane.f32.xlu0 %v383
  %v389 = vpop.xlane.xlu0 %388
  %390 = vmax.xlane.f32.xlu0 %v384
  %v391 = vpop.xlane.xlu0 %390
  %392 = vmax.xlane.f32.xlu0 %v385
  %v393 = vpop.xlane.xlu0 %392
  %v394 = vsub.f32 %v382, %v387
  %v395 = vsub.f32 %v383, %v389
  %v396 = vsub.f32 %v384, %v391
  %v397 = vsub.f32 %v385, %v393
  %v398 = vmul.f32 %v394, 1.442695
  %v399 = vpow.pop %v398
  %v400 = vmul.f32 %v395, 1.442695
  %v401 = vpow.pop %v400
  %v402 = vmul.f32 %v396, 1.442695
  %v403 = vpow.pop %v402
  %v404 = vmul.f32 %v397, 1.442695
  %v405 = vpow.pop %v404
  %406 = vadd.xlane.f32.xlu0 %v399
  %v407 = vpop.xlane.xlu0 %406
  %408 = vadd.xlane.f32.xlu0 %v401
  %v409 = vpop.xlane.xlu0 %408
  %410 = vadd.xlane.f32.xlu0 %v403
  %v411 = vpop.xlane.xlu0 %410
  %412 = vadd.xlane.f32.xlu0 %v405
  %v413 = vpop.xlane.xlu0 %412
  %v414 = vrcp.pop %v407
  %v415 = vmul.f32 %v407, %v414
  %v416 = vsub.f32 1.0, %v415
  %v417 = vmul.f32 %v414, %v416
  %v418 = vadd.f32 %v414, %v417
  %vm419 = vweird.f32 %v407
  %vm420 = vweird.f32 %v414
  %vm421 = vmor %vm419, %vm420
  %v422 = vsel %vm421, %v414, %v418
  %v423 = vand.u32 2147483647, %v407
  %vm424 = vcmp.eq.f32.partialorder %v423, 8.507059e+37
  %v425 = vand.u32 %v407, 2147483648
  %v426 = vor.u32 1.1754944e-38, %v425
  %v427 = vsel %vm424, %v426, %v422
  %v428 = vmul.f32 %v399, %v427
  %v429 = vrcp.pop %v409
  %v430 = vmul.f32 %v409, %v429
  %v431 = vsub.f32 1.0, %v430
  %v432 = vmul.f32 %v429, %v431
  %v433 = vadd.f32 %v429, %v432
  %vm434 = vweird.f32 %v409
  %vm435 = vweird.f32 %v429
  %vm436 = vmor %vm434, %vm435
  %v437 = vsel %vm436, %v429, %v433
  %v438 = vand.u32 2147483647, %v409
  %vm439 = vcmp.eq.f32.partialorder %v438, 8.507059e+37
  %v440 = vand.u32 %v409, 2147483648
  %v441 = vor.u32 1.1754944e-38, %v440
  %v442 = vsel %vm439, %v441, %v437
  %v443 = vmul.f32 %v401, %v442
  %v444 = vrcp.pop %v411
  %v445 = vmul.f32 %v411, %v444
  %v446 = vsub.f32 1.0, %v445
  %v447 = vmul.f32 %v444, %v446
  %v448 = vadd.f32 %v444, %v447
  %vm449 = vweird.f32 %v411
  %vm450 = vweird.f32 %v444
  %vm451 = vmor %vm449, %vm450
  %v452 = vsel %vm451, %v444, %v448
  %v453 = vand.u32 2147483647, %v411
  %vm454 = vcmp.eq.f32.partialorder %v453, 8.507059e+37
  %v455 = vand.u32 %v411, 2147483648
  %v456 = vor.u32 1.1754944e-38, %v455
  %v457 = vsel %vm454, %v456, %v452
  %v458 = vmul.f32 %v403, %v457
  %v459 = vrcp.pop %v413
  %v460 = vmul.f32 %v413, %v459
  %v461 = vsub.f32 1.0, %v460
  %v462 = vmul.f32 %v459, %v461
  %v463 = vadd.f32 %v459, %v462
  %vm464 = vweird.f32 %v413
  %vm465 = vweird.f32 %v459
  %vm466 = vmor %vm464, %vm465
  %v467 = vsel %vm466, %v459, %v463
  %v468 = vand.u32 2147483647, %v413
  %vm469 = vcmp.eq.f32.partialorder %v468, 8.507059e+37
  %v470 = vand.u32 %v413, 2147483648
  %v471 = vor.u32 1.1754944e-38, %v470
  %v472 = vsel %vm469, %v471, %v467
  %v473 = vmul.f32 %v405, %v472
  %v474 = vadd.f32 %v280, %v428
  %v475 = vadd.f32 %v281, %v443
  %v476 = vadd.f32 %v282, %v458
  %v477 = vadd.f32 %v283, %v473
  %v478 = vmul.f32 %v98, %v289
  %v479 = vmul.f32 %v98, %v290
  %v480 = vmul.f32 %v98, %v291
  %v481 = vmul.f32 %v98, %v292
  %v482 = vmul.f32 %v100, %v329
  %v483 = vmul.f32 %v100, %v330
  %v484 = vmul.f32 %v100, %v331
  %v485 = vmul.f32 %v100, %v332
  %v486 = vadd.f32 %v478, %v482
  %v487 = vadd.f32 %v479, %v483
  %v488 = vadd.f32 %v480, %v484
  %v489 = vadd.f32 %v481, %v485
  %v490 = vmul.f32 %v486, 1.8
  %v491 = vmul.f32 %v487, 1.8
  %v492 = vmul.f32 %v488, 1.8
  %v493 = vmul.f32 %v489, 1.8
  %v494 = vadd.f32 %v490, 0.01
  %v495 = vadd.f32 %v491, 0.01
  %v496 = vadd.f32 %v492, 0.01
  %v497 = vadd.f32 %v493, 0.01
  %v498 = vmul.f32 %v313, %v105
  %v499 = vmul.f32 %v314, %v105
  %v500 = vmul.f32 %v315, %v105
  %v501 = vmul.f32 %v316, %v105
  %v502 = vadd.f32 %v498, %v94
  %v503 = vadd.f32 %v499, %v95
  %v504 = vadd.f32 %v500, %v96
  %v505 = vadd.f32 %v501, %v97
  %v506 = vmul.f32 %v494, %v329
  %v507 = vmul.f32 %v495, %v330
  %v508 = vmul.f32 %v496, %v331
  %v509 = vmul.f32 %v497, %v332
  %v510 = vsub.f32 %v502, %v506
  %v511 = vsub.f32 %v503, %v507
  %v512 = vsub.f32 %v504, %v508
  %v513 = vsub.f32 %v505, %v509
  %v514 = vsub.f32 %v510, %v494
  %v515 = vsub.f32 %v511, %v495
  %v516 = vsub.f32 %v512, %v496
  %v517 = vsub.f32 %v513, %v497
  %vm518 = vcmp.gt.f32.partialorder %v514, 0.0
  %vm519 = vcmp.gt.f32.partialorder %v515, 0.0
  %vm520 = vcmp.gt.f32.partialorder %v516, 0.0
  %vm521 = vcmp.gt.f32.partialorder %v517, 0.0
  %v522 = vsel %vm518, 1, 0
  %v523 = vsel %vm519, 1, 0
  %v524 = vsel %vm520, 1, 0
  %v525 = vsel %vm521, 1, 0
  %v526 = vcvt.s32.f32 %v522
  %v527 = vcvt.s32.f32 %v523
  %v528 = vcvt.s32.f32 %v524
  %v529 = vcvt.s32.f32 %v525
  %v531 = vsel %vm136, %v526, 0
  %v534 = vsel %vm136, %v527, 0
  %v537 = vsel %vm136, %v528, 0
  %v540 = vsel %vm136, %v529, 0
  %542 = vmatpush.msra.mxu0 0.0
  %543 = vmatpush.msra.mxu0 0.0
  %544 = vmatpush.msra.mxu0 0.0
  %545 = vmatpush.msra.mxu0 0.0
  %546 = vmatpush.msra.mxu0 0.0
  %547 = vmatpush.msra.mxu0 0.0
  %548 = vmatpush.msra.mxu0 0.0
  %549 = vmatpush.msra.mxu0 0.0
  %550 = vmatpush.msra.mxu0 %v40
  %551 = vmatpush.msra.mxu0 %v39
  %552 = vmatpush.msra.mxu0 %v38
  %553 = vmatpush.msra.mxu0 %v37
  %554 = vmatpush.msra.mxu0 %v36
  %555 = vmatpush.msra.mxu0 %v35
  %556 = vmatpush.msra.mxu0 %v34
  %557 = vmatpush.msra.mxu0 %v33
  %558 = vmatmul.f32.gmra.mxu0 %v531
  %v559 = vpop.f32.mrf.mxu0
  %v560 = vadd.f32 %v135, %v559
  %561 = vmatmul.f32.gmra.mxu0 %v534
  %v562 = vpop.f32.mrf.mxu0
  %v563 = vadd.f32 %v135, %v562
  %564 = vmatmul.f32.gmra.mxu0 %v537
  %v565 = vpop.f32.mrf.mxu0
  %v566 = vadd.f32 %v135, %v565
  %567 = vmatmul.f32.gmra.mxu0 %v540
  %v568 = vpop.f32.mrf.mxu0
  %v569 = vadd.f32 %v135, %v568
  %570 = vdwg.mxu0
  %v571 = vmul.f32 %v382, %v178
  %v572 = vmul.f32 %v383, %v178
  %v573 = vmul.f32 %v384, %v178
  %v574 = vmul.f32 %v385, %v178
  %v575 = vmul.f32 %v183, %v560
  %v576 = vmul.f32 %v183, %v563
  %v577 = vmul.f32 %v183, %v566
  %v578 = vmul.f32 %v183, %v569
  %v579 = vadd.f32 %v571, %v575
  %v580 = vadd.f32 %v572, %v576
  %v581 = vadd.f32 %v573, %v577
  %v582 = vadd.f32 %v574, %v578
  %583 = vmax.xlane.f32.xlu0 %v579
  %v584 = vpop.xlane.xlu0 %583
  %585 = vmax.xlane.f32.xlu0 %v580
  %v586 = vpop.xlane.xlu0 %585
  %587 = vmax.xlane.f32.xlu0 %v581
  %v588 = vpop.xlane.xlu0 %587
  %589 = vmax.xlane.f32.xlu0 %v582
  %v590 = vpop.xlane.xlu0 %589
  %v591 = vsub.f32 %v579, %v584
  %v592 = vsub.f32 %v580, %v586
  %v593 = vsub.f32 %v581, %v588
  %v594 = vsub.f32 %v582, %v590
  %v595 = vmul.f32 %v591, 1.442695
  %v596 = vpow.pop %v595
  %v597 = vmul.f32 %v592, 1.442695
  %v598 = vpow.pop %v597
  %v599 = vmul.f32 %v593, 1.442695
  %v600 = vpow.pop %v599
  %v601 = vmul.f32 %v594, 1.442695
  %v602 = vpow.pop %v601
  %603 = vadd.xlane.f32.xlu0 %v596
  %v604 = vpop.xlane.xlu0 %603
  %605 = vadd.xlane.f32.xlu0 %v598
  %v606 = vpop.xlane.xlu0 %605
  %607 = vadd.xlane.f32.xlu0 %v600
  %v608 = vpop.xlane.xlu0 %607
  %609 = vadd.xlane.f32.xlu0 %v602
  %v610 = vpop.xlane.xlu0 %609
  %v611 = vrcp.pop %v604
  %v612 = vmul.f32 %v604, %v611
  %v613 = vsub.f32 1.0, %v612
  %v614 = vmul.f32 %v611, %v613
  %v615 = vadd.f32 %v611, %v614
  %vm616 = vweird.f32 %v604
  %vm617 = vweird.f32 %v611
  %vm618 = vmor %vm616, %vm617
  %v619 = vsel %vm618, %v611, %v615
  %v620 = vand.u32 2147483647, %v604
  %vm621 = vcmp.eq.f32.partialorder %v620, 8.507059e+37
  %v622 = vand.u32 %v604, 2147483648
  %v623 = vor.u32 1.1754944e-38, %v622
  %v624 = vsel %vm621, %v623, %v619
  %v625 = vmul.f32 %v596, %v624
  %v626 = vrcp.pop %v606
  %v627 = vmul.f32 %v606, %v626
  %v628 = vsub.f32 1.0, %v627
  %v629 = vmul.f32 %v626, %v628
  %v630 = vadd.f32 %v626, %v629
  %vm631 = vweird.f32 %v606
  %vm632 = vweird.f32 %v626
  %vm633 = vmor %vm631, %vm632
  %v634 = vsel %vm633, %v626, %v630
  %v635 = vand.u32 2147483647, %v606
  %vm636 = vcmp.eq.f32.partialorder %v635, 8.507059e+37
  %v637 = vand.u32 %v606, 2147483648
  %v638 = vor.u32 1.1754944e-38, %v637
  %v639 = vsel %vm636, %v638, %v634
  %v640 = vmul.f32 %v598, %v639
  %v641 = vrcp.pop %v608
  %v642 = vmul.f32 %v608, %v641
  %v643 = vsub.f32 1.0, %v642
  %v644 = vmul.f32 %v641, %v643
  %v645 = vadd.f32 %v641, %v644
  %vm646 = vweird.f32 %v608
  %vm647 = vweird.f32 %v641
  %vm648 = vmor %vm646, %vm647
  %v649 = vsel %vm648, %v641, %v645
  %v650 = vand.u32 2147483647, %v608
  %vm651 = vcmp.eq.f32.partialorder %v650, 8.507059e+37
  %v652 = vand.u32 %v608, 2147483648
  %v653 = vor.u32 1.1754944e-38, %v652
  %v654 = vsel %vm651, %v653, %v649
  %v655 = vmul.f32 %v600, %v654
  %v656 = vrcp.pop %v610
  %v657 = vmul.f32 %v610, %v656
  %v658 = vsub.f32 1.0, %v657
  %v659 = vmul.f32 %v656, %v658
  %v660 = vadd.f32 %v656, %v659
  %vm661 = vweird.f32 %v610
  %vm662 = vweird.f32 %v656
  %vm663 = vmor %vm661, %vm662
  %v664 = vsel %vm663, %v656, %v660
  %v665 = vand.u32 2147483647, %v610
  %vm666 = vcmp.eq.f32.partialorder %v665, 8.507059e+37
  %v667 = vand.u32 %v610, 2147483648
  %v668 = vor.u32 1.1754944e-38, %v667
  %v669 = vsel %vm666, %v668, %v664
  %v670 = vmul.f32 %v602, %v669
  %v671 = vadd.f32 %v474, %v625
  %v672 = vadd.f32 %v475, %v640
  %v673 = vadd.f32 %v476, %v655
  %v674 = vadd.f32 %v477, %v670
  %v675 = vmul.f32 %v98, %v486
  %v676 = vmul.f32 %v98, %v487
  %v677 = vmul.f32 %v98, %v488
  %v678 = vmul.f32 %v98, %v489
  %v679 = vmul.f32 %v100, %v526
  %v680 = vmul.f32 %v100, %v527
  %v681 = vmul.f32 %v100, %v528
  %v682 = vmul.f32 %v100, %v529
  %v683 = vadd.f32 %v675, %v679
  %v684 = vadd.f32 %v676, %v680
  %v685 = vadd.f32 %v677, %v681
  %v686 = vadd.f32 %v678, %v682
  %v687 = vmul.f32 %v683, 1.8
  %v688 = vmul.f32 %v684, 1.8
  %v689 = vmul.f32 %v685, 1.8
  %v690 = vmul.f32 %v686, 1.8
  %v691 = vadd.f32 %v687, 0.01
  %v692 = vadd.f32 %v688, 0.01
  %v693 = vadd.f32 %v689, 0.01
  %v694 = vadd.f32 %v690, 0.01
  %v695 = vmul.f32 %v510, %v105
  %v696 = vmul.f32 %v511, %v105
  %v697 = vmul.f32 %v512, %v105
  %v698 = vmul.f32 %v513, %v105
  %v699 = vadd.f32 %v695, %v94
  %v700 = vadd.f32 %v696, %v95
  %v701 = vadd.f32 %v697, %v96
  %v702 = vadd.f32 %v698, %v97
  %v703 = vmul.f32 %v691, %v526
  %v704 = vmul.f32 %v692, %v527
  %v705 = vmul.f32 %v693, %v528
  %v706 = vmul.f32 %v694, %v529
  %v707 = vsub.f32 %v699, %v703
  %v708 = vsub.f32 %v700, %v704
  %v709 = vsub.f32 %v701, %v705
  %v710 = vsub.f32 %v702, %v706
  %v711 = vsub.f32 %v707, %v691
  %v712 = vsub.f32 %v708, %v692
  %v713 = vsub.f32 %v709, %v693
  %v714 = vsub.f32 %v710, %v694
  %vm715 = vcmp.gt.f32.partialorder %v711, 0.0
  %vm716 = vcmp.gt.f32.partialorder %v712, 0.0
  %vm717 = vcmp.gt.f32.partialorder %v713, 0.0
  %vm718 = vcmp.gt.f32.partialorder %v714, 0.0
  %v719 = vsel %vm715, 1, 0
  %v720 = vsel %vm716, 1, 0
  %v721 = vsel %vm717, 1, 0
  %v722 = vsel %vm718, 1, 0
  %v723 = vcvt.s32.f32 %v719
  %v724 = vcvt.s32.f32 %v720
  %v725 = vcvt.s32.f32 %v721
  %v726 = vcvt.s32.f32 %v722
  %v728 = vsel %vm136, %v723, 0
  %v731 = vsel %vm136, %v724, 0
  %v734 = vsel %vm136, %v725, 0
  %v737 = vsel %vm136, %v726, 0
  %739 = vmatpush.msra.mxu0 0.0
  %740 = vmatpush.msra.mxu0 0.0
  %741 = vmatpush.msra.mxu0 0.0
  %742 = vmatpush.msra.mxu0 0.0
  %743 = vmatpush.msra.mxu0 0.0
  %744 = vmatpush.msra.mxu0 0.0
  %745 = vmatpush.msra.mxu0 0.0
  %746 = vmatpush.msra.mxu0 0.0
  %747 = vmatpush.msra.mxu0 %v40
  %748 = vmatpush.msra.mxu0 %v39
  %749 = vmatpush.msra.mxu0 %v38
  %750 = vmatpush.msra.mxu0 %v37
  %751 = vmatpush.msra.mxu0 %v36
  %752 = vmatpush.msra.mxu0 %v35
  %753 = vmatpush.msra.mxu0 %v34
  %754 = vmatpush.msra.mxu0 %v33
  %755 = vmatmul.f32.gmra.mxu0 %v728
  %v756 = vpop.f32.mrf.mxu0
  %v757 = vadd.f32 %v135, %v756
  %758 = vmatmul.f32.gmra.mxu0 %v731
  %v759 = vpop.f32.mrf.mxu0
  %v760 = vadd.f32 %v135, %v759
  %761 = vmatmul.f32.gmra.mxu0 %v734
  %v762 = vpop.f32.mrf.mxu0
  %v763 = vadd.f32 %v135, %v762
  %764 = vmatmul.f32.gmra.mxu0 %v737
  %v765 = vpop.f32.mrf.mxu0
  %v766 = vadd.f32 %v135, %v765
  %767 = vdwg.mxu0
  %v768 = vmul.f32 %v579, %v178
  %v769 = vmul.f32 %v580, %v178
  %v770 = vmul.f32 %v581, %v178
  %v771 = vmul.f32 %v582, %v178
  %v772 = vmul.f32 %v183, %v757
  %v773 = vmul.f32 %v183, %v760
  %v774 = vmul.f32 %v183, %v763
  %v775 = vmul.f32 %v183, %v766
  %v776 = vadd.f32 %v768, %v772
  %v777 = vadd.f32 %v769, %v773
  %v778 = vadd.f32 %v770, %v774
  %v779 = vadd.f32 %v771, %v775
  %780 = vmax.xlane.f32.xlu0 %v776
  %v781 = vpop.xlane.xlu0 %780
  %782 = vmax.xlane.f32.xlu0 %v777
  %v783 = vpop.xlane.xlu0 %782
  %784 = vmax.xlane.f32.xlu0 %v778
  %v785 = vpop.xlane.xlu0 %784
  %786 = vmax.xlane.f32.xlu0 %v779
  %v787 = vpop.xlane.xlu0 %786
  %v788 = vsub.f32 %v776, %v781
  %v789 = vsub.f32 %v777, %v783
  %v790 = vsub.f32 %v778, %v785
  %v791 = vsub.f32 %v779, %v787
  %v792 = vmul.f32 %v788, 1.442695
  %v793 = vpow.pop %v792
  %v794 = vmul.f32 %v789, 1.442695
  %v795 = vpow.pop %v794
  %v796 = vmul.f32 %v790, 1.442695
  %v797 = vpow.pop %v796
  %v798 = vmul.f32 %v791, 1.442695
  %v799 = vpow.pop %v798
  %800 = vadd.xlane.f32.xlu0 %v793
  %v801 = vpop.xlane.xlu0 %800
  %802 = vadd.xlane.f32.xlu0 %v795
  %v803 = vpop.xlane.xlu0 %802
  %804 = vadd.xlane.f32.xlu0 %v797
  %v805 = vpop.xlane.xlu0 %804
  %806 = vadd.xlane.f32.xlu0 %v799
  %v807 = vpop.xlane.xlu0 %806
  %v808 = vrcp.pop %v801
  %v809 = vmul.f32 %v801, %v808
  %v810 = vsub.f32 1.0, %v809
  %v811 = vmul.f32 %v808, %v810
  %v812 = vadd.f32 %v808, %v811
  %vm813 = vweird.f32 %v801
  %vm814 = vweird.f32 %v808
  %vm815 = vmor %vm813, %vm814
  %v816 = vsel %vm815, %v808, %v812
  %v817 = vand.u32 2147483647, %v801
  %vm818 = vcmp.eq.f32.partialorder %v817, 8.507059e+37
  %v819 = vand.u32 %v801, 2147483648
  %v820 = vor.u32 1.1754944e-38, %v819
  %v821 = vsel %vm818, %v820, %v816
  %v822 = vmul.f32 %v793, %v821
  %v823 = vrcp.pop %v803
  %v824 = vmul.f32 %v803, %v823
  %v825 = vsub.f32 1.0, %v824
  %v826 = vmul.f32 %v823, %v825
  %v827 = vadd.f32 %v823, %v826
  %vm828 = vweird.f32 %v803
  %vm829 = vweird.f32 %v823
  %vm830 = vmor %vm828, %vm829
  %v831 = vsel %vm830, %v823, %v827
  %v832 = vand.u32 2147483647, %v803
  %vm833 = vcmp.eq.f32.partialorder %v832, 8.507059e+37
  %v834 = vand.u32 %v803, 2147483648
  %v835 = vor.u32 1.1754944e-38, %v834
  %v836 = vsel %vm833, %v835, %v831
  %v837 = vmul.f32 %v795, %v836
  %v838 = vrcp.pop %v805
  %v839 = vmul.f32 %v805, %v838
  %v840 = vsub.f32 1.0, %v839
  %v841 = vmul.f32 %v838, %v840
  %v842 = vadd.f32 %v838, %v841
  %vm843 = vweird.f32 %v805
  %vm844 = vweird.f32 %v838
  %vm845 = vmor %vm843, %vm844
  %v846 = vsel %vm845, %v838, %v842
  %v847 = vand.u32 2147483647, %v805
  %vm848 = vcmp.eq.f32.partialorder %v847, 8.507059e+37
  %v849 = vand.u32 %v805, 2147483648
  %v850 = vor.u32 1.1754944e-38, %v849
  %v851 = vsel %vm848, %v850, %v846
  %v852 = vmul.f32 %v797, %v851
  %v853 = vrcp.pop %v807
  %v854 = vmul.f32 %v807, %v853
  %v855 = vsub.f32 1.0, %v854
  %v856 = vmul.f32 %v853, %v855
  %v857 = vadd.f32 %v853, %v856
  %vm858 = vweird.f32 %v807
  %vm859 = vweird.f32 %v853
  %vm860 = vmor %vm858, %vm859
  %v861 = vsel %vm860, %v853, %v857
  %v862 = vand.u32 2147483647, %v807
  %vm863 = vcmp.eq.f32.partialorder %v862, 8.507059e+37
  %v864 = vand.u32 %v807, 2147483648
  %v865 = vor.u32 1.1754944e-38, %v864
  %v866 = vsel %vm863, %v865, %v861
  %v867 = vmul.f32 %v799, %v866
  %v868 = vadd.f32 %v671, %v822
  %v869 = vadd.f32 %v672, %v837
  %v870 = vadd.f32 %v673, %v852
  %v871 = vadd.f32 %v674, %v867
  %v872 = vmul.f32 %v98, %v683
  %v873 = vmul.f32 %v98, %v684
  %v874 = vmul.f32 %v98, %v685
  %v875 = vmul.f32 %v98, %v686
  %v876 = vmul.f32 %v100, %v723
  %v877 = vmul.f32 %v100, %v724
  %v878 = vmul.f32 %v100, %v725
  %v879 = vmul.f32 %v100, %v726
  %v880 = vadd.f32 %v872, %v876
  %v881 = vadd.f32 %v873, %v877
  %v882 = vadd.f32 %v874, %v878
  %v883 = vadd.f32 %v875, %v879
  %v884 = vmul.f32 %v880, 1.8
  %v885 = vmul.f32 %v881, 1.8
  %v886 = vmul.f32 %v882, 1.8
  %v887 = vmul.f32 %v883, 1.8
  %v888 = vadd.f32 %v884, 0.01
  %v889 = vadd.f32 %v885, 0.01
  %v890 = vadd.f32 %v886, 0.01
  %v891 = vadd.f32 %v887, 0.01
  %v892 = vmul.f32 %v707, %v105
  %v893 = vmul.f32 %v708, %v105
  %v894 = vmul.f32 %v709, %v105
  %v895 = vmul.f32 %v710, %v105
  %v896 = vadd.f32 %v892, %v94
  %v897 = vadd.f32 %v893, %v95
  %v898 = vadd.f32 %v894, %v96
  %v899 = vadd.f32 %v895, %v97
  %v900 = vmul.f32 %v888, %v723
  %v901 = vmul.f32 %v889, %v724
  %v902 = vmul.f32 %v890, %v725
  %v903 = vmul.f32 %v891, %v726
  %v904 = vsub.f32 %v896, %v900
  %v905 = vsub.f32 %v897, %v901
  %v906 = vsub.f32 %v898, %v902
  %v907 = vsub.f32 %v899, %v903
  %v908 = vsub.f32 %v904, %v888
  %v909 = vsub.f32 %v905, %v889
  %v910 = vsub.f32 %v906, %v890
  %v911 = vsub.f32 %v907, %v891
  %vm912 = vcmp.gt.f32.partialorder %v908, 0.0
  %vm913 = vcmp.gt.f32.partialorder %v909, 0.0
  %vm914 = vcmp.gt.f32.partialorder %v910, 0.0
  %vm915 = vcmp.gt.f32.partialorder %v911, 0.0
  %v916 = vsel %vm912, 1, 0
  %v917 = vsel %vm913, 1, 0
  %v918 = vsel %vm914, 1, 0
  %v919 = vsel %vm915, 1, 0
  %v920 = vcvt.s32.f32 %v916
  %v921 = vcvt.s32.f32 %v917
  %v922 = vcvt.s32.f32 %v918
  %v923 = vcvt.s32.f32 %v919
  %v925 = vsel %vm136, %v920, 0
  %v928 = vsel %vm136, %v921, 0
  %v931 = vsel %vm136, %v922, 0
  %v934 = vsel %vm136, %v923, 0
  %936 = vmatpush.msra.mxu0 0.0
  %937 = vmatpush.msra.mxu0 0.0
  %938 = vmatpush.msra.mxu0 0.0
  %939 = vmatpush.msra.mxu0 0.0
  %940 = vmatpush.msra.mxu0 0.0
  %941 = vmatpush.msra.mxu0 0.0
  %942 = vmatpush.msra.mxu0 0.0
  %943 = vmatpush.msra.mxu0 0.0
  %944 = vmatpush.msra.mxu0 %v40
  %945 = vmatpush.msra.mxu0 %v39
  %946 = vmatpush.msra.mxu0 %v38
  %947 = vmatpush.msra.mxu0 %v37
  %948 = vmatpush.msra.mxu0 %v36
  %949 = vmatpush.msra.mxu0 %v35
  %950 = vmatpush.msra.mxu0 %v34
  %951 = vmatpush.msra.mxu0 %v33
  %952 = vmatmul.f32.gmra.mxu0 %v925
  %v953 = vpop.f32.mrf.mxu0
  %v954 = vadd.f32 %v135, %v953
  %955 = vmatmul.f32.gmra.mxu0 %v928
  %v956 = vpop.f32.mrf.mxu0
  %v957 = vadd.f32 %v135, %v956
  %958 = vmatmul.f32.gmra.mxu0 %v931
  %v959 = vpop.f32.mrf.mxu0
  %v960 = vadd.f32 %v135, %v959
  %961 = vmatmul.f32.gmra.mxu0 %v934
  %v962 = vpop.f32.mrf.mxu0
  %v963 = vadd.f32 %v135, %v962
  %964 = vdwg.mxu0
  %v965 = vmul.f32 %v776, %v178
  %v966 = vmul.f32 %v777, %v178
  %v967 = vmul.f32 %v778, %v178
  %v968 = vmul.f32 %v779, %v178
  %v969 = vmul.f32 %v183, %v954
  %v970 = vmul.f32 %v183, %v957
  %v971 = vmul.f32 %v183, %v960
  %v972 = vmul.f32 %v183, %v963
  %v973 = vadd.f32 %v965, %v969
  %v974 = vadd.f32 %v966, %v970
  %v975 = vadd.f32 %v967, %v971
  %v976 = vadd.f32 %v968, %v972
  %977 = vmax.xlane.f32.xlu0 %v973
  %v978 = vpop.xlane.xlu0 %977
  %979 = vmax.xlane.f32.xlu0 %v974
  %v980 = vpop.xlane.xlu0 %979
  %981 = vmax.xlane.f32.xlu0 %v975
  %v982 = vpop.xlane.xlu0 %981
  %983 = vmax.xlane.f32.xlu0 %v976
  %v984 = vpop.xlane.xlu0 %983
  %v985 = vsub.f32 %v973, %v978
  %v986 = vsub.f32 %v974, %v980
  %v987 = vsub.f32 %v975, %v982
  %v988 = vsub.f32 %v976, %v984
  %v989 = vmul.f32 %v985, 1.442695
  %v990 = vpow.pop %v989
  %v991 = vmul.f32 %v986, 1.442695
  %v992 = vpow.pop %v991
  %v993 = vmul.f32 %v987, 1.442695
  %v994 = vpow.pop %v993
  %v995 = vmul.f32 %v988, 1.442695
  %v996 = vpow.pop %v995
  %997 = vadd.xlane.f32.xlu0 %v990
  %v998 = vpop.xlane.xlu0 %997
  %999 = vadd.xlane.f32.xlu0 %v992
  %v1000 = vpop.xlane.xlu0 %999
  %1001 = vadd.xlane.f32.xlu0 %v994
  %v1002 = vpop.xlane.xlu0 %1001
  %1003 = vadd.xlane.f32.xlu0 %v996
  %v1004 = vpop.xlane.xlu0 %1003
  %v1005 = vrcp.pop %v998
  %v1006 = vmul.f32 %v998, %v1005
  %v1007 = vsub.f32 1.0, %v1006
  %v1008 = vmul.f32 %v1005, %v1007
  %v1009 = vadd.f32 %v1005, %v1008
  %vm1010 = vweird.f32 %v998
  %vm1011 = vweird.f32 %v1005
  %vm1012 = vmor %vm1010, %vm1011
  %v1013 = vsel %vm1012, %v1005, %v1009
  %v1014 = vand.u32 2147483647, %v998
  %vm1015 = vcmp.eq.f32.partialorder %v1014, 8.507059e+37
  %v1016 = vand.u32 %v998, 2147483648
  %v1017 = vor.u32 1.1754944e-38, %v1016
  %v1018 = vsel %vm1015, %v1017, %v1013
  %v1019 = vmul.f32 %v990, %v1018
  %v1020 = vrcp.pop %v1000
  %v1021 = vmul.f32 %v1000, %v1020
  %v1022 = vsub.f32 1.0, %v1021
  %v1023 = vmul.f32 %v1020, %v1022
  %v1024 = vadd.f32 %v1020, %v1023
  %vm1025 = vweird.f32 %v1000
  %vm1026 = vweird.f32 %v1020
  %vm1027 = vmor %vm1025, %vm1026
  %v1028 = vsel %vm1027, %v1020, %v1024
  %v1029 = vand.u32 2147483647, %v1000
  %vm1030 = vcmp.eq.f32.partialorder %v1029, 8.507059e+37
  %v1031 = vand.u32 %v1000, 2147483648
  %v1032 = vor.u32 1.1754944e-38, %v1031
  %v1033 = vsel %vm1030, %v1032, %v1028
  %v1034 = vmul.f32 %v992, %v1033
  %v1035 = vrcp.pop %v1002
  %v1036 = vmul.f32 %v1002, %v1035
  %v1037 = vsub.f32 1.0, %v1036
  %v1038 = vmul.f32 %v1035, %v1037
  %v1039 = vadd.f32 %v1035, %v1038
  %vm1040 = vweird.f32 %v1002
  %vm1041 = vweird.f32 %v1035
  %vm1042 = vmor %vm1040, %vm1041
  %v1043 = vsel %vm1042, %v1035, %v1039
  %v1044 = vand.u32 2147483647, %v1002
  %vm1045 = vcmp.eq.f32.partialorder %v1044, 8.507059e+37
  %v1046 = vand.u32 %v1002, 2147483648
  %v1047 = vor.u32 1.1754944e-38, %v1046
  %v1048 = vsel %vm1045, %v1047, %v1043
  %v1049 = vmul.f32 %v994, %v1048
  %v1050 = vrcp.pop %v1004
  %v1051 = vmul.f32 %v1004, %v1050
  %v1052 = vsub.f32 1.0, %v1051
  %v1053 = vmul.f32 %v1050, %v1052
  %v1054 = vadd.f32 %v1050, %v1053
  %vm1055 = vweird.f32 %v1004
  %vm1056 = vweird.f32 %v1050
  %vm1057 = vmor %vm1055, %vm1056
  %v1058 = vsel %vm1057, %v1050, %v1054
  %v1059 = vand.u32 2147483647, %v1004
  %vm1060 = vcmp.eq.f32.partialorder %v1059, 8.507059e+37
  %v1061 = vand.u32 %v1004, 2147483648
  %v1062 = vor.u32 1.1754944e-38, %v1061
  %v1063 = vsel %vm1060, %v1062, %v1058
  %v1064 = vmul.f32 %v996, %v1063
  %v1065 = vadd.f32 %v868, %v1019
  %v1066 = vadd.f32 %v869, %v1034
  %v1067 = vadd.f32 %v870, %v1049
  %v1068 = vadd.f32 %v871, %v1064
  %v1069 = vmul.f32 %v98, %v880
  %v1070 = vmul.f32 %v98, %v881
  %v1071 = vmul.f32 %v98, %v882
  %v1072 = vmul.f32 %v98, %v883
  %v1073 = vmul.f32 %v100, %v920
  %v1074 = vmul.f32 %v100, %v921
  %v1075 = vmul.f32 %v100, %v922
  %v1076 = vmul.f32 %v100, %v923
  %v1077 = vadd.f32 %v1069, %v1073
  %v1078 = vadd.f32 %v1070, %v1074
  %v1079 = vadd.f32 %v1071, %v1075
  %v1080 = vadd.f32 %v1072, %v1076
  %v1081 = vmul.f32 %v1077, 1.8
  %v1082 = vmul.f32 %v1078, 1.8
  %v1083 = vmul.f32 %v1079, 1.8
  %v1084 = vmul.f32 %v1080, 1.8
  %v1085 = vadd.f32 %v1081, 0.01
  %v1086 = vadd.f32 %v1082, 0.01
  %v1087 = vadd.f32 %v1083, 0.01
  %v1088 = vadd.f32 %v1084, 0.01
  %v1089 = vmul.f32 %v904, %v105
  %v1090 = vmul.f32 %v905, %v105
  %v1091 = vmul.f32 %v906, %v105
  %v1092 = vmul.f32 %v907, %v105
  %v1093 = vadd.f32 %v1089, %v94
  %v1094 = vadd.f32 %v1090, %v95
  %v1095 = vadd.f32 %v1091, %v96
  %v1096 = vadd.f32 %v1092, %v97
  %v1097 = vmul.f32 %v1085, %v920
  %v1098 = vmul.f32 %v1086, %v921
  %v1099 = vmul.f32 %v1087, %v922
  %v1100 = vmul.f32 %v1088, %v923
  %v1101 = vsub.f32 %v1093, %v1097
  %v1102 = vsub.f32 %v1094, %v1098
  %v1103 = vsub.f32 %v1095, %v1099
  %v1104 = vsub.f32 %v1096, %v1100
  %v1105 = vsub.f32 %v1101, %v1085
  %v1106 = vsub.f32 %v1102, %v1086
  %v1107 = vsub.f32 %v1103, %v1087
  %v1108 = vsub.f32 %v1104, %v1088
  %vm1109 = vcmp.gt.f32.partialorder %v1105, 0.0
  %vm1110 = vcmp.gt.f32.partialorder %v1106, 0.0
  %vm1111 = vcmp.gt.f32.partialorder %v1107, 0.0
  %vm1112 = vcmp.gt.f32.partialorder %v1108, 0.0
  %v1113 = vsel %vm1109, 1, 0
  %v1114 = vsel %vm1110, 1, 0
  %v1115 = vsel %vm1111, 1, 0
  %v1116 = vsel %vm1112, 1, 0
  %v1117 = vcvt.s32.f32 %v1113
  %v1118 = vcvt.s32.f32 %v1114
  %v1119 = vcvt.s32.f32 %v1115
  %v1120 = vcvt.s32.f32 %v1116
  %v1122 = vsel %vm136, %v1117, 0
  %v1125 = vsel %vm136, %v1118, 0
  %v1128 = vsel %vm136, %v1119, 0
  %v1131 = vsel %vm136, %v1120, 0
  %1133 = vmatpush.msra.mxu0 0.0
  %1134 = vmatpush.msra.mxu0 0.0
  %1135 = vmatpush.msra.mxu0 0.0
  %1136 = vmatpush.msra.mxu0 0.0
  %1137 = vmatpush.msra.mxu0 0.0
  %1138 = vmatpush.msra.mxu0 0.0
  %1139 = vmatpush.msra.mxu0 0.0
  %1140 = vmatpush.msra.mxu0 0.0
  %1141 = vmatpush.msra.mxu0 %v40
  %1142 = vmatpush.msra.mxu0 %v39
  %1143 = vmatpush.msra.mxu0 %v38
  %1144 = vmatpush.msra.mxu0 %v37
  %1145 = vmatpush.msra.mxu0 %v36
  %1146 = vmatpush.msra.mxu0 %v35
  %1147 = vmatpush.msra.mxu0 %v34
  %1148 = vmatpush.msra.mxu0 %v33
  %1149 = vmatmul.f32.gmra.mxu0 %v1122
  %v1150 = vpop.f32.mrf.mxu0
  %v1151 = vadd.f32 %v135, %v1150
  %1152 = vmatmul.f32.gmra.mxu0 %v1125
  %v1153 = vpop.f32.mrf.mxu0
  %v1154 = vadd.f32 %v135, %v1153
  %1155 = vmatmul.f32.gmra.mxu0 %v1128
  %v1156 = vpop.f32.mrf.mxu0
  %v1157 = vadd.f32 %v135, %v1156
  %1158 = vmatmul.f32.gmra.mxu0 %v1131
  %v1159 = vpop.f32.mrf.mxu0
  %v1160 = vadd.f32 %v135, %v1159
  %1161 = vdwg.mxu0
  %v1162 = vmul.f32 %v973, %v178
  %v1163 = vmul.f32 %v974, %v178
  %v1164 = vmul.f32 %v975, %v178
  %v1165 = vmul.f32 %v976, %v178
  %v1166 = vmul.f32 %v183, %v1151
  %v1167 = vmul.f32 %v183, %v1154
  %v1168 = vmul.f32 %v183, %v1157
  %v1169 = vmul.f32 %v183, %v1160
  %v1170 = vadd.f32 %v1162, %v1166
  %v1171 = vadd.f32 %v1163, %v1167
  %v1172 = vadd.f32 %v1164, %v1168
  %v1173 = vadd.f32 %v1165, %v1169
  %1174 = vmax.xlane.f32.xlu0 %v1170
  %v1175 = vpop.xlane.xlu0 %1174
  %1176 = vmax.xlane.f32.xlu0 %v1171
  %v1177 = vpop.xlane.xlu0 %1176
  %1178 = vmax.xlane.f32.xlu0 %v1172
  %v1179 = vpop.xlane.xlu0 %1178
  %1180 = vmax.xlane.f32.xlu0 %v1173
  %v1181 = vpop.xlane.xlu0 %1180
  %v1182 = vsub.f32 %v1170, %v1175
  %v1183 = vsub.f32 %v1171, %v1177
  %v1184 = vsub.f32 %v1172, %v1179
  %v1185 = vsub.f32 %v1173, %v1181
  %v1186 = vmul.f32 %v1182, 1.442695
  %v1187 = vpow.pop %v1186
  %v1188 = vmul.f32 %v1183, 1.442695
  %v1189 = vpow.pop %v1188
  %v1190 = vmul.f32 %v1184, 1.442695
  %v1191 = vpow.pop %v1190
  %v1192 = vmul.f32 %v1185, 1.442695
  %v1193 = vpow.pop %v1192
  %1194 = vadd.xlane.f32.xlu0 %v1187
  %v1195 = vpop.xlane.xlu0 %1194
  %1196 = vadd.xlane.f32.xlu0 %v1189
  %v1197 = vpop.xlane.xlu0 %1196
  %1198 = vadd.xlane.f32.xlu0 %v1191
  %v1199 = vpop.xlane.xlu0 %1198
  %1200 = vadd.xlane.f32.xlu0 %v1193
  %v1201 = vpop.xlane.xlu0 %1200
  %v1202 = vrcp.pop %v1195
  %v1203 = vmul.f32 %v1195, %v1202
  %v1204 = vsub.f32 1.0, %v1203
  %v1205 = vmul.f32 %v1202, %v1204
  %v1206 = vadd.f32 %v1202, %v1205
  %vm1207 = vweird.f32 %v1195
  %vm1208 = vweird.f32 %v1202
  %vm1209 = vmor %vm1207, %vm1208
  %v1210 = vsel %vm1209, %v1202, %v1206
  %v1211 = vand.u32 2147483647, %v1195
  %vm1212 = vcmp.eq.f32.partialorder %v1211, 8.507059e+37
  %v1213 = vand.u32 %v1195, 2147483648
  %v1214 = vor.u32 1.1754944e-38, %v1213
  %v1215 = vsel %vm1212, %v1214, %v1210
  %v1216 = vmul.f32 %v1187, %v1215
  %v1217 = vrcp.pop %v1197
  %v1218 = vmul.f32 %v1197, %v1217
  %v1219 = vsub.f32 1.0, %v1218
  %v1220 = vmul.f32 %v1217, %v1219
  %v1221 = vadd.f32 %v1217, %v1220
  %vm1222 = vweird.f32 %v1197
  %vm1223 = vweird.f32 %v1217
  %vm1224 = vmor %vm1222, %vm1223
  %v1225 = vsel %vm1224, %v1217, %v1221
  %v1226 = vand.u32 2147483647, %v1197
  %vm1227 = vcmp.eq.f32.partialorder %v1226, 8.507059e+37
  %v1228 = vand.u32 %v1197, 2147483648
  %v1229 = vor.u32 1.1754944e-38, %v1228
  %v1230 = vsel %vm1227, %v1229, %v1225
  %v1231 = vmul.f32 %v1189, %v1230
  %v1232 = vrcp.pop %v1199
  %v1233 = vmul.f32 %v1199, %v1232
  %v1234 = vsub.f32 1.0, %v1233
  %v1235 = vmul.f32 %v1232, %v1234
  %v1236 = vadd.f32 %v1232, %v1235
  %vm1237 = vweird.f32 %v1199
  %vm1238 = vweird.f32 %v1232
  %vm1239 = vmor %vm1237, %vm1238
  %v1240 = vsel %vm1239, %v1232, %v1236
  %v1241 = vand.u32 2147483647, %v1199
  %vm1242 = vcmp.eq.f32.partialorder %v1241, 8.507059e+37
  %v1243 = vand.u32 %v1199, 2147483648
  %v1244 = vor.u32 1.1754944e-38, %v1243
  %v1245 = vsel %vm1242, %v1244, %v1240
  %v1246 = vmul.f32 %v1191, %v1245
  %v1247 = vrcp.pop %v1201
  %v1248 = vmul.f32 %v1201, %v1247
  %v1249 = vsub.f32 1.0, %v1248
  %v1250 = vmul.f32 %v1247, %v1249
  %v1251 = vadd.f32 %v1247, %v1250
  %vm1252 = vweird.f32 %v1201
  %vm1253 = vweird.f32 %v1247
  %vm1254 = vmor %vm1252, %vm1253
  %v1255 = vsel %vm1254, %v1247, %v1251
  %v1256 = vand.u32 2147483647, %v1201
  %vm1257 = vcmp.eq.f32.partialorder %v1256, 8.507059e+37
  %v1258 = vand.u32 %v1201, 2147483648
  %v1259 = vor.u32 1.1754944e-38, %v1258
  %v1260 = vsel %vm1257, %v1259, %v1255
  %v1261 = vmul.f32 %v1193, %v1260
  %v1262 = vadd.f32 %v1065, %v1216
  %v1263 = vadd.f32 %v1066, %v1231
  %v1264 = vadd.f32 %v1067, %v1246
  %v1265 = vadd.f32 %v1068, %v1261
  %v1266 = vmul.f32 %v98, %v1077
  %v1267 = vmul.f32 %v98, %v1078
  %v1268 = vmul.f32 %v98, %v1079
  %v1269 = vmul.f32 %v98, %v1080
  %v1270 = vmul.f32 %v100, %v1117
  %v1271 = vmul.f32 %v100, %v1118
  %v1272 = vmul.f32 %v100, %v1119
  %v1273 = vmul.f32 %v100, %v1120
  %v1274 = vadd.f32 %v1266, %v1270
  %v1275 = vadd.f32 %v1267, %v1271
  %v1276 = vadd.f32 %v1268, %v1272
  %v1277 = vadd.f32 %v1269, %v1273
  %v1278 = vmul.f32 %v1274, 1.8
  %v1279 = vmul.f32 %v1275, 1.8
  %v1280 = vmul.f32 %v1276, 1.8
  %v1281 = vmul.f32 %v1277, 1.8
  %v1282 = vadd.f32 %v1278, 0.01
  %v1283 = vadd.f32 %v1279, 0.01
  %v1284 = vadd.f32 %v1280, 0.01
  %v1285 = vadd.f32 %v1281, 0.01
  %v1286 = vmul.f32 %v1101, %v105
  %v1287 = vmul.f32 %v1102, %v105
  %v1288 = vmul.f32 %v1103, %v105
  %v1289 = vmul.f32 %v1104, %v105
  %v1290 = vadd.f32 %v1286, %v94
  %v1291 = vadd.f32 %v1287, %v95
  %v1292 = vadd.f32 %v1288, %v96
  %v1293 = vadd.f32 %v1289, %v97
  %v1294 = vmul.f32 %v1282, %v1117
  %v1295 = vmul.f32 %v1283, %v1118
  %v1296 = vmul.f32 %v1284, %v1119
  %v1297 = vmul.f32 %v1285, %v1120
  %v1298 = vsub.f32 %v1290, %v1294
  %v1299 = vsub.f32 %v1291, %v1295
  %v1300 = vsub.f32 %v1292, %v1296
  %v1301 = vsub.f32 %v1293, %v1297
  %v1302 = vsub.f32 %v1298, %v1282
  %v1303 = vsub.f32 %v1299, %v1283
  %v1304 = vsub.f32 %v1300, %v1284
  %v1305 = vsub.f32 %v1301, %v1285
  %vm1306 = vcmp.gt.f32.partialorder %v1302, 0.0
  %vm1307 = vcmp.gt.f32.partialorder %v1303, 0.0
  %vm1308 = vcmp.gt.f32.partialorder %v1304, 0.0
  %vm1309 = vcmp.gt.f32.partialorder %v1305, 0.0
  %v1310 = vsel %vm1306, 1, 0
  %v1311 = vsel %vm1307, 1, 0
  %v1312 = vsel %vm1308, 1, 0
  %v1313 = vsel %vm1309, 1, 0
  %v1314 = vcvt.s32.f32 %v1310
  %v1315 = vcvt.s32.f32 %v1311
  %v1316 = vcvt.s32.f32 %v1312
  %v1317 = vcvt.s32.f32 %v1313
  %v1319 = vsel %vm136, %v1314, 0
  %v1322 = vsel %vm136, %v1315, 0
  %v1325 = vsel %vm136, %v1316, 0
  %v1328 = vsel %vm136, %v1317, 0
  %1330 = vmatpush.msra.mxu0 0.0
  %1331 = vmatpush.msra.mxu0 0.0
  %1332 = vmatpush.msra.mxu0 0.0
  %1333 = vmatpush.msra.mxu0 0.0
  %1334 = vmatpush.msra.mxu0 0.0
  %1335 = vmatpush.msra.mxu0 0.0
  %1336 = vmatpush.msra.mxu0 0.0
  %1337 = vmatpush.msra.mxu0 0.0
  %1338 = vmatpush.msra.mxu0 %v40
  %1339 = vmatpush.msra.mxu0 %v39
  %1340 = vmatpush.msra.mxu0 %v38
  %1341 = vmatpush.msra.mxu0 %v37
  %1342 = vmatpush.msra.mxu0 %v36
  %1343 = vmatpush.msra.mxu0 %v35
  %1344 = vmatpush.msra.mxu0 %v34
  %1345 = vmatpush.msra.mxu0 %v33
  %1346 = vmatmul.f32.gmra.mxu0 %v1319
  %v1347 = vpop.f32.mrf.mxu0
  %v1348 = vadd.f32 %v135, %v1347
  %1349 = vmatmul.f32.gmra.mxu0 %v1322
  %v1350 = vpop.f32.mrf.mxu0
  %v1351 = vadd.f32 %v135, %v1350
  %1352 = vmatmul.f32.gmra.mxu0 %v1325
  %v1353 = vpop.f32.mrf.mxu0
  %v1354 = vadd.f32 %v135, %v1353
  %1355 = vmatmul.f32.gmra.mxu0 %v1328
  %v1356 = vpop.f32.mrf.mxu0
  %v1357 = vadd.f32 %v135, %v1356
  %1358 = vdwg.mxu0
  %v1359 = vmul.f32 %v1170, %v178
  %v1360 = vmul.f32 %v1171, %v178
  %v1361 = vmul.f32 %v1172, %v178
  %v1362 = vmul.f32 %v1173, %v178
  %v1363 = vmul.f32 %v183, %v1348
  %v1364 = vmul.f32 %v183, %v1351
  %v1365 = vmul.f32 %v183, %v1354
  %v1366 = vmul.f32 %v183, %v1357
  %v1367 = vadd.f32 %v1359, %v1363
  %v1368 = vadd.f32 %v1360, %v1364
  %v1369 = vadd.f32 %v1361, %v1365
  %v1370 = vadd.f32 %v1362, %v1366
  %1371 = vmax.xlane.f32.xlu0 %v1367
  %v1372 = vpop.xlane.xlu0 %1371
  %1373 = vmax.xlane.f32.xlu0 %v1368
  %v1374 = vpop.xlane.xlu0 %1373
  %1375 = vmax.xlane.f32.xlu0 %v1369
  %v1376 = vpop.xlane.xlu0 %1375
  %1377 = vmax.xlane.f32.xlu0 %v1370
  %v1378 = vpop.xlane.xlu0 %1377
  %v1379 = vsub.f32 %v1367, %v1372
  %v1380 = vsub.f32 %v1368, %v1374
  %v1381 = vsub.f32 %v1369, %v1376
  %v1382 = vsub.f32 %v1370, %v1378
  %v1383 = vmul.f32 %v1379, 1.442695
  %v1384 = vpow.pop %v1383
  %v1385 = vmul.f32 %v1380, 1.442695
  %v1386 = vpow.pop %v1385
  %v1387 = vmul.f32 %v1381, 1.442695
  %v1388 = vpow.pop %v1387
  %v1389 = vmul.f32 %v1382, 1.442695
  %v1390 = vpow.pop %v1389
  %1391 = vadd.xlane.f32.xlu0 %v1384
  %v1392 = vpop.xlane.xlu0 %1391
  %1393 = vadd.xlane.f32.xlu0 %v1386
  %v1394 = vpop.xlane.xlu0 %1393
  %1395 = vadd.xlane.f32.xlu0 %v1388
  %v1396 = vpop.xlane.xlu0 %1395
  %1397 = vadd.xlane.f32.xlu0 %v1390
  %v1398 = vpop.xlane.xlu0 %1397
  %v1399 = vrcp.pop %v1392
  %v1400 = vmul.f32 %v1392, %v1399
  %v1401 = vsub.f32 1.0, %v1400
  %v1402 = vmul.f32 %v1399, %v1401
  %v1403 = vadd.f32 %v1399, %v1402
  %vm1404 = vweird.f32 %v1392
  %vm1405 = vweird.f32 %v1399
  %vm1406 = vmor %vm1404, %vm1405
  %v1407 = vsel %vm1406, %v1399, %v1403
  %v1408 = vand.u32 2147483647, %v1392
  %vm1409 = vcmp.eq.f32.partialorder %v1408, 8.507059e+37
  %v1410 = vand.u32 %v1392, 2147483648
  %v1411 = vor.u32 1.1754944e-38, %v1410
  %v1412 = vsel %vm1409, %v1411, %v1407
  %v1413 = vmul.f32 %v1384, %v1412
  %v1414 = vrcp.pop %v1394
  %v1415 = vmul.f32 %v1394, %v1414
  %v1416 = vsub.f32 1.0, %v1415
  %v1417 = vmul.f32 %v1414, %v1416
  %v1418 = vadd.f32 %v1414, %v1417
  %vm1419 = vweird.f32 %v1394
  %vm1420 = vweird.f32 %v1414
  %vm1421 = vmor %vm1419, %vm1420
  %v1422 = vsel %vm1421, %v1414, %v1418
  %v1423 = vand.u32 2147483647, %v1394
  %vm1424 = vcmp.eq.f32.partialorder %v1423, 8.507059e+37
  %v1425 = vand.u32 %v1394, 2147483648
  %v1426 = vor.u32 1.1754944e-38, %v1425
  %v1427 = vsel %vm1424, %v1426, %v1422
  %v1428 = vmul.f32 %v1386, %v1427
  %v1429 = vrcp.pop %v1396
  %v1430 = vmul.f32 %v1396, %v1429
  %v1431 = vsub.f32 1.0, %v1430
  %v1432 = vmul.f32 %v1429, %v1431
  %v1433 = vadd.f32 %v1429, %v1432
  %vm1434 = vweird.f32 %v1396
  %vm1435 = vweird.f32 %v1429
  %vm1436 = vmor %vm1434, %vm1435
  %v1437 = vsel %vm1436, %v1429, %v1433
  %v1438 = vand.u32 2147483647, %v1396
  %vm1439 = vcmp.eq.f32.partialorder %v1438, 8.507059e+37
  %v1440 = vand.u32 %v1396, 2147483648
  %v1441 = vor.u32 1.1754944e-38, %v1440
  %v1442 = vsel %vm1439, %v1441, %v1437
  %v1443 = vmul.f32 %v1388, %v1442
  %v1444 = vrcp.pop %v1398
  %v1445 = vmul.f32 %v1398, %v1444
  %v1446 = vsub.f32 1.0, %v1445
  %v1447 = vmul.f32 %v1444, %v1446
  %v1448 = vadd.f32 %v1444, %v1447
  %vm1449 = vweird.f32 %v1398
  %vm1450 = vweird.f32 %v1444
  %vm1451 = vmor %vm1449, %vm1450
  %v1452 = vsel %vm1451, %v1444, %v1448
  %v1453 = vand.u32 2147483647, %v1398
  %vm1454 = vcmp.eq.f32.partialorder %v1453, 8.507059e+37
  %v1455 = vand.u32 %v1398, 2147483648
  %v1456 = vor.u32 1.1754944e-38, %v1455
  %v1457 = vsel %vm1454, %v1456, %v1452
  %v1458 = vmul.f32 %v1390, %v1457
  %v1459 = vadd.f32 %v1262, %v1413
  %v1460 = vadd.f32 %v1263, %v1428
  %v1461 = vadd.f32 %v1264, %v1443
  %v1462 = vadd.f32 %v1265, %v1458
  %v1463 = vmul.f32 %v98, %v1274
  %v1464 = vmul.f32 %v98, %v1275
  %v1465 = vmul.f32 %v98, %v1276
  %v1466 = vmul.f32 %v98, %v1277
  %v1467 = vmul.f32 %v100, %v1314
  %v1468 = vmul.f32 %v100, %v1315
  %v1469 = vmul.f32 %v100, %v1316
  %v1470 = vmul.f32 %v100, %v1317
  %v1471 = vadd.f32 %v1463, %v1467
  %v1472 = vadd.f32 %v1464, %v1468
  %v1473 = vadd.f32 %v1465, %v1469
  %v1474 = vadd.f32 %v1466, %v1470
  %v1475 = vmul.f32 %v1471, 1.8
  %v1476 = vmul.f32 %v1472, 1.8
  %v1477 = vmul.f32 %v1473, 1.8
  %v1478 = vmul.f32 %v1474, 1.8
  %v1479 = vadd.f32 %v1475, 0.01
  %v1480 = vadd.f32 %v1476, 0.01
  %v1481 = vadd.f32 %v1477, 0.01
  %v1482 = vadd.f32 %v1478, 0.01
  %v1483 = vmul.f32 %v1298, %v105
  %v1484 = vmul.f32 %v1299, %v105
  %v1485 = vmul.f32 %v1300, %v105
  %v1486 = vmul.f32 %v1301, %v105
  %v1487 = vadd.f32 %v1483, %v94
  %v1488 = vadd.f32 %v1484, %v95
  %v1489 = vadd.f32 %v1485, %v96
  %v1490 = vadd.f32 %v1486, %v97
  %v1491 = vmul.f32 %v1479, %v1314
  %v1492 = vmul.f32 %v1480, %v1315
  %v1493 = vmul.f32 %v1481, %v1316
  %v1494 = vmul.f32 %v1482, %v1317
  %v1495 = vsub.f32 %v1487, %v1491
  %v1496 = vsub.f32 %v1488, %v1492
  %v1497 = vsub.f32 %v1489, %v1493
  %v1498 = vsub.f32 %v1490, %v1494
  %v1499 = vsub.f32 %v1495, %v1479
  %v1500 = vsub.f32 %v1496, %v1480
  %v1501 = vsub.f32 %v1497, %v1481
  %v1502 = vsub.f32 %v1498, %v1482
  %vm1503 = vcmp.gt.f32.partialorder %v1499, 0.0
  %vm1504 = vcmp.gt.f32.partialorder %v1500, 0.0
  %vm1505 = vcmp.gt.f32.partialorder %v1501, 0.0
  %vm1506 = vcmp.gt.f32.partialorder %v1502, 0.0
  %v1507 = vsel %vm1503, 1, 0
  %v1508 = vsel %vm1504, 1, 0
  %v1509 = vsel %vm1505, 1, 0
  %v1510 = vsel %vm1506, 1, 0
  %v1511 = vcvt.s32.f32 %v1507
  %v1512 = vcvt.s32.f32 %v1508
  %v1513 = vcvt.s32.f32 %v1509
  %v1514 = vcvt.s32.f32 %v1510
  %v1516 = vsel %vm136, %v1511, 0
  %v1519 = vsel %vm136, %v1512, 0
  %v1522 = vsel %vm136, %v1513, 0
  %v1525 = vsel %vm136, %v1514, 0
  %1527 = vmatpush.msra.mxu0 0.0
  %1528 = vmatpush.msra.mxu0 0.0
  %1529 = vmatpush.msra.mxu0 0.0
  %1530 = vmatpush.msra.mxu0 0.0
  %1531 = vmatpush.msra.mxu0 0.0
  %1532 = vmatpush.msra.mxu0 0.0
  %1533 = vmatpush.msra.mxu0 0.0
  %1534 = vmatpush.msra.mxu0 0.0
  %1535 = vmatpush.msra.mxu0 %v40
  %1536 = vmatpush.msra.mxu0 %v39
  %1537 = vmatpush.msra.mxu0 %v38
  %1538 = vmatpush.msra.mxu0 %v37
  %1539 = vmatpush.msra.mxu0 %v36
  %1540 = vmatpush.msra.mxu0 %v35
  %1541 = vmatpush.msra.mxu0 %v34
  %1542 = vmatpush.msra.mxu0 %v33
  %1543 = vmatmul.f32.gmra.mxu0 %v1516
  %v1544 = vpop.f32.mrf.mxu0
  %v1545 = vadd.f32 %v135, %v1544
  %1546 = vmatmul.f32.gmra.mxu0 %v1519
  %v1547 = vpop.f32.mrf.mxu0
  %v1548 = vadd.f32 %v135, %v1547
  %1549 = vmatmul.f32.gmra.mxu0 %v1522
  %v1550 = vpop.f32.mrf.mxu0
  %v1551 = vadd.f32 %v135, %v1550
  %1552 = vmatmul.f32.gmra.mxu0 %v1525
  %v1553 = vpop.f32.mrf.mxu0
  %v1554 = vadd.f32 %v135, %v1553
  %1555 = vdwg.mxu0
  %v1556 = vmul.f32 %v1367, %v178
  %v1557 = vmul.f32 %v1368, %v178
  %v1558 = vmul.f32 %v1369, %v178
  %v1559 = vmul.f32 %v1370, %v178
  %v1560 = vmul.f32 %v183, %v1545
  %v1561 = vmul.f32 %v183, %v1548
  %v1562 = vmul.f32 %v183, %v1551
  %v1563 = vmul.f32 %v183, %v1554
  %v1564 = vadd.f32 %v1556, %v1560
  %v1565 = vadd.f32 %v1557, %v1561
  %v1566 = vadd.f32 %v1558, %v1562
  %v1567 = vadd.f32 %v1559, %v1563
  %1568 = vmax.xlane.f32.xlu0 %v1564
  %v1569 = vpop.xlane.xlu0 %1568
  %1570 = vmax.xlane.f32.xlu0 %v1565
  %v1571 = vpop.xlane.xlu0 %1570
  %1572 = vmax.xlane.f32.xlu0 %v1566
  %v1573 = vpop.xlane.xlu0 %1572
  %1574 = vmax.xlane.f32.xlu0 %v1567
  %v1575 = vpop.xlane.xlu0 %1574
  %v1576 = vsub.f32 %v1564, %v1569
  %v1577 = vsub.f32 %v1565, %v1571
  %v1578 = vsub.f32 %v1566, %v1573
  %v1579 = vsub.f32 %v1567, %v1575
  %v1580 = vmul.f32 %v1576, 1.442695
  %v1581 = vpow.pop %v1580
  %v1582 = vmul.f32 %v1577, 1.442695
  %v1583 = vpow.pop %v1582
  %v1584 = vmul.f32 %v1578, 1.442695
  %v1585 = vpow.pop %v1584
  %v1586 = vmul.f32 %v1579, 1.442695
  %v1587 = vpow.pop %v1586
  %1588 = vadd.xlane.f32.xlu0 %v1581
  %v1589 = vpop.xlane.xlu0 %1588
  %1590 = vadd.xlane.f32.xlu0 %v1583
  %v1591 = vpop.xlane.xlu0 %1590
  %1592 = vadd.xlane.f32.xlu0 %v1585
  %v1593 = vpop.xlane.xlu0 %1592
  %1594 = vadd.xlane.f32.xlu0 %v1587
  %v1595 = vpop.xlane.xlu0 %1594
  %v1596 = vrcp.pop %v1589
  %v1597 = vmul.f32 %v1589, %v1596
  %v1598 = vsub.f32 1.0, %v1597
  %v1599 = vmul.f32 %v1596, %v1598
  %v1600 = vadd.f32 %v1596, %v1599
  %vm1601 = vweird.f32 %v1589
  %vm1602 = vweird.f32 %v1596
  %vm1603 = vmor %vm1601, %vm1602
  %v1604 = vsel %vm1603, %v1596, %v1600
  %v1605 = vand.u32 2147483647, %v1589
  %vm1606 = vcmp.eq.f32.partialorder %v1605, 8.507059e+37
  %v1607 = vand.u32 %v1589, 2147483648
  %v1608 = vor.u32 1.1754944e-38, %v1607
  %v1609 = vsel %vm1606, %v1608, %v1604
  %v1610 = vmul.f32 %v1581, %v1609
  %v1611 = vrcp.pop %v1591
  %v1612 = vmul.f32 %v1591, %v1611
  %v1613 = vsub.f32 1.0, %v1612
  %v1614 = vmul.f32 %v1611, %v1613
  %v1615 = vadd.f32 %v1611, %v1614
  %vm1616 = vweird.f32 %v1591
  %vm1617 = vweird.f32 %v1611
  %vm1618 = vmor %vm1616, %vm1617
  %v1619 = vsel %vm1618, %v1611, %v1615
  %v1620 = vand.u32 2147483647, %v1591
  %vm1621 = vcmp.eq.f32.partialorder %v1620, 8.507059e+37
  %v1622 = vand.u32 %v1591, 2147483648
  %v1623 = vor.u32 1.1754944e-38, %v1622
  %v1624 = vsel %vm1621, %v1623, %v1619
  %v1625 = vmul.f32 %v1583, %v1624
  %v1626 = vrcp.pop %v1593
  %v1627 = vmul.f32 %v1593, %v1626
  %v1628 = vsub.f32 1.0, %v1627
  %v1629 = vmul.f32 %v1626, %v1628
  %v1630 = vadd.f32 %v1626, %v1629
  %vm1631 = vweird.f32 %v1593
  %vm1632 = vweird.f32 %v1626
  %vm1633 = vmor %vm1631, %vm1632
  %v1634 = vsel %vm1633, %v1626, %v1630
  %v1635 = vand.u32 2147483647, %v1593
  %vm1636 = vcmp.eq.f32.partialorder %v1635, 8.507059e+37
  %v1637 = vand.u32 %v1593, 2147483648
  %v1638 = vor.u32 1.1754944e-38, %v1637
  %v1639 = vsel %vm1636, %v1638, %v1634
  %v1640 = vmul.f32 %v1585, %v1639
  %v1641 = vrcp.pop %v1595
  %v1642 = vmul.f32 %v1595, %v1641
  %v1643 = vsub.f32 1.0, %v1642
  %v1644 = vmul.f32 %v1641, %v1643
  %v1645 = vadd.f32 %v1641, %v1644
  %vm1646 = vweird.f32 %v1595
  %vm1647 = vweird.f32 %v1641
  %vm1648 = vmor %vm1646, %vm1647
  %v1649 = vsel %vm1648, %v1641, %v1645
  %v1650 = vand.u32 2147483647, %v1595
  %vm1651 = vcmp.eq.f32.partialorder %v1650, 8.507059e+37
  %v1652 = vand.u32 %v1595, 2147483648
  %v1653 = vor.u32 1.1754944e-38, %v1652
  %v1654 = vsel %vm1651, %v1653, %v1649
  %v1655 = vmul.f32 %v1587, %v1654
  %v1656 = vadd.f32 %v1459, %v1610
  %v1657 = vadd.f32 %v1460, %v1625
  %v1658 = vadd.f32 %v1461, %v1640
  %v1659 = vadd.f32 %v1462, %v1655
  %v1660 = vmul.f32 %v98, %v1471
  %v1661 = vmul.f32 %v98, %v1472
  %v1662 = vmul.f32 %v98, %v1473
  %v1663 = vmul.f32 %v98, %v1474
  %v1664 = vmul.f32 %v100, %v1511
  %v1665 = vmul.f32 %v100, %v1512
  %v1666 = vmul.f32 %v100, %v1513
  %v1667 = vmul.f32 %v100, %v1514
  %v1668 = vadd.f32 %v1660, %v1664
  %v1669 = vadd.f32 %v1661, %v1665
  %v1670 = vadd.f32 %v1662, %v1666
  %v1671 = vadd.f32 %v1663, %v1667
  %v1672 = vmul.f32 %v1668, 1.8
  %v1673 = vmul.f32 %v1669, 1.8
  %v1674 = vmul.f32 %v1670, 1.8
  %v1675 = vmul.f32 %v1671, 1.8
  %v1676 = vadd.f32 %v1672, 0.01
  %v1677 = vadd.f32 %v1673, 0.01
  %v1678 = vadd.f32 %v1674, 0.01
  %v1679 = vadd.f32 %v1675, 0.01
  %v1680 = vmul.f32 %v1495, %v105
  %v1681 = vmul.f32 %v1496, %v105
  %v1682 = vmul.f32 %v1497, %v105
  %v1683 = vmul.f32 %v1498, %v105
  %v1684 = vadd.f32 %v1680, %v94
  %v1685 = vadd.f32 %v1681, %v95
  %v1686 = vadd.f32 %v1682, %v96
  %v1687 = vadd.f32 %v1683, %v97
  %v1688 = vmul.f32 %v1676, %v1511
  %v1689 = vmul.f32 %v1677, %v1512
  %v1690 = vmul.f32 %v1678, %v1513
  %v1691 = vmul.f32 %v1679, %v1514
  %v1692 = vsub.f32 %v1684, %v1688
  %v1693 = vsub.f32 %v1685, %v1689
  %v1694 = vsub.f32 %v1686, %v1690
  %v1695 = vsub.f32 %v1687, %v1691
  %v1696 = vsub.f32 %v1692, %v1676
  %v1697 = vsub.f32 %v1693, %v1677
  %v1698 = vsub.f32 %v1694, %v1678
  %v1699 = vsub.f32 %v1695, %v1679
  %vm1700 = vcmp.gt.f32.partialorder %v1696, 0.0
  %vm1701 = vcmp.gt.f32.partialorder %v1697, 0.0
  %vm1702 = vcmp.gt.f32.partialorder %v1698, 0.0
  %vm1703 = vcmp.gt.f32.partialorder %v1699, 0.0
  %v1704 = vsel %vm1700, 1, 0
  %v1705 = vsel %vm1701, 1, 0
  %v1706 = vsel %vm1702, 1, 0
  %v1707 = vsel %vm1703, 1, 0
  %v1708 = vcvt.s32.f32 %v1704
  %v1709 = vcvt.s32.f32 %v1705
  %v1710 = vcvt.s32.f32 %v1706
  %v1711 = vcvt.s32.f32 %v1707
  %v1713 = vsel %vm136, %v1708, 0
  %v1716 = vsel %vm136, %v1709, 0
  %v1719 = vsel %vm136, %v1710, 0
  %v1722 = vsel %vm136, %v1711, 0
  %1724 = vmatpush.msra.mxu0 0.0
  %1725 = vmatpush.msra.mxu0 0.0
  %1726 = vmatpush.msra.mxu0 0.0
  %1727 = vmatpush.msra.mxu0 0.0
  %1728 = vmatpush.msra.mxu0 0.0
  %1729 = vmatpush.msra.mxu0 0.0
  %1730 = vmatpush.msra.mxu0 0.0
  %1731 = vmatpush.msra.mxu0 0.0
  %1732 = vmatpush.msra.mxu0 %v40
  %1733 = vmatpush.msra.mxu0 %v39
  %1734 = vmatpush.msra.mxu0 %v38
  %1735 = vmatpush.msra.mxu0 %v37
  %1736 = vmatpush.msra.mxu0 %v36
  %1737 = vmatpush.msra.mxu0 %v35
  %1738 = vmatpush.msra.mxu0 %v34
  %1739 = vmatpush.msra.mxu0 %v33
  %1740 = vmatmul.f32.gmra.mxu0 %v1713
  %v1741 = vpop.f32.mrf.mxu0
  %v1742 = vadd.f32 %v135, %v1741
  %1743 = vmatmul.f32.gmra.mxu0 %v1716
  %v1744 = vpop.f32.mrf.mxu0
  %v1745 = vadd.f32 %v135, %v1744
  %1746 = vmatmul.f32.gmra.mxu0 %v1719
  %v1747 = vpop.f32.mrf.mxu0
  %v1748 = vadd.f32 %v135, %v1747
  %1749 = vmatmul.f32.gmra.mxu0 %v1722
  %v1750 = vpop.f32.mrf.mxu0
  %v1751 = vadd.f32 %v135, %v1750
  %1752 = vdwg.mxu0
  %v1753 = vmul.f32 %v1564, %v178
  %v1754 = vmul.f32 %v1565, %v178
  %v1755 = vmul.f32 %v1566, %v178
  %v1756 = vmul.f32 %v1567, %v178
  %v1757 = vmul.f32 %v183, %v1742
  %v1758 = vmul.f32 %v183, %v1745
  %v1759 = vmul.f32 %v183, %v1748
  %v1760 = vmul.f32 %v183, %v1751
  %v1761 = vadd.f32 %v1753, %v1757
  %v1762 = vadd.f32 %v1754, %v1758
  %v1763 = vadd.f32 %v1755, %v1759
  %v1764 = vadd.f32 %v1756, %v1760
  %1765 = vmax.xlane.f32.xlu0 %v1761
  %v1766 = vpop.xlane.xlu0 %1765
  %1767 = vmax.xlane.f32.xlu0 %v1762
  %v1768 = vpop.xlane.xlu0 %1767
  %1769 = vmax.xlane.f32.xlu0 %v1763
  %v1770 = vpop.xlane.xlu0 %1769
  %1771 = vmax.xlane.f32.xlu0 %v1764
  %v1772 = vpop.xlane.xlu0 %1771
  %v1773 = vsub.f32 %v1761, %v1766
  %v1774 = vsub.f32 %v1762, %v1768
  %v1775 = vsub.f32 %v1763, %v1770
  %v1776 = vsub.f32 %v1764, %v1772
  %v1777 = vmul.f32 %v1773, 1.442695
  %v1778 = vpow.pop %v1777
  %v1779 = vmul.f32 %v1774, 1.442695
  %v1780 = vpow.pop %v1779
  %v1781 = vmul.f32 %v1775, 1.442695
  %v1782 = vpow.pop %v1781
  %v1783 = vmul.f32 %v1776, 1.442695
  %v1784 = vpow.pop %v1783
  %1785 = vadd.xlane.f32.xlu0 %v1778
  %v1786 = vpop.xlane.xlu0 %1785
  %1787 = vadd.xlane.f32.xlu0 %v1780
  %v1788 = vpop.xlane.xlu0 %1787
  %1789 = vadd.xlane.f32.xlu0 %v1782
  %v1790 = vpop.xlane.xlu0 %1789
  %1791 = vadd.xlane.f32.xlu0 %v1784
  %v1792 = vpop.xlane.xlu0 %1791
  %v1793 = vrcp.pop %v1786
  %v1794 = vmul.f32 %v1786, %v1793
  %v1795 = vsub.f32 1.0, %v1794
  %v1796 = vmul.f32 %v1793, %v1795
  %v1797 = vadd.f32 %v1793, %v1796
  %vm1798 = vweird.f32 %v1786
  %vm1799 = vweird.f32 %v1793
  %vm1800 = vmor %vm1798, %vm1799
  %v1801 = vsel %vm1800, %v1793, %v1797
  %v1802 = vand.u32 2147483647, %v1786
  %vm1803 = vcmp.eq.f32.partialorder %v1802, 8.507059e+37
  %v1804 = vand.u32 %v1786, 2147483648
  %v1805 = vor.u32 1.1754944e-38, %v1804
  %v1806 = vsel %vm1803, %v1805, %v1801
  %v1807 = vmul.f32 %v1778, %v1806
  %v1808 = vrcp.pop %v1788
  %v1809 = vmul.f32 %v1788, %v1808
  %v1810 = vsub.f32 1.0, %v1809
  %v1811 = vmul.f32 %v1808, %v1810
  %v1812 = vadd.f32 %v1808, %v1811
  %vm1813 = vweird.f32 %v1788
  %vm1814 = vweird.f32 %v1808
  %vm1815 = vmor %vm1813, %vm1814
  %v1816 = vsel %vm1815, %v1808, %v1812
  %v1817 = vand.u32 2147483647, %v1788
  %vm1818 = vcmp.eq.f32.partialorder %v1817, 8.507059e+37
  %v1819 = vand.u32 %v1788, 2147483648
  %v1820 = vor.u32 1.1754944e-38, %v1819
  %v1821 = vsel %vm1818, %v1820, %v1816
  %v1822 = vmul.f32 %v1780, %v1821
  %v1823 = vrcp.pop %v1790
  %v1824 = vmul.f32 %v1790, %v1823
  %v1825 = vsub.f32 1.0, %v1824
  %v1826 = vmul.f32 %v1823, %v1825
  %v1827 = vadd.f32 %v1823, %v1826
  %vm1828 = vweird.f32 %v1790
  %vm1829 = vweird.f32 %v1823
  %vm1830 = vmor %vm1828, %vm1829
  %v1831 = vsel %vm1830, %v1823, %v1827
  %v1832 = vand.u32 2147483647, %v1790
  %vm1833 = vcmp.eq.f32.partialorder %v1832, 8.507059e+37
  %v1834 = vand.u32 %v1790, 2147483648
  %v1835 = vor.u32 1.1754944e-38, %v1834
  %v1836 = vsel %vm1833, %v1835, %v1831
  %v1837 = vmul.f32 %v1782, %v1836
  %v1838 = vrcp.pop %v1792
  %v1839 = vmul.f32 %v1792, %v1838
  %v1840 = vsub.f32 1.0, %v1839
  %v1841 = vmul.f32 %v1838, %v1840
  %v1842 = vadd.f32 %v1838, %v1841
  %vm1843 = vweird.f32 %v1792
  %vm1844 = vweird.f32 %v1838
  %vm1845 = vmor %vm1843, %vm1844
  %v1846 = vsel %vm1845, %v1838, %v1842
  %v1847 = vand.u32 2147483647, %v1792
  %vm1848 = vcmp.eq.f32.partialorder %v1847, 8.507059e+37
  %v1849 = vand.u32 %v1792, 2147483648
  %v1850 = vor.u32 1.1754944e-38, %v1849
  %v1851 = vsel %vm1848, %v1850, %v1846
  %v1852 = vmul.f32 %v1784, %v1851
  %v1853 = vadd.f32 %v1656, %v1807
  %v1854 = vadd.f32 %v1657, %v1822
  %v1855 = vadd.f32 %v1658, %v1837
  %v1856 = vadd.f32 %v1659, %v1852
  %v1857 = vmul.f32 %v98, %v1668
  %v1858 = vmul.f32 %v98, %v1669
  %v1859 = vmul.f32 %v98, %v1670
  %v1860 = vmul.f32 %v98, %v1671
  %v1861 = vmul.f32 %v100, %v1708
  %v1862 = vmul.f32 %v100, %v1709
  %v1863 = vmul.f32 %v100, %v1710
  %v1864 = vmul.f32 %v100, %v1711
  %v1865 = vadd.f32 %v1857, %v1861
  %v1866 = vadd.f32 %v1858, %v1862
  %v1867 = vadd.f32 %v1859, %v1863
  %v1868 = vadd.f32 %v1860, %v1864
  %v1869 = vmul.f32 %v1865, 1.8
  %v1870 = vmul.f32 %v1866, 1.8
  %v1871 = vmul.f32 %v1867, 1.8
  %v1872 = vmul.f32 %v1868, 1.8
  %v1873 = vadd.f32 %v1869, 0.01
  %v1874 = vadd.f32 %v1870, 0.01
  %v1875 = vadd.f32 %v1871, 0.01
  %v1876 = vadd.f32 %v1872, 0.01
  %v1877 = vmul.f32 %v1692, %v105
  %v1878 = vmul.f32 %v1693, %v105
  %v1879 = vmul.f32 %v1694, %v105
  %v1880 = vmul.f32 %v1695, %v105
  %v1881 = vadd.f32 %v1877, %v94
  %v1882 = vadd.f32 %v1878, %v95
  %v1883 = vadd.f32 %v1879, %v96
  %v1884 = vadd.f32 %v1880, %v97
  %v1885 = vmul.f32 %v1873, %v1708
  %v1886 = vmul.f32 %v1874, %v1709
  %v1887 = vmul.f32 %v1875, %v1710
  %v1888 = vmul.f32 %v1876, %v1711
  %v1889 = vsub.f32 %v1881, %v1885
  %v1890 = vsub.f32 %v1882, %v1886
  %v1891 = vsub.f32 %v1883, %v1887
  %v1892 = vsub.f32 %v1884, %v1888
  %v1893 = vsub.f32 %v1889, %v1873
  %v1894 = vsub.f32 %v1890, %v1874
  %v1895 = vsub.f32 %v1891, %v1875
  %v1896 = vsub.f32 %v1892, %v1876
  %vm1897 = vcmp.gt.f32.partialorder %v1893, 0.0
  %vm1898 = vcmp.gt.f32.partialorder %v1894, 0.0
  %vm1899 = vcmp.gt.f32.partialorder %v1895, 0.0
  %vm1900 = vcmp.gt.f32.partialorder %v1896, 0.0
  %v1901 = vsel %vm1897, 1, 0
  %v1902 = vsel %vm1898, 1, 0
  %v1903 = vsel %vm1899, 1, 0
  %v1904 = vsel %vm1900, 1, 0
  %v1905 = vcvt.s32.f32 %v1901
  %v1906 = vcvt.s32.f32 %v1902
  %v1907 = vcvt.s32.f32 %v1903
  %v1908 = vcvt.s32.f32 %v1904
  %v1910 = vsel %vm136, %v1905, 0
  %v1913 = vsel %vm136, %v1906, 0
  %v1916 = vsel %vm136, %v1907, 0
  %v1919 = vsel %vm136, %v1908, 0
  %1921 = vmatpush.msra.mxu0 0.0
  %1922 = vmatpush.msra.mxu0 0.0
  %1923 = vmatpush.msra.mxu0 0.0
  %1924 = vmatpush.msra.mxu0 0.0
  %1925 = vmatpush.msra.mxu0 0.0
  %1926 = vmatpush.msra.mxu0 0.0
  %1927 = vmatpush.msra.mxu0 0.0
  %1928 = vmatpush.msra.mxu0 0.0
  %1929 = vmatpush.msra.mxu0 %v40
  %1930 = vmatpush.msra.mxu0 %v39
  %1931 = vmatpush.msra.mxu0 %v38
  %1932 = vmatpush.msra.mxu0 %v37
  %1933 = vmatpush.msra.mxu0 %v36
  %1934 = vmatpush.msra.mxu0 %v35
  %1935 = vmatpush.msra.mxu0 %v34
  %1936 = vmatpush.msra.mxu0 %v33
  %1937 = vmatmul.f32.gmra.mxu0 %v1910
  %v1938 = vpop.f32.mrf.mxu0
  %v1939 = vadd.f32 %v135, %v1938
  %1940 = vmatmul.f32.gmra.mxu0 %v1913
  %v1941 = vpop.f32.mrf.mxu0
  %v1942 = vadd.f32 %v135, %v1941
  %1943 = vmatmul.f32.gmra.mxu0 %v1916
  %v1944 = vpop.f32.mrf.mxu0
  %v1945 = vadd.f32 %v135, %v1944
  %1946 = vmatmul.f32.gmra.mxu0 %v1919
  %v1947 = vpop.f32.mrf.mxu0
  %v1948 = vadd.f32 %v135, %v1947
  %1949 = vdwg.mxu0
  %v1950 = vmul.f32 %v1761, %v178
  %v1951 = vmul.f32 %v1762, %v178
  %v1952 = vmul.f32 %v1763, %v178
  %v1953 = vmul.f32 %v1764, %v178
  %v1954 = vmul.f32 %v183, %v1939
  %v1955 = vmul.f32 %v183, %v1942
  %v1956 = vmul.f32 %v183, %v1945
  %v1957 = vmul.f32 %v183, %v1948
  %v1958 = vadd.f32 %v1950, %v1954
  %v1959 = vadd.f32 %v1951, %v1955
  %v1960 = vadd.f32 %v1952, %v1956
  %v1961 = vadd.f32 %v1953, %v1957
  %1962 = vmax.xlane.f32.xlu0 %v1958
  %v1963 = vpop.xlane.xlu0 %1962
  %1964 = vmax.xlane.f32.xlu0 %v1959
  %v1965 = vpop.xlane.xlu0 %1964
  %1966 = vmax.xlane.f32.xlu0 %v1960
  %v1967 = vpop.xlane.xlu0 %1966
  %1968 = vmax.xlane.f32.xlu0 %v1961
  %v1969 = vpop.xlane.xlu0 %1968
  %v1970 = vsub.f32 %v1958, %v1963
  %v1971 = vsub.f32 %v1959, %v1965
  %v1972 = vsub.f32 %v1960, %v1967
  %v1973 = vsub.f32 %v1961, %v1969
  %v1974 = vmul.f32 %v1970, 1.442695
  %v1975 = vpow.pop %v1974
  %v1976 = vmul.f32 %v1971, 1.442695
  %v1977 = vpow.pop %v1976
  %v1978 = vmul.f32 %v1972, 1.442695
  %v1979 = vpow.pop %v1978
  %v1980 = vmul.f32 %v1973, 1.442695
  %v1981 = vpow.pop %v1980
  %1982 = vadd.xlane.f32.xlu0 %v1975
  %v1983 = vpop.xlane.xlu0 %1982
  %1984 = vadd.xlane.f32.xlu0 %v1977
  %v1985 = vpop.xlane.xlu0 %1984
  %1986 = vadd.xlane.f32.xlu0 %v1979
  %v1987 = vpop.xlane.xlu0 %1986
  %1988 = vadd.xlane.f32.xlu0 %v1981
  %v1989 = vpop.xlane.xlu0 %1988
  %v1990 = vrcp.pop %v1983
  %v1991 = vmul.f32 %v1983, %v1990
  %v1992 = vsub.f32 1.0, %v1991
  %v1993 = vmul.f32 %v1990, %v1992
  %v1994 = vadd.f32 %v1990, %v1993
  %vm1995 = vweird.f32 %v1983
  %vm1996 = vweird.f32 %v1990
  %vm1997 = vmor %vm1995, %vm1996
  %v1998 = vsel %vm1997, %v1990, %v1994
  %v1999 = vand.u32 2147483647, %v1983
  %vm2000 = vcmp.eq.f32.partialorder %v1999, 8.507059e+37
  %v2001 = vand.u32 %v1983, 2147483648
  %v2002 = vor.u32 1.1754944e-38, %v2001
  %v2003 = vsel %vm2000, %v2002, %v1998
  %v2004 = vmul.f32 %v1975, %v2003
  %v2005 = vrcp.pop %v1985
  %v2006 = vmul.f32 %v1985, %v2005
  %v2007 = vsub.f32 1.0, %v2006
  %v2008 = vmul.f32 %v2005, %v2007
  %v2009 = vadd.f32 %v2005, %v2008
  %vm2010 = vweird.f32 %v1985
  %vm2011 = vweird.f32 %v2005
  %vm2012 = vmor %vm2010, %vm2011
  %v2013 = vsel %vm2012, %v2005, %v2009
  %v2014 = vand.u32 2147483647, %v1985
  %vm2015 = vcmp.eq.f32.partialorder %v2014, 8.507059e+37
  %v2016 = vand.u32 %v1985, 2147483648
  %v2017 = vor.u32 1.1754944e-38, %v2016
  %v2018 = vsel %vm2015, %v2017, %v2013
  %v2019 = vmul.f32 %v1977, %v2018
  %v2020 = vrcp.pop %v1987
  %v2021 = vmul.f32 %v1987, %v2020
  %v2022 = vsub.f32 1.0, %v2021
  %v2023 = vmul.f32 %v2020, %v2022
  %v2024 = vadd.f32 %v2020, %v2023
  %vm2025 = vweird.f32 %v1987
  %vm2026 = vweird.f32 %v2020
  %vm2027 = vmor %vm2025, %vm2026
  %v2028 = vsel %vm2027, %v2020, %v2024
  %v2029 = vand.u32 2147483647, %v1987
  %vm2030 = vcmp.eq.f32.partialorder %v2029, 8.507059e+37
  %v2031 = vand.u32 %v1987, 2147483648
  %v2032 = vor.u32 1.1754944e-38, %v2031
  %v2033 = vsel %vm2030, %v2032, %v2028
  %v2034 = vmul.f32 %v1979, %v2033
  %v2035 = vrcp.pop %v1989
  %v2036 = vmul.f32 %v1989, %v2035
  %v2037 = vsub.f32 1.0, %v2036
  %v2038 = vmul.f32 %v2035, %v2037
  %v2039 = vadd.f32 %v2035, %v2038
  %vm2040 = vweird.f32 %v1989
  %vm2041 = vweird.f32 %v2035
  %vm2042 = vmor %vm2040, %vm2041
  %v2043 = vsel %vm2042, %v2035, %v2039
  %v2044 = vand.u32 2147483647, %v1989
  %vm2045 = vcmp.eq.f32.partialorder %v2044, 8.507059e+37
  %v2046 = vand.u32 %v1989, 2147483648
  %v2047 = vor.u32 1.1754944e-38, %v2046
  %v2048 = vsel %vm2045, %v2047, %v2043
  %v2049 = vmul.f32 %v1981, %v2048
  %v2050 = vadd.f32 %v1853, %v2004
  %v2051 = vadd.f32 %v1854, %v2019
  %v2052 = vadd.f32 %v1855, %v2034
  %v2053 = vadd.f32 %v1856, %v2049
  %v2054 = vmul.f32 %v98, %v1865
  %v2055 = vmul.f32 %v98, %v1866
  %v2056 = vmul.f32 %v98, %v1867
  %v2057 = vmul.f32 %v98, %v1868
  %v2058 = vmul.f32 %v100, %v1905
  %v2059 = vmul.f32 %v100, %v1906
  %v2060 = vmul.f32 %v100, %v1907
  %v2061 = vmul.f32 %v100, %v1908
  %v2062 = vadd.f32 %v2054, %v2058
  %v2063 = vadd.f32 %v2055, %v2059
  %v2064 = vadd.f32 %v2056, %v2060
  %v2065 = vadd.f32 %v2057, %v2061
  %v2066 = vmul.f32 %v2062, 1.8
  %v2067 = vmul.f32 %v2063, 1.8
  %v2068 = vmul.f32 %v2064, 1.8
  %v2069 = vmul.f32 %v2065, 1.8
  %v2070 = vadd.f32 %v2066, 0.01
  %v2071 = vadd.f32 %v2067, 0.01
  %v2072 = vadd.f32 %v2068, 0.01
  %v2073 = vadd.f32 %v2069, 0.01
  %v2074 = vmul.f32 %v1889, %v105
  %v2075 = vmul.f32 %v1890, %v105
  %v2076 = vmul.f32 %v1891, %v105
  %v2077 = vmul.f32 %v1892, %v105
  %v2078 = vadd.f32 %v2074, %v94
  %v2079 = vadd.f32 %v2075, %v95
  %v2080 = vadd.f32 %v2076, %v96
  %v2081 = vadd.f32 %v2077, %v97
  %v2082 = vmul.f32 %v2070, %v1905
  %v2083 = vmul.f32 %v2071, %v1906
  %v2084 = vmul.f32 %v2072, %v1907
  %v2085 = vmul.f32 %v2073, %v1908
  %v2086 = vsub.f32 %v2078, %v2082
  %v2087 = vsub.f32 %v2079, %v2083
  %v2088 = vsub.f32 %v2080, %v2084
  %v2089 = vsub.f32 %v2081, %v2085
  %v2090 = vsub.f32 %v2086, %v2070
  %v2091 = vsub.f32 %v2087, %v2071
  %v2092 = vsub.f32 %v2088, %v2072
  %v2093 = vsub.f32 %v2089, %v2073
  %vm2094 = vcmp.gt.f32.partialorder %v2090, 0.0
  %vm2095 = vcmp.gt.f32.partialorder %v2091, 0.0
  %vm2096 = vcmp.gt.f32.partialorder %v2092, 0.0
  %vm2097 = vcmp.gt.f32.partialorder %v2093, 0.0
  %v2098 = vsel %vm2094, 1, 0
  %v2099 = vsel %vm2095, 1, 0
  %v2100 = vsel %vm2096, 1, 0
  %v2101 = vsel %vm2097, 1, 0
  %v2102 = vcvt.s32.f32 %v2098
  %v2103 = vcvt.s32.f32 %v2099
  %v2104 = vcvt.s32.f32 %v2100
  %v2105 = vcvt.s32.f32 %v2101
  %v2107 = vsel %vm136, %v2102, 0
  %v2110 = vsel %vm136, %v2103, 0
  %v2113 = vsel %vm136, %v2104, 0
  %v2116 = vsel %vm136, %v2105, 0
  %2118 = vmatpush.msra.mxu0 0.0
  %2119 = vmatpush.msra.mxu0 0.0
  %2120 = vmatpush.msra.mxu0 0.0
  %2121 = vmatpush.msra.mxu0 0.0
  %2122 = vmatpush.msra.mxu0 0.0
  %2123 = vmatpush.msra.mxu0 0.0
  %2124 = vmatpush.msra.mxu0 0.0
  %2125 = vmatpush.msra.mxu0 0.0
  %2126 = vmatpush.msra.mxu0 %v40
  %2127 = vmatpush.msra.mxu0 %v39
  %2128 = vmatpush.msra.mxu0 %v38
  %2129 = vmatpush.msra.mxu0 %v37
  %2130 = vmatpush.msra.mxu0 %v36
  %2131 = vmatpush.msra.mxu0 %v35
  %2132 = vmatpush.msra.mxu0 %v34
  %2133 = vmatpush.msra.mxu0 %v33
  %2134 = vmatmul.f32.gmra.mxu0 %v2107
  %v2135 = vpop.f32.mrf.mxu0
  %v2136 = vadd.f32 %v135, %v2135
  %2137 = vmatmul.f32.gmra.mxu0 %v2110
  %v2138 = vpop.f32.mrf.mxu0
  %v2139 = vadd.f32 %v135, %v2138
  %2140 = vmatmul.f32.gmra.mxu0 %v2113
  %v2141 = vpop.f32.mrf.mxu0
  %v2142 = vadd.f32 %v135, %v2141
  %2143 = vmatmul.f32.gmra.mxu0 %v2116
  %v2144 = vpop.f32.mrf.mxu0
  %v2145 = vadd.f32 %v135, %v2144
  %2146 = vdwg.mxu0
  %v2147 = vmul.f32 %v1958, %v178
  %v2148 = vmul.f32 %v1959, %v178
  %v2149 = vmul.f32 %v1960, %v178
  %v2150 = vmul.f32 %v1961, %v178
  %v2151 = vmul.f32 %v183, %v2136
  %v2152 = vmul.f32 %v183, %v2139
  %v2153 = vmul.f32 %v183, %v2142
  %v2154 = vmul.f32 %v183, %v2145
  %v2155 = vadd.f32 %v2147, %v2151
  %v2156 = vadd.f32 %v2148, %v2152
  %v2157 = vadd.f32 %v2149, %v2153
  %v2158 = vadd.f32 %v2150, %v2154
  %2159 = vmax.xlane.f32.xlu0 %v2155
  %v2160 = vpop.xlane.xlu0 %2159
  %2161 = vmax.xlane.f32.xlu0 %v2156
  %v2162 = vpop.xlane.xlu0 %2161
  %2163 = vmax.xlane.f32.xlu0 %v2157
  %v2164 = vpop.xlane.xlu0 %2163
  %2165 = vmax.xlane.f32.xlu0 %v2158
  %v2166 = vpop.xlane.xlu0 %2165
  %v2167 = vsub.f32 %v2155, %v2160
  %v2168 = vsub.f32 %v2156, %v2162
  %v2169 = vsub.f32 %v2157, %v2164
  %v2170 = vsub.f32 %v2158, %v2166
  %v2171 = vmul.f32 %v2167, 1.442695
  %v2172 = vpow.pop %v2171
  %v2173 = vmul.f32 %v2168, 1.442695
  %v2174 = vpow.pop %v2173
  %v2175 = vmul.f32 %v2169, 1.442695
  %v2176 = vpow.pop %v2175
  %v2177 = vmul.f32 %v2170, 1.442695
  %v2178 = vpow.pop %v2177
  %2179 = vadd.xlane.f32.xlu0 %v2172
  %v2180 = vpop.xlane.xlu0 %2179
  %2181 = vadd.xlane.f32.xlu0 %v2174
  %v2182 = vpop.xlane.xlu0 %2181
  %2183 = vadd.xlane.f32.xlu0 %v2176
  %v2184 = vpop.xlane.xlu0 %2183
  %2185 = vadd.xlane.f32.xlu0 %v2178
  %v2186 = vpop.xlane.xlu0 %2185
  %v2187 = vrcp.pop %v2180
  %v2188 = vmul.f32 %v2180, %v2187
  %v2189 = vsub.f32 1.0, %v2188
  %v2190 = vmul.f32 %v2187, %v2189
  %v2191 = vadd.f32 %v2187, %v2190
  %vm2192 = vweird.f32 %v2180
  %vm2193 = vweird.f32 %v2187
  %vm2194 = vmor %vm2192, %vm2193
  %v2195 = vsel %vm2194, %v2187, %v2191
  %v2196 = vand.u32 2147483647, %v2180
  %vm2197 = vcmp.eq.f32.partialorder %v2196, 8.507059e+37
  %v2198 = vand.u32 %v2180, 2147483648
  %v2199 = vor.u32 1.1754944e-38, %v2198
  %v2200 = vsel %vm2197, %v2199, %v2195
  %v2201 = vmul.f32 %v2172, %v2200
  %v2202 = vrcp.pop %v2182
  %v2203 = vmul.f32 %v2182, %v2202
  %v2204 = vsub.f32 1.0, %v2203
  %v2205 = vmul.f32 %v2202, %v2204
  %v2206 = vadd.f32 %v2202, %v2205
  %vm2207 = vweird.f32 %v2182
  %vm2208 = vweird.f32 %v2202
  %vm2209 = vmor %vm2207, %vm2208
  %v2210 = vsel %vm2209, %v2202, %v2206
  %v2211 = vand.u32 2147483647, %v2182
  %vm2212 = vcmp.eq.f32.partialorder %v2211, 8.507059e+37
  %v2213 = vand.u32 %v2182, 2147483648
  %v2214 = vor.u32 1.1754944e-38, %v2213
  %v2215 = vsel %vm2212, %v2214, %v2210
  %v2216 = vmul.f32 %v2174, %v2215
  %v2217 = vrcp.pop %v2184
  %v2218 = vmul.f32 %v2184, %v2217
  %v2219 = vsub.f32 1.0, %v2218
  %v2220 = vmul.f32 %v2217, %v2219
  %v2221 = vadd.f32 %v2217, %v2220
  %vm2222 = vweird.f32 %v2184
  %vm2223 = vweird.f32 %v2217
  %vm2224 = vmor %vm2222, %vm2223
  %v2225 = vsel %vm2224, %v2217, %v2221
  %v2226 = vand.u32 2147483647, %v2184
  %vm2227 = vcmp.eq.f32.partialorder %v2226, 8.507059e+37
  %v2228 = vand.u32 %v2184, 2147483648
  %v2229 = vor.u32 1.1754944e-38, %v2228
  %v2230 = vsel %vm2227, %v2229, %v2225
  %v2231 = vmul.f32 %v2176, %v2230
  %v2232 = vrcp.pop %v2186
  %v2233 = vmul.f32 %v2186, %v2232
  %v2234 = vsub.f32 1.0, %v2233
  %v2235 = vmul.f32 %v2232, %v2234
  %v2236 = vadd.f32 %v2232, %v2235
  %vm2237 = vweird.f32 %v2186
  %vm2238 = vweird.f32 %v2232
  %vm2239 = vmor %vm2237, %vm2238
  %v2240 = vsel %vm2239, %v2232, %v2236
  %v2241 = vand.u32 2147483647, %v2186
  %vm2242 = vcmp.eq.f32.partialorder %v2241, 8.507059e+37
  %v2243 = vand.u32 %v2186, 2147483648
  %v2244 = vor.u32 1.1754944e-38, %v2243
  %v2245 = vsel %vm2242, %v2244, %v2240
  %v2246 = vmul.f32 %v2178, %v2245
  %v2247 = vadd.f32 %v2050, %v2201
  %v2248 = vadd.f32 %v2051, %v2216
  %v2249 = vadd.f32 %v2052, %v2231
  %v2250 = vadd.f32 %v2053, %v2246
  %v2251 = vmul.f32 %v98, %v2062
  %v2252 = vmul.f32 %v98, %v2063
  %v2253 = vmul.f32 %v98, %v2064
  %v2254 = vmul.f32 %v98, %v2065
  %v2255 = vmul.f32 %v100, %v2102
  %v2256 = vmul.f32 %v100, %v2103
  %v2257 = vmul.f32 %v100, %v2104
  %v2258 = vmul.f32 %v100, %v2105
  %v2259 = vadd.f32 %v2251, %v2255
  %v2260 = vadd.f32 %v2252, %v2256
  %v2261 = vadd.f32 %v2253, %v2257
  %v2262 = vadd.f32 %v2254, %v2258
  %v2263 = vmul.f32 %v2259, 1.8
  %v2264 = vmul.f32 %v2260, 1.8
  %v2265 = vmul.f32 %v2261, 1.8
  %v2266 = vmul.f32 %v2262, 1.8
  %v2267 = vadd.f32 %v2263, 0.01
  %v2268 = vadd.f32 %v2264, 0.01
  %v2269 = vadd.f32 %v2265, 0.01
  %v2270 = vadd.f32 %v2266, 0.01
  %v2271 = vmul.f32 %v2086, %v105
  %v2272 = vmul.f32 %v2087, %v105
  %v2273 = vmul.f32 %v2088, %v105
  %v2274 = vmul.f32 %v2089, %v105
  %v2275 = vadd.f32 %v2271, %v94
  %v2276 = vadd.f32 %v2272, %v95
  %v2277 = vadd.f32 %v2273, %v96
  %v2278 = vadd.f32 %v2274, %v97
  %v2279 = vmul.f32 %v2267, %v2102
  %v2280 = vmul.f32 %v2268, %v2103
  %v2281 = vmul.f32 %v2269, %v2104
  %v2282 = vmul.f32 %v2270, %v2105
  %v2283 = vsub.f32 %v2275, %v2279
  %v2284 = vsub.f32 %v2276, %v2280
  %v2285 = vsub.f32 %v2277, %v2281
  %v2286 = vsub.f32 %v2278, %v2282
  %v2287 = vsub.f32 %v2283, %v2267
  %v2288 = vsub.f32 %v2284, %v2268
  %v2289 = vsub.f32 %v2285, %v2269
  %v2290 = vsub.f32 %v2286, %v2270
  %vm2291 = vcmp.gt.f32.partialorder %v2287, 0.0
  %vm2292 = vcmp.gt.f32.partialorder %v2288, 0.0
  %vm2293 = vcmp.gt.f32.partialorder %v2289, 0.0
  %vm2294 = vcmp.gt.f32.partialorder %v2290, 0.0
  %v2295 = vsel %vm2291, 1, 0
  %v2296 = vsel %vm2292, 1, 0
  %v2297 = vsel %vm2293, 1, 0
  %v2298 = vsel %vm2294, 1, 0
  %v2299 = vcvt.s32.f32 %v2295
  %v2300 = vcvt.s32.f32 %v2296
  %v2301 = vcvt.s32.f32 %v2297
  %v2302 = vcvt.s32.f32 %v2298
  %v2304 = vsel %vm136, %v2299, 0
  %v2307 = vsel %vm136, %v2300, 0
  %v2310 = vsel %vm136, %v2301, 0
  %v2313 = vsel %vm136, %v2302, 0
  %2315 = vmatpush.msra.mxu0 0.0
  %2316 = vmatpush.msra.mxu0 0.0
  %2317 = vmatpush.msra.mxu0 0.0
  %2318 = vmatpush.msra.mxu0 0.0
  %2319 = vmatpush.msra.mxu0 0.0
  %2320 = vmatpush.msra.mxu0 0.0
  %2321 = vmatpush.msra.mxu0 0.0
  %2322 = vmatpush.msra.mxu0 0.0
  %2323 = vmatpush.msra.mxu0 %v40
  %2324 = vmatpush.msra.mxu0 %v39
  %2325 = vmatpush.msra.mxu0 %v38
  %2326 = vmatpush.msra.mxu0 %v37
  %2327 = vmatpush.msra.mxu0 %v36
  %2328 = vmatpush.msra.mxu0 %v35
  %2329 = vmatpush.msra.mxu0 %v34
  %2330 = vmatpush.msra.mxu0 %v33
  %2331 = vmatmul.f32.gmra.mxu0 %v2304
  %v2332 = vpop.f32.mrf.mxu0
  %v2333 = vadd.f32 %v135, %v2332
  %2334 = vmatmul.f32.gmra.mxu0 %v2307
  %v2335 = vpop.f32.mrf.mxu0
  %v2336 = vadd.f32 %v135, %v2335
  %2337 = vmatmul.f32.gmra.mxu0 %v2310
  %v2338 = vpop.f32.mrf.mxu0
  %v2339 = vadd.f32 %v135, %v2338
  %2340 = vmatmul.f32.gmra.mxu0 %v2313
  %v2341 = vpop.f32.mrf.mxu0
  %v2342 = vadd.f32 %v135, %v2341
  %2343 = vdwg.mxu0
  %v2344 = vmul.f32 %v2155, %v178
  %v2345 = vmul.f32 %v2156, %v178
  %v2346 = vmul.f32 %v2157, %v178
  %v2347 = vmul.f32 %v2158, %v178
  %v2348 = vmul.f32 %v183, %v2333
  %v2349 = vmul.f32 %v183, %v2336
  %v2350 = vmul.f32 %v183, %v2339
  %v2351 = vmul.f32 %v183, %v2342
  %v2352 = vadd.f32 %v2344, %v2348
  %v2353 = vadd.f32 %v2345, %v2349
  %v2354 = vadd.f32 %v2346, %v2350
  %v2355 = vadd.f32 %v2347, %v2351
  %2356 = vmax.xlane.f32.xlu0 %v2352
  %v2357 = vpop.xlane.xlu0 %2356
  %2358 = vmax.xlane.f32.xlu0 %v2353
  %v2359 = vpop.xlane.xlu0 %2358
  %2360 = vmax.xlane.f32.xlu0 %v2354
  %v2361 = vpop.xlane.xlu0 %2360
  %2362 = vmax.xlane.f32.xlu0 %v2355
  %v2363 = vpop.xlane.xlu0 %2362
  %v2364 = vsub.f32 %v2352, %v2357
  %v2365 = vsub.f32 %v2353, %v2359
  %v2366 = vsub.f32 %v2354, %v2361
  %v2367 = vsub.f32 %v2355, %v2363
  %v2368 = vmul.f32 %v2364, 1.442695
  %v2369 = vpow.pop %v2368
  %v2370 = vmul.f32 %v2365, 1.442695
  %v2371 = vpow.pop %v2370
  %v2372 = vmul.f32 %v2366, 1.442695
  %v2373 = vpow.pop %v2372
  %v2374 = vmul.f32 %v2367, 1.442695
  %v2375 = vpow.pop %v2374
  %2376 = vadd.xlane.f32.xlu0 %v2369
  %v2377 = vpop.xlane.xlu0 %2376
  %2378 = vadd.xlane.f32.xlu0 %v2371
  %v2379 = vpop.xlane.xlu0 %2378
  %2380 = vadd.xlane.f32.xlu0 %v2373
  %v2381 = vpop.xlane.xlu0 %2380
  %2382 = vadd.xlane.f32.xlu0 %v2375
  %v2383 = vpop.xlane.xlu0 %2382
  %v2384 = vrcp.pop %v2377
  %v2385 = vmul.f32 %v2377, %v2384
  %v2386 = vsub.f32 1.0, %v2385
  %v2387 = vmul.f32 %v2384, %v2386
  %v2388 = vadd.f32 %v2384, %v2387
  %vm2389 = vweird.f32 %v2377
  %vm2390 = vweird.f32 %v2384
  %vm2391 = vmor %vm2389, %vm2390
  %v2392 = vsel %vm2391, %v2384, %v2388
  %v2393 = vand.u32 2147483647, %v2377
  %vm2394 = vcmp.eq.f32.partialorder %v2393, 8.507059e+37
  %v2395 = vand.u32 %v2377, 2147483648
  %v2396 = vor.u32 1.1754944e-38, %v2395
  %v2397 = vsel %vm2394, %v2396, %v2392
  %v2398 = vmul.f32 %v2369, %v2397
  %v2399 = vrcp.pop %v2379
  %v2400 = vmul.f32 %v2379, %v2399
  %v2401 = vsub.f32 1.0, %v2400
  %v2402 = vmul.f32 %v2399, %v2401
  %v2403 = vadd.f32 %v2399, %v2402
  %vm2404 = vweird.f32 %v2379
  %vm2405 = vweird.f32 %v2399
  %vm2406 = vmor %vm2404, %vm2405
  %v2407 = vsel %vm2406, %v2399, %v2403
  %v2408 = vand.u32 2147483647, %v2379
  %vm2409 = vcmp.eq.f32.partialorder %v2408, 8.507059e+37
  %v2410 = vand.u32 %v2379, 2147483648
  %v2411 = vor.u32 1.1754944e-38, %v2410
  %v2412 = vsel %vm2409, %v2411, %v2407
  %v2413 = vmul.f32 %v2371, %v2412
  %v2414 = vrcp.pop %v2381
  %v2415 = vmul.f32 %v2381, %v2414
  %v2416 = vsub.f32 1.0, %v2415
  %v2417 = vmul.f32 %v2414, %v2416
  %v2418 = vadd.f32 %v2414, %v2417
  %vm2419 = vweird.f32 %v2381
  %vm2420 = vweird.f32 %v2414
  %vm2421 = vmor %vm2419, %vm2420
  %v2422 = vsel %vm2421, %v2414, %v2418
  %v2423 = vand.u32 2147483647, %v2381
  %vm2424 = vcmp.eq.f32.partialorder %v2423, 8.507059e+37
  %v2425 = vand.u32 %v2381, 2147483648
  %v2426 = vor.u32 1.1754944e-38, %v2425
  %v2427 = vsel %vm2424, %v2426, %v2422
  %v2428 = vmul.f32 %v2373, %v2427
  %v2429 = vrcp.pop %v2383
  %v2430 = vmul.f32 %v2383, %v2429
  %v2431 = vsub.f32 1.0, %v2430
  %v2432 = vmul.f32 %v2429, %v2431
  %v2433 = vadd.f32 %v2429, %v2432
  %vm2434 = vweird.f32 %v2383
  %vm2435 = vweird.f32 %v2429
  %vm2436 = vmor %vm2434, %vm2435
  %v2437 = vsel %vm2436, %v2429, %v2433
  %v2438 = vand.u32 2147483647, %v2383
  %vm2439 = vcmp.eq.f32.partialorder %v2438, 8.507059e+37
  %v2440 = vand.u32 %v2383, 2147483648
  %v2441 = vor.u32 1.1754944e-38, %v2440
  %v2442 = vsel %vm2439, %v2441, %v2437
  %v2443 = vmul.f32 %v2375, %v2442
  %v2444 = vadd.f32 %v2247, %v2398
  %v2445 = vadd.f32 %v2248, %v2413
  %v2446 = vadd.f32 %v2249, %v2428
  %v2447 = vadd.f32 %v2250, %v2443
  %v2448 = vmul.f32 %v98, %v2259
  %v2449 = vmul.f32 %v98, %v2260
  %v2450 = vmul.f32 %v98, %v2261
  %v2451 = vmul.f32 %v98, %v2262
  %v2452 = vmul.f32 %v100, %v2299
  %v2453 = vmul.f32 %v100, %v2300
  %v2454 = vmul.f32 %v100, %v2301
  %v2455 = vmul.f32 %v100, %v2302
  %v2456 = vadd.f32 %v2448, %v2452
  %v2457 = vadd.f32 %v2449, %v2453
  %v2458 = vadd.f32 %v2450, %v2454
  %v2459 = vadd.f32 %v2451, %v2455
  %v2460 = vmul.f32 %v2456, 1.8
  %v2461 = vmul.f32 %v2457, 1.8
  %v2462 = vmul.f32 %v2458, 1.8
  %v2463 = vmul.f32 %v2459, 1.8
  %v2464 = vadd.f32 %v2460, 0.01
  %v2465 = vadd.f32 %v2461, 0.01
  %v2466 = vadd.f32 %v2462, 0.01
  %v2467 = vadd.f32 %v2463, 0.01
  %v2468 = vmul.f32 %v2283, %v105
  %v2469 = vmul.f32 %v2284, %v105
  %v2470 = vmul.f32 %v2285, %v105
  %v2471 = vmul.f32 %v2286, %v105
  %v2472 = vadd.f32 %v2468, %v94
  %v2473 = vadd.f32 %v2469, %v95
  %v2474 = vadd.f32 %v2470, %v96
  %v2475 = vadd.f32 %v2471, %v97
  %v2476 = vmul.f32 %v2464, %v2299
  %v2477 = vmul.f32 %v2465, %v2300
  %v2478 = vmul.f32 %v2466, %v2301
  %v2479 = vmul.f32 %v2467, %v2302
  %v2480 = vsub.f32 %v2472, %v2476
  %v2481 = vsub.f32 %v2473, %v2477
  %v2482 = vsub.f32 %v2474, %v2478
  %v2483 = vsub.f32 %v2475, %v2479
  %v2484 = vsub.f32 %v2480, %v2464
  %v2485 = vsub.f32 %v2481, %v2465
  %v2486 = vsub.f32 %v2482, %v2466
  %v2487 = vsub.f32 %v2483, %v2467
  %vm2488 = vcmp.gt.f32.partialorder %v2484, 0.0
  %vm2489 = vcmp.gt.f32.partialorder %v2485, 0.0
  %vm2490 = vcmp.gt.f32.partialorder %v2486, 0.0
  %vm2491 = vcmp.gt.f32.partialorder %v2487, 0.0
  %v2492 = vsel %vm2488, 1, 0
  %v2493 = vsel %vm2489, 1, 0
  %v2494 = vsel %vm2490, 1, 0
  %v2495 = vsel %vm2491, 1, 0
  %v2496 = vcvt.s32.f32 %v2492
  %v2497 = vcvt.s32.f32 %v2493
  %v2498 = vcvt.s32.f32 %v2494
  %v2499 = vcvt.s32.f32 %v2495
  %v2501 = vsel %vm136, %v2496, 0
  %v2504 = vsel %vm136, %v2497, 0
  %v2507 = vsel %vm136, %v2498, 0
  %v2510 = vsel %vm136, %v2499, 0
  %2512 = vmatpush.msra.mxu0 0.0
  %2513 = vmatpush.msra.mxu0 0.0
  %2514 = vmatpush.msra.mxu0 0.0
  %2515 = vmatpush.msra.mxu0 0.0
  %2516 = vmatpush.msra.mxu0 0.0
  %2517 = vmatpush.msra.mxu0 0.0
  %2518 = vmatpush.msra.mxu0 0.0
  %2519 = vmatpush.msra.mxu0 0.0
  %2520 = vmatpush.msra.mxu0 %v40
  %2521 = vmatpush.msra.mxu0 %v39
  %2522 = vmatpush.msra.mxu0 %v38
  %2523 = vmatpush.msra.mxu0 %v37
  %2524 = vmatpush.msra.mxu0 %v36
  %2525 = vmatpush.msra.mxu0 %v35
  %2526 = vmatpush.msra.mxu0 %v34
  %2527 = vmatpush.msra.mxu0 %v33
  %2528 = vmatmul.f32.gmra.mxu0 %v2501
  %v2529 = vpop.f32.mrf.mxu0
  %v2530 = vadd.f32 %v135, %v2529
  %2531 = vmatmul.f32.gmra.mxu0 %v2504
  %v2532 = vpop.f32.mrf.mxu0
  %v2533 = vadd.f32 %v135, %v2532
  %2534 = vmatmul.f32.gmra.mxu0 %v2507
  %v2535 = vpop.f32.mrf.mxu0
  %v2536 = vadd.f32 %v135, %v2535
  %2537 = vmatmul.f32.gmra.mxu0 %v2510
  %v2538 = vpop.f32.mrf.mxu0
  %v2539 = vadd.f32 %v135, %v2538
  %2540 = vdwg.mxu0
  %v2541 = vmul.f32 %v2352, %v178
  %v2542 = vmul.f32 %v2353, %v178
  %v2543 = vmul.f32 %v2354, %v178
  %v2544 = vmul.f32 %v2355, %v178
  %v2545 = vmul.f32 %v183, %v2530
  %v2546 = vmul.f32 %v183, %v2533
  %v2547 = vmul.f32 %v183, %v2536
  %v2548 = vmul.f32 %v183, %v2539
  %v2549 = vadd.f32 %v2541, %v2545
  %v2550 = vadd.f32 %v2542, %v2546
  %v2551 = vadd.f32 %v2543, %v2547
  %v2552 = vadd.f32 %v2544, %v2548
  %2553 = vmax.xlane.f32.xlu0 %v2549
  %v2554 = vpop.xlane.xlu0 %2553
  %2555 = vmax.xlane.f32.xlu0 %v2550
  %v2556 = vpop.xlane.xlu0 %2555
  %2557 = vmax.xlane.f32.xlu0 %v2551
  %v2558 = vpop.xlane.xlu0 %2557
  %2559 = vmax.xlane.f32.xlu0 %v2552
  %v2560 = vpop.xlane.xlu0 %2559
  %v2561 = vsub.f32 %v2549, %v2554
  %v2562 = vsub.f32 %v2550, %v2556
  %v2563 = vsub.f32 %v2551, %v2558
  %v2564 = vsub.f32 %v2552, %v2560
  %v2565 = vmul.f32 %v2561, 1.442695
  %v2566 = vpow.pop %v2565
  %v2567 = vmul.f32 %v2562, 1.442695
  %v2568 = vpow.pop %v2567
  %v2569 = vmul.f32 %v2563, 1.442695
  %v2570 = vpow.pop %v2569
  %v2571 = vmul.f32 %v2564, 1.442695
  %v2572 = vpow.pop %v2571
  %2573 = vadd.xlane.f32.xlu0 %v2566
  %v2574 = vpop.xlane.xlu0 %2573
  %2575 = vadd.xlane.f32.xlu0 %v2568
  %v2576 = vpop.xlane.xlu0 %2575
  %2577 = vadd.xlane.f32.xlu0 %v2570
  %v2578 = vpop.xlane.xlu0 %2577
  %2579 = vadd.xlane.f32.xlu0 %v2572
  %v2580 = vpop.xlane.xlu0 %2579
  %v2581 = vrcp.pop %v2574
  %v2582 = vmul.f32 %v2574, %v2581
  %v2583 = vsub.f32 1.0, %v2582
  %v2584 = vmul.f32 %v2581, %v2583
  %v2585 = vadd.f32 %v2581, %v2584
  %vm2586 = vweird.f32 %v2574
  %vm2587 = vweird.f32 %v2581
  %vm2588 = vmor %vm2586, %vm2587
  %v2589 = vsel %vm2588, %v2581, %v2585
  %v2590 = vand.u32 2147483647, %v2574
  %vm2591 = vcmp.eq.f32.partialorder %v2590, 8.507059e+37
  %v2592 = vand.u32 %v2574, 2147483648
  %v2593 = vor.u32 1.1754944e-38, %v2592
  %v2594 = vsel %vm2591, %v2593, %v2589
  %v2595 = vmul.f32 %v2566, %v2594
  %v2596 = vrcp.pop %v2576
  %v2597 = vmul.f32 %v2576, %v2596
  %v2598 = vsub.f32 1.0, %v2597
  %v2599 = vmul.f32 %v2596, %v2598
  %v2600 = vadd.f32 %v2596, %v2599
  %vm2601 = vweird.f32 %v2576
  %vm2602 = vweird.f32 %v2596
  %vm2603 = vmor %vm2601, %vm2602
  %v2604 = vsel %vm2603, %v2596, %v2600
  %v2605 = vand.u32 2147483647, %v2576
  %vm2606 = vcmp.eq.f32.partialorder %v2605, 8.507059e+37
  %v2607 = vand.u32 %v2576, 2147483648
  %v2608 = vor.u32 1.1754944e-38, %v2607
  %v2609 = vsel %vm2606, %v2608, %v2604
  %v2610 = vmul.f32 %v2568, %v2609
  %v2611 = vrcp.pop %v2578
  %v2612 = vmul.f32 %v2578, %v2611
  %v2613 = vsub.f32 1.0, %v2612
  %v2614 = vmul.f32 %v2611, %v2613
  %v2615 = vadd.f32 %v2611, %v2614
  %vm2616 = vweird.f32 %v2578
  %vm2617 = vweird.f32 %v2611
  %vm2618 = vmor %vm2616, %vm2617
  %v2619 = vsel %vm2618, %v2611, %v2615
  %v2620 = vand.u32 2147483647, %v2578
  %vm2621 = vcmp.eq.f32.partialorder %v2620, 8.507059e+37
  %v2622 = vand.u32 %v2578, 2147483648
  %v2623 = vor.u32 1.1754944e-38, %v2622
  %v2624 = vsel %vm2621, %v2623, %v2619
  %v2625 = vmul.f32 %v2570, %v2624
  %v2626 = vrcp.pop %v2580
  %v2627 = vmul.f32 %v2580, %v2626
  %v2628 = vsub.f32 1.0, %v2627
  %v2629 = vmul.f32 %v2626, %v2628
  %v2630 = vadd.f32 %v2626, %v2629
  %vm2631 = vweird.f32 %v2580
  %vm2632 = vweird.f32 %v2626
  %vm2633 = vmor %vm2631, %vm2632
  %v2634 = vsel %vm2633, %v2626, %v2630
  %v2635 = vand.u32 2147483647, %v2580
  %vm2636 = vcmp.eq.f32.partialorder %v2635, 8.507059e+37
  %v2637 = vand.u32 %v2580, 2147483648
  %v2638 = vor.u32 1.1754944e-38, %v2637
  %v2639 = vsel %vm2636, %v2638, %v2634
  %v2640 = vmul.f32 %v2572, %v2639
  %v2641 = vadd.f32 %v2444, %v2595
  %v2642 = vadd.f32 %v2445, %v2610
  %v2643 = vadd.f32 %v2446, %v2625
  %v2644 = vadd.f32 %v2447, %v2640
  %v2645 = vmul.f32 %v98, %v2456
  %v2646 = vmul.f32 %v98, %v2457
  %v2647 = vmul.f32 %v98, %v2458
  %v2648 = vmul.f32 %v98, %v2459
  %v2649 = vmul.f32 %v100, %v2496
  %v2650 = vmul.f32 %v100, %v2497
  %v2651 = vmul.f32 %v100, %v2498
  %v2652 = vmul.f32 %v100, %v2499
  %v2653 = vadd.f32 %v2645, %v2649
  %v2654 = vadd.f32 %v2646, %v2650
  %v2655 = vadd.f32 %v2647, %v2651
  %v2656 = vadd.f32 %v2648, %v2652
  %v2657 = vmul.f32 %v2653, 1.8
  %v2658 = vmul.f32 %v2654, 1.8
  %v2659 = vmul.f32 %v2655, 1.8
  %v2660 = vmul.f32 %v2656, 1.8
  %v2661 = vadd.f32 %v2657, 0.01
  %v2662 = vadd.f32 %v2658, 0.01
  %v2663 = vadd.f32 %v2659, 0.01
  %v2664 = vadd.f32 %v2660, 0.01
  %v2665 = vmul.f32 %v2480, %v105
  %v2666 = vmul.f32 %v2481, %v105
  %v2667 = vmul.f32 %v2482, %v105
  %v2668 = vmul.f32 %v2483, %v105
  %v2669 = vadd.f32 %v2665, %v94
  %v2670 = vadd.f32 %v2666, %v95
  %v2671 = vadd.f32 %v2667, %v96
  %v2672 = vadd.f32 %v2668, %v97
  %v2673 = vmul.f32 %v2661, %v2496
  %v2674 = vmul.f32 %v2662, %v2497
  %v2675 = vmul.f32 %v2663, %v2498
  %v2676 = vmul.f32 %v2664, %v2499
  %v2677 = vsub.f32 %v2669, %v2673
  %v2678 = vsub.f32 %v2670, %v2674
  %v2679 = vsub.f32 %v2671, %v2675
  %v2680 = vsub.f32 %v2672, %v2676
  %v2681 = vsub.f32 %v2677, %v2661
  %v2682 = vsub.f32 %v2678, %v2662
  %v2683 = vsub.f32 %v2679, %v2663
  %v2684 = vsub.f32 %v2680, %v2664
  %vm2685 = vcmp.gt.f32.partialorder %v2681, 0.0
  %vm2686 = vcmp.gt.f32.partialorder %v2682, 0.0
  %vm2687 = vcmp.gt.f32.partialorder %v2683, 0.0
  %vm2688 = vcmp.gt.f32.partialorder %v2684, 0.0
  %v2689 = vsel %vm2685, 1, 0
  %v2690 = vsel %vm2686, 1, 0
  %v2691 = vsel %vm2687, 1, 0
  %v2692 = vsel %vm2688, 1, 0
  %v2693 = vcvt.s32.f32 %v2689
  %v2694 = vcvt.s32.f32 %v2690
  %v2695 = vcvt.s32.f32 %v2691
  %v2696 = vcvt.s32.f32 %v2692
  %v2698 = vsel %vm136, %v2693, 0
  %v2701 = vsel %vm136, %v2694, 0
  %v2704 = vsel %vm136, %v2695, 0
  %v2707 = vsel %vm136, %v2696, 0
  %2709 = vmatpush.msra.mxu0 0.0
  %2710 = vmatpush.msra.mxu0 0.0
  %2711 = vmatpush.msra.mxu0 0.0
  %2712 = vmatpush.msra.mxu0 0.0
  %2713 = vmatpush.msra.mxu0 0.0
  %2714 = vmatpush.msra.mxu0 0.0
  %2715 = vmatpush.msra.mxu0 0.0
  %2716 = vmatpush.msra.mxu0 0.0
  %2717 = vmatpush.msra.mxu0 %v40
  %2718 = vmatpush.msra.mxu0 %v39
  %2719 = vmatpush.msra.mxu0 %v38
  %2720 = vmatpush.msra.mxu0 %v37
  %2721 = vmatpush.msra.mxu0 %v36
  %2722 = vmatpush.msra.mxu0 %v35
  %2723 = vmatpush.msra.mxu0 %v34
  %2724 = vmatpush.msra.mxu0 %v33
  %2725 = vmatmul.f32.gmra.mxu0 %v2698
  %v2726 = vpop.f32.mrf.mxu0
  %v2727 = vadd.f32 %v135, %v2726
  %2728 = vmatmul.f32.gmra.mxu0 %v2701
  %v2729 = vpop.f32.mrf.mxu0
  %v2730 = vadd.f32 %v135, %v2729
  %2731 = vmatmul.f32.gmra.mxu0 %v2704
  %v2732 = vpop.f32.mrf.mxu0
  %v2733 = vadd.f32 %v135, %v2732
  %2734 = vmatmul.f32.gmra.mxu0 %v2707
  %v2735 = vpop.f32.mrf.mxu0
  %v2736 = vadd.f32 %v135, %v2735
  %2737 = vdwg.mxu0
  %v2738 = vmul.f32 %v2549, %v178
  %v2739 = vmul.f32 %v2550, %v178
  %v2740 = vmul.f32 %v2551, %v178
  %v2741 = vmul.f32 %v2552, %v178
  %v2742 = vmul.f32 %v183, %v2727
  %v2743 = vmul.f32 %v183, %v2730
  %v2744 = vmul.f32 %v183, %v2733
  %v2745 = vmul.f32 %v183, %v2736
  %v2746 = vadd.f32 %v2738, %v2742
  %v2747 = vadd.f32 %v2739, %v2743
  %v2748 = vadd.f32 %v2740, %v2744
  %v2749 = vadd.f32 %v2741, %v2745
  %2750 = vmax.xlane.f32.xlu0 %v2746
  %v2751 = vpop.xlane.xlu0 %2750
  %2752 = vmax.xlane.f32.xlu0 %v2747
  %v2753 = vpop.xlane.xlu0 %2752
  %2754 = vmax.xlane.f32.xlu0 %v2748
  %v2755 = vpop.xlane.xlu0 %2754
  %2756 = vmax.xlane.f32.xlu0 %v2749
  %v2757 = vpop.xlane.xlu0 %2756
  %v2758 = vsub.f32 %v2746, %v2751
  %v2759 = vsub.f32 %v2747, %v2753
  %v2760 = vsub.f32 %v2748, %v2755
  %v2761 = vsub.f32 %v2749, %v2757
  %v2762 = vmul.f32 %v2758, 1.442695
  %v2763 = vpow.pop %v2762
  %v2764 = vmul.f32 %v2759, 1.442695
  %v2765 = vpow.pop %v2764
  %v2766 = vmul.f32 %v2760, 1.442695
  %v2767 = vpow.pop %v2766
  %v2768 = vmul.f32 %v2761, 1.442695
  %v2769 = vpow.pop %v2768
  %2770 = vadd.xlane.f32.xlu0 %v2763
  %v2771 = vpop.xlane.xlu0 %2770
  %2772 = vadd.xlane.f32.xlu0 %v2765
  %v2773 = vpop.xlane.xlu0 %2772
  %2774 = vadd.xlane.f32.xlu0 %v2767
  %v2775 = vpop.xlane.xlu0 %2774
  %2776 = vadd.xlane.f32.xlu0 %v2769
  %v2777 = vpop.xlane.xlu0 %2776
  %v2778 = vrcp.pop %v2771
  %v2779 = vmul.f32 %v2771, %v2778
  %v2780 = vsub.f32 1.0, %v2779
  %v2781 = vmul.f32 %v2778, %v2780
  %v2782 = vadd.f32 %v2778, %v2781
  %vm2783 = vweird.f32 %v2771
  %vm2784 = vweird.f32 %v2778
  %vm2785 = vmor %vm2783, %vm2784
  %v2786 = vsel %vm2785, %v2778, %v2782
  %v2787 = vand.u32 2147483647, %v2771
  %vm2788 = vcmp.eq.f32.partialorder %v2787, 8.507059e+37
  %v2789 = vand.u32 %v2771, 2147483648
  %v2790 = vor.u32 1.1754944e-38, %v2789
  %v2791 = vsel %vm2788, %v2790, %v2786
  %v2792 = vmul.f32 %v2763, %v2791
  %v2793 = vrcp.pop %v2773
  %v2794 = vmul.f32 %v2773, %v2793
  %v2795 = vsub.f32 1.0, %v2794
  %v2796 = vmul.f32 %v2793, %v2795
  %v2797 = vadd.f32 %v2793, %v2796
  %vm2798 = vweird.f32 %v2773
  %vm2799 = vweird.f32 %v2793
  %vm2800 = vmor %vm2798, %vm2799
  %v2801 = vsel %vm2800, %v2793, %v2797
  %v2802 = vand.u32 2147483647, %v2773
  %vm2803 = vcmp.eq.f32.partialorder %v2802, 8.507059e+37
  %v2804 = vand.u32 %v2773, 2147483648
  %v2805 = vor.u32 1.1754944e-38, %v2804
  %v2806 = vsel %vm2803, %v2805, %v2801
  %v2807 = vmul.f32 %v2765, %v2806
  %v2808 = vrcp.pop %v2775
  %v2809 = vmul.f32 %v2775, %v2808
  %v2810 = vsub.f32 1.0, %v2809
  %v2811 = vmul.f32 %v2808, %v2810
  %v2812 = vadd.f32 %v2808, %v2811
  %vm2813 = vweird.f32 %v2775
  %vm2814 = vweird.f32 %v2808
  %vm2815 = vmor %vm2813, %vm2814
  %v2816 = vsel %vm2815, %v2808, %v2812
  %v2817 = vand.u32 2147483647, %v2775
  %vm2818 = vcmp.eq.f32.partialorder %v2817, 8.507059e+37
  %v2819 = vand.u32 %v2775, 2147483648
  %v2820 = vor.u32 1.1754944e-38, %v2819
  %v2821 = vsel %vm2818, %v2820, %v2816
  %v2822 = vmul.f32 %v2767, %v2821
  %v2823 = vrcp.pop %v2777
  %v2824 = vmul.f32 %v2777, %v2823
  %v2825 = vsub.f32 1.0, %v2824
  %v2826 = vmul.f32 %v2823, %v2825
  %v2827 = vadd.f32 %v2823, %v2826
  %vm2828 = vweird.f32 %v2777
  %vm2829 = vweird.f32 %v2823
  %vm2830 = vmor %vm2828, %vm2829
  %v2831 = vsel %vm2830, %v2823, %v2827
  %v2832 = vand.u32 2147483647, %v2777
  %vm2833 = vcmp.eq.f32.partialorder %v2832, 8.507059e+37
  %v2834 = vand.u32 %v2777, 2147483648
  %v2835 = vor.u32 1.1754944e-38, %v2834
  %v2836 = vsel %vm2833, %v2835, %v2831
  %v2837 = vmul.f32 %v2769, %v2836
  %v2838 = vadd.f32 %v2641, %v2792
  %v2839 = vadd.f32 %v2642, %v2807
  %v2840 = vadd.f32 %v2643, %v2822
  %v2841 = vadd.f32 %v2644, %v2837
  %v2842 = vmul.f32 %v98, %v2653
  %v2843 = vmul.f32 %v98, %v2654
  %v2844 = vmul.f32 %v98, %v2655
  %v2845 = vmul.f32 %v98, %v2656
  %v2846 = vmul.f32 %v100, %v2693
  %v2847 = vmul.f32 %v100, %v2694
  %v2848 = vmul.f32 %v100, %v2695
  %v2849 = vmul.f32 %v100, %v2696
  %v2850 = vadd.f32 %v2842, %v2846
  %v2851 = vadd.f32 %v2843, %v2847
  %v2852 = vadd.f32 %v2844, %v2848
  %v2853 = vadd.f32 %v2845, %v2849
  %v2854 = vmul.f32 %v2850, 1.8
  %v2855 = vmul.f32 %v2851, 1.8
  %v2856 = vmul.f32 %v2852, 1.8
  %v2857 = vmul.f32 %v2853, 1.8
  %v2858 = vadd.f32 %v2854, 0.01
  %v2859 = vadd.f32 %v2855, 0.01
  %v2860 = vadd.f32 %v2856, 0.01
  %v2861 = vadd.f32 %v2857, 0.01
  %v2862 = vmul.f32 %v2677, %v105
  %v2863 = vmul.f32 %v2678, %v105
  %v2864 = vmul.f32 %v2679, %v105
  %v2865 = vmul.f32 %v2680, %v105
  %v2866 = vadd.f32 %v2862, %v94
  %v2867 = vadd.f32 %v2863, %v95
  %v2868 = vadd.f32 %v2864, %v96
  %v2869 = vadd.f32 %v2865, %v97
  %v2870 = vmul.f32 %v2858, %v2693
  %v2871 = vmul.f32 %v2859, %v2694
  %v2872 = vmul.f32 %v2860, %v2695
  %v2873 = vmul.f32 %v2861, %v2696
  %v2874 = vsub.f32 %v2866, %v2870
  %v2875 = vsub.f32 %v2867, %v2871
  %v2876 = vsub.f32 %v2868, %v2872
  %v2877 = vsub.f32 %v2869, %v2873
  %v2878 = vsub.f32 %v2874, %v2858
  %v2879 = vsub.f32 %v2875, %v2859
  %v2880 = vsub.f32 %v2876, %v2860
  %v2881 = vsub.f32 %v2877, %v2861
  %vm2882 = vcmp.gt.f32.partialorder %v2878, 0.0
  %vm2883 = vcmp.gt.f32.partialorder %v2879, 0.0
  %vm2884 = vcmp.gt.f32.partialorder %v2880, 0.0
  %vm2885 = vcmp.gt.f32.partialorder %v2881, 0.0
  %v2886 = vsel %vm2882, 1, 0
  %v2887 = vsel %vm2883, 1, 0
  %v2888 = vsel %vm2884, 1, 0
  %v2889 = vsel %vm2885, 1, 0
  %v2890 = vcvt.s32.f32 %v2886
  %v2891 = vcvt.s32.f32 %v2887
  %v2892 = vcvt.s32.f32 %v2888
  %v2893 = vcvt.s32.f32 %v2889
  %v2895 = vsel %vm136, %v2890, 0
  %v2898 = vsel %vm136, %v2891, 0
  %v2901 = vsel %vm136, %v2892, 0
  %v2904 = vsel %vm136, %v2893, 0
  %2906 = vmatpush.msra.mxu0 0.0
  %2907 = vmatpush.msra.mxu0 0.0
  %2908 = vmatpush.msra.mxu0 0.0
  %2909 = vmatpush.msra.mxu0 0.0
  %2910 = vmatpush.msra.mxu0 0.0
  %2911 = vmatpush.msra.mxu0 0.0
  %2912 = vmatpush.msra.mxu0 0.0
  %2913 = vmatpush.msra.mxu0 0.0
  %2914 = vmatpush.msra.mxu0 %v40
  %2915 = vmatpush.msra.mxu0 %v39
  %2916 = vmatpush.msra.mxu0 %v38
  %2917 = vmatpush.msra.mxu0 %v37
  %2918 = vmatpush.msra.mxu0 %v36
  %2919 = vmatpush.msra.mxu0 %v35
  %2920 = vmatpush.msra.mxu0 %v34
  %2921 = vmatpush.msra.mxu0 %v33
  %2922 = vmatmul.f32.gmra.mxu0 %v2895
  %v2923 = vpop.f32.mrf.mxu0
  %v2924 = vadd.f32 %v135, %v2923
  %2925 = vmatmul.f32.gmra.mxu0 %v2898
  %v2926 = vpop.f32.mrf.mxu0
  %v2927 = vadd.f32 %v135, %v2926
  %2928 = vmatmul.f32.gmra.mxu0 %v2901
  %v2929 = vpop.f32.mrf.mxu0
  %v2930 = vadd.f32 %v135, %v2929
  %2931 = vmatmul.f32.gmra.mxu0 %v2904
  %v2932 = vpop.f32.mrf.mxu0
  %v2933 = vadd.f32 %v135, %v2932
  %2934 = vdwg.mxu0
  %v2935 = vmul.f32 %v2746, %v178
  %v2936 = vmul.f32 %v2747, %v178
  %v2937 = vmul.f32 %v2748, %v178
  %v2938 = vmul.f32 %v2749, %v178
  %v2939 = vmul.f32 %v183, %v2924
  %v2940 = vmul.f32 %v183, %v2927
  %v2941 = vmul.f32 %v183, %v2930
  %v2942 = vmul.f32 %v183, %v2933
  %v2943 = vadd.f32 %v2935, %v2939
  %v2944 = vadd.f32 %v2936, %v2940
  %v2945 = vadd.f32 %v2937, %v2941
  %v2946 = vadd.f32 %v2938, %v2942
  %2947 = vmax.xlane.f32.xlu0 %v2943
  %v2948 = vpop.xlane.xlu0 %2947
  %2949 = vmax.xlane.f32.xlu0 %v2944
  %v2950 = vpop.xlane.xlu0 %2949
  %2951 = vmax.xlane.f32.xlu0 %v2945
  %v2952 = vpop.xlane.xlu0 %2951
  %2953 = vmax.xlane.f32.xlu0 %v2946
  %v2954 = vpop.xlane.xlu0 %2953
  %v2955 = vsub.f32 %v2943, %v2948
  %v2956 = vsub.f32 %v2944, %v2950
  %v2957 = vsub.f32 %v2945, %v2952
  %v2958 = vsub.f32 %v2946, %v2954
  %v2959 = vmul.f32 %v2955, 1.442695
  %v2960 = vpow.pop %v2959
  %v2961 = vmul.f32 %v2956, 1.442695
  %v2962 = vpow.pop %v2961
  %v2963 = vmul.f32 %v2957, 1.442695
  %v2964 = vpow.pop %v2963
  %v2965 = vmul.f32 %v2958, 1.442695
  %v2966 = vpow.pop %v2965
  %2967 = vadd.xlane.f32.xlu0 %v2960
  %v2968 = vpop.xlane.xlu0 %2967
  %2969 = vadd.xlane.f32.xlu0 %v2962
  %v2970 = vpop.xlane.xlu0 %2969
  %2971 = vadd.xlane.f32.xlu0 %v2964
  %v2972 = vpop.xlane.xlu0 %2971
  %2973 = vadd.xlane.f32.xlu0 %v2966
  %v2974 = vpop.xlane.xlu0 %2973
  %v2975 = vrcp.pop %v2968
  %v2976 = vmul.f32 %v2968, %v2975
  %v2977 = vsub.f32 1.0, %v2976
  %v2978 = vmul.f32 %v2975, %v2977
  %v2979 = vadd.f32 %v2975, %v2978
  %vm2980 = vweird.f32 %v2968
  %vm2981 = vweird.f32 %v2975
  %vm2982 = vmor %vm2980, %vm2981
  %v2983 = vsel %vm2982, %v2975, %v2979
  %v2984 = vand.u32 2147483647, %v2968
  %vm2985 = vcmp.eq.f32.partialorder %v2984, 8.507059e+37
  %v2986 = vand.u32 %v2968, 2147483648
  %v2987 = vor.u32 1.1754944e-38, %v2986
  %v2988 = vsel %vm2985, %v2987, %v2983
  %v2989 = vmul.f32 %v2960, %v2988
  %v2990 = vrcp.pop %v2970
  %v2991 = vmul.f32 %v2970, %v2990
  %v2992 = vsub.f32 1.0, %v2991
  %v2993 = vmul.f32 %v2990, %v2992
  %v2994 = vadd.f32 %v2990, %v2993
  %vm2995 = vweird.f32 %v2970
  %vm2996 = vweird.f32 %v2990
  %vm2997 = vmor %vm2995, %vm2996
  %v2998 = vsel %vm2997, %v2990, %v2994
  %v2999 = vand.u32 2147483647, %v2970
  %vm3000 = vcmp.eq.f32.partialorder %v2999, 8.507059e+37
  %v3001 = vand.u32 %v2970, 2147483648
  %v3002 = vor.u32 1.1754944e-38, %v3001
  %v3003 = vsel %vm3000, %v3002, %v2998
  %v3004 = vmul.f32 %v2962, %v3003
  %v3005 = vrcp.pop %v2972
  %v3006 = vmul.f32 %v2972, %v3005
  %v3007 = vsub.f32 1.0, %v3006
  %v3008 = vmul.f32 %v3005, %v3007
  %v3009 = vadd.f32 %v3005, %v3008
  %vm3010 = vweird.f32 %v2972
  %vm3011 = vweird.f32 %v3005
  %vm3012 = vmor %vm3010, %vm3011
  %v3013 = vsel %vm3012, %v3005, %v3009
  %v3014 = vand.u32 2147483647, %v2972
  %vm3015 = vcmp.eq.f32.partialorder %v3014, 8.507059e+37
  %v3016 = vand.u32 %v2972, 2147483648
  %v3017 = vor.u32 1.1754944e-38, %v3016
  %v3018 = vsel %vm3015, %v3017, %v3013
  %v3019 = vmul.f32 %v2964, %v3018
  %v3020 = vrcp.pop %v2974
  %v3021 = vmul.f32 %v2974, %v3020
  %v3022 = vsub.f32 1.0, %v3021
  %v3023 = vmul.f32 %v3020, %v3022
  %v3024 = vadd.f32 %v3020, %v3023
  %vm3025 = vweird.f32 %v2974
  %vm3026 = vweird.f32 %v3020
  %vm3027 = vmor %vm3025, %vm3026
  %v3028 = vsel %vm3027, %v3020, %v3024
  %v3029 = vand.u32 2147483647, %v2974
  %vm3030 = vcmp.eq.f32.partialorder %v3029, 8.507059e+37
  %v3031 = vand.u32 %v2974, 2147483648
  %v3032 = vor.u32 1.1754944e-38, %v3031
  %v3033 = vsel %vm3030, %v3032, %v3028
  %v3034 = vmul.f32 %v2966, %v3033
  %v3035 = vadd.f32 %v2838, %v2989
  %v3036 = vadd.f32 %v2839, %v3004
  %v3037 = vadd.f32 %v2840, %v3019
  %v3038 = vadd.f32 %v2841, %v3034
  %v3039 = vmul.f32 %v98, %v2850
  %v3040 = vmul.f32 %v98, %v2851
  %v3041 = vmul.f32 %v98, %v2852
  %v3042 = vmul.f32 %v98, %v2853
  %v3043 = vmul.f32 %v100, %v2890
  %v3044 = vmul.f32 %v100, %v2891
  %v3045 = vmul.f32 %v100, %v2892
  %v3046 = vmul.f32 %v100, %v2893
  %v3047 = vadd.f32 %v3039, %v3043
  %v3048 = vadd.f32 %v3040, %v3044
  %v3049 = vadd.f32 %v3041, %v3045
  %v3050 = vadd.f32 %v3042, %v3046
  %v3051 = vmul.f32 %v3047, 1.8
  %v3052 = vmul.f32 %v3048, 1.8
  %v3053 = vmul.f32 %v3049, 1.8
  %v3054 = vmul.f32 %v3050, 1.8
  %v3055 = vadd.f32 %v3051, 0.01
  %v3056 = vadd.f32 %v3052, 0.01
  %v3057 = vadd.f32 %v3053, 0.01
  %v3058 = vadd.f32 %v3054, 0.01
  %v3059 = vmul.f32 %v2874, %v105
  %v3060 = vmul.f32 %v2875, %v105
  %v3061 = vmul.f32 %v2876, %v105
  %v3062 = vmul.f32 %v2877, %v105
  %v3063 = vadd.f32 %v3059, %v94
  %v3064 = vadd.f32 %v3060, %v95
  %v3065 = vadd.f32 %v3061, %v96
  %v3066 = vadd.f32 %v3062, %v97
  %v3067 = vmul.f32 %v3055, %v2890
  %v3068 = vmul.f32 %v3056, %v2891
  %v3069 = vmul.f32 %v3057, %v2892
  %v3070 = vmul.f32 %v3058, %v2893
  %v3071 = vsub.f32 %v3063, %v3067
  %v3072 = vsub.f32 %v3064, %v3068
  %v3073 = vsub.f32 %v3065, %v3069
  %v3074 = vsub.f32 %v3066, %v3070
  %v3075 = vsub.f32 %v3071, %v3055
  %v3076 = vsub.f32 %v3072, %v3056
  %v3077 = vsub.f32 %v3073, %v3057
  %v3078 = vsub.f32 %v3074, %v3058
  %vm3079 = vcmp.gt.f32.partialorder %v3075, 0.0
  %vm3080 = vcmp.gt.f32.partialorder %v3076, 0.0
  %vm3081 = vcmp.gt.f32.partialorder %v3077, 0.0
  %vm3082 = vcmp.gt.f32.partialorder %v3078, 0.0
  %v3083 = vsel %vm3079, 1, 0
  %v3084 = vsel %vm3080, 1, 0
  %v3085 = vsel %vm3081, 1, 0
  %v3086 = vsel %vm3082, 1, 0
  %v3087 = vcvt.s32.f32 %v3083
  %v3088 = vcvt.s32.f32 %v3084
  %v3089 = vcvt.s32.f32 %v3085
  %v3090 = vcvt.s32.f32 %v3086
  %v3092 = vsel %vm136, %v3087, 0
  %v3095 = vsel %vm136, %v3088, 0
  %v3098 = vsel %vm136, %v3089, 0
  %v3101 = vsel %vm136, %v3090, 0
  %3103 = vmatpush.msra.mxu0 0.0
  %3104 = vmatpush.msra.mxu0 0.0
  %3105 = vmatpush.msra.mxu0 0.0
  %3106 = vmatpush.msra.mxu0 0.0
  %3107 = vmatpush.msra.mxu0 0.0
  %3108 = vmatpush.msra.mxu0 0.0
  %3109 = vmatpush.msra.mxu0 0.0
  %3110 = vmatpush.msra.mxu0 0.0
  %3111 = vmatpush.msra.mxu0 %v40
  %3112 = vmatpush.msra.mxu0 %v39
  %3113 = vmatpush.msra.mxu0 %v38
  %3114 = vmatpush.msra.mxu0 %v37
  %3115 = vmatpush.msra.mxu0 %v36
  %3116 = vmatpush.msra.mxu0 %v35
  %3117 = vmatpush.msra.mxu0 %v34
  %3118 = vmatpush.msra.mxu0 %v33
  %3119 = vmatmul.f32.gmra.mxu0 %v3092
  %v3120 = vpop.f32.mrf.mxu0
  %v3121 = vadd.f32 %v135, %v3120
  %3122 = vmatmul.f32.gmra.mxu0 %v3095
  %v3123 = vpop.f32.mrf.mxu0
  %v3124 = vadd.f32 %v135, %v3123
  %3125 = vmatmul.f32.gmra.mxu0 %v3098
  %v3126 = vpop.f32.mrf.mxu0
  %v3127 = vadd.f32 %v135, %v3126
  %3128 = vmatmul.f32.gmra.mxu0 %v3101
  %v3129 = vpop.f32.mrf.mxu0
  %v3130 = vadd.f32 %v135, %v3129
  %3131 = vdwg.mxu0
  %v3132 = vmul.f32 %v2943, %v178
  %v3133 = vmul.f32 %v2944, %v178
  %v3134 = vmul.f32 %v2945, %v178
  %v3135 = vmul.f32 %v2946, %v178
  %v3136 = vmul.f32 %v183, %v3121
  %v3137 = vmul.f32 %v183, %v3124
  %v3138 = vmul.f32 %v183, %v3127
  %v3139 = vmul.f32 %v183, %v3130
  %v3140 = vadd.f32 %v3132, %v3136
  %v3141 = vadd.f32 %v3133, %v3137
  %v3142 = vadd.f32 %v3134, %v3138
  %v3143 = vadd.f32 %v3135, %v3139
  %3144 = vmax.xlane.f32.xlu0 %v3140
  %v3145 = vpop.xlane.xlu0 %3144
  %3146 = vmax.xlane.f32.xlu0 %v3141
  %v3147 = vpop.xlane.xlu0 %3146
  %3148 = vmax.xlane.f32.xlu0 %v3142
  %v3149 = vpop.xlane.xlu0 %3148
  %3150 = vmax.xlane.f32.xlu0 %v3143
  %v3151 = vpop.xlane.xlu0 %3150
  %v3152 = vsub.f32 %v3140, %v3145
  %v3153 = vsub.f32 %v3141, %v3147
  %v3154 = vsub.f32 %v3142, %v3149
  %v3155 = vsub.f32 %v3143, %v3151
  %v3156 = vmul.f32 %v3152, 1.442695
  %v3157 = vpow.pop %v3156
  %v3158 = vmul.f32 %v3153, 1.442695
  %v3159 = vpow.pop %v3158
  %v3160 = vmul.f32 %v3154, 1.442695
  %v3161 = vpow.pop %v3160
  %v3162 = vmul.f32 %v3155, 1.442695
  %v3163 = vpow.pop %v3162
  %3164 = vadd.xlane.f32.xlu0 %v3157
  %v3165 = vpop.xlane.xlu0 %3164
  %3166 = vadd.xlane.f32.xlu0 %v3159
  %v3167 = vpop.xlane.xlu0 %3166
  %3168 = vadd.xlane.f32.xlu0 %v3161
  %v3169 = vpop.xlane.xlu0 %3168
  %3170 = vadd.xlane.f32.xlu0 %v3163
  %v3171 = vpop.xlane.xlu0 %3170
  %v3172 = vrcp.pop %v3165
  %v3173 = vmul.f32 %v3165, %v3172
  %v3174 = vsub.f32 1.0, %v3173
  %v3175 = vmul.f32 %v3172, %v3174
  %v3176 = vadd.f32 %v3172, %v3175
  %vm3177 = vweird.f32 %v3165
  %vm3178 = vweird.f32 %v3172
  %vm3179 = vmor %vm3177, %vm3178
  %v3180 = vsel %vm3179, %v3172, %v3176
  %v3181 = vand.u32 2147483647, %v3165
  %vm3182 = vcmp.eq.f32.partialorder %v3181, 8.507059e+37
  %v3183 = vand.u32 %v3165, 2147483648
  %v3184 = vor.u32 1.1754944e-38, %v3183
  %v3185 = vsel %vm3182, %v3184, %v3180
  %v3186 = vmul.f32 %v3157, %v3185
  %v3187 = vrcp.pop %v3167
  %v3188 = vmul.f32 %v3167, %v3187
  %v3189 = vsub.f32 1.0, %v3188
  %v3190 = vmul.f32 %v3187, %v3189
  %v3191 = vadd.f32 %v3187, %v3190
  %vm3192 = vweird.f32 %v3167
  %vm3193 = vweird.f32 %v3187
  %vm3194 = vmor %vm3192, %vm3193
  %v3195 = vsel %vm3194, %v3187, %v3191
  %v3196 = vand.u32 2147483647, %v3167
  %vm3197 = vcmp.eq.f32.partialorder %v3196, 8.507059e+37
  %v3198 = vand.u32 %v3167, 2147483648
  %v3199 = vor.u32 1.1754944e-38, %v3198
  %v3200 = vsel %vm3197, %v3199, %v3195
  %v3201 = vmul.f32 %v3159, %v3200
  %v3202 = vrcp.pop %v3169
  %v3203 = vmul.f32 %v3169, %v3202
  %v3204 = vsub.f32 1.0, %v3203
  %v3205 = vmul.f32 %v3202, %v3204
  %v3206 = vadd.f32 %v3202, %v3205
  %vm3207 = vweird.f32 %v3169
  %vm3208 = vweird.f32 %v3202
  %vm3209 = vmor %vm3207, %vm3208
  %v3210 = vsel %vm3209, %v3202, %v3206
  %v3211 = vand.u32 2147483647, %v3169
  %vm3212 = vcmp.eq.f32.partialorder %v3211, 8.507059e+37
  %v3213 = vand.u32 %v3169, 2147483648
  %v3214 = vor.u32 1.1754944e-38, %v3213
  %v3215 = vsel %vm3212, %v3214, %v3210
  %v3216 = vmul.f32 %v3161, %v3215
  %v3217 = vrcp.pop %v3171
  %v3218 = vmul.f32 %v3171, %v3217
  %v3219 = vsub.f32 1.0, %v3218
  %v3220 = vmul.f32 %v3217, %v3219
  %v3221 = vadd.f32 %v3217, %v3220
  %vm3222 = vweird.f32 %v3171
  %vm3223 = vweird.f32 %v3217
  %vm3224 = vmor %vm3222, %vm3223
  %v3225 = vsel %vm3224, %v3217, %v3221
  %v3226 = vand.u32 2147483647, %v3171
  %vm3227 = vcmp.eq.f32.partialorder %v3226, 8.507059e+37
  %v3228 = vand.u32 %v3171, 2147483648
  %v3229 = vor.u32 1.1754944e-38, %v3228
  %v3230 = vsel %vm3227, %v3229, %v3225
  %v3231 = vmul.f32 %v3163, %v3230
  %v3232 = vadd.f32 %v3035, %v3186
  %v3233 = vadd.f32 %v3036, %v3201
  %v3234 = vadd.f32 %v3037, %v3216
  %v3235 = vadd.f32 %v3038, %v3231
  %3236 = vst [vmem:[%s4] sm:$0xff] %v3232
  %3237 = vst [vmem:[%s4 + $0x8] sm:$0xff] %v3233
  %3238 = vst [vmem:[%s4 + $0x10] sm:$0xff] %v3234
  %3239 = vst [vmem:[%s4 + $0x18] sm:$0xff] %v3235
  // Predicated region
  $region18: #{nnpolicy_forward.1} parent=0 // pred_check
    _
  $region19: #{nnpolicy_forward.1} parent=0 // pred_check_branch
    %3241 = sbr.rel (0) target = $region21
  $region20: #{nnpolicy_forward.1} parent=0 // pred_region
    _
  $region21: #{nnpolicy_forward.1} parent=0 // pred_fallthru
    _
  // Predicated region
  $region22: #{nnpolicy_forward.1} parent=0 // pred_check
    _
  $region23: #{nnpolicy_forward.1} parent=0 // pred_check_branch
    %3243 = sbr.rel (0) target = $region25
  $region24: #{nnpolicy_forward.1} parent=0 // pred_region
    _
  $region25: #{nnpolicy_forward.1} parent=0 // pred_fallthru
    _

</llo_original>
